<compile_context>
chip_gen: v7x
topology: tpu7x:2x2x1
jax: 0.10.0
libtpu: 0.0.40
codegen_flags: <defaults>
</compile_context>

<pallas_src>
import functools

import jax
import jax.numpy as jnp
from jax import lax
from jax.experimental import pallas as pl
from jax.experimental.pallas import tpu as pltpu


def _lstm_chunk_kernel(xp_ref,     # (chunk, Bp, 4H) bf16 : x @ Wih0 + b0 (gate-permuted)
                       whh0_ref,   # (H, 4H) f32
                       wih1_ref,   # (H, 4H) f32
                       whh1_ref,   # (H, 4H) f32
                       b1_ref,     # (1, 4H) f32
                       h1_out_ref,                       # (Bp, H) f32 output
                       h0_ref, c0_ref, h1_ref, c1_ref,   # (Bp, H) f32 scratch
                       *, hidden_dim, chunk, rem_steps):
    H = hidden_dim
    Bp = h0_ref.shape[0]
    cidx = pl.program_id(0)
    n_chunks = pl.num_programs(0)

    @pl.when(cidx == 0)
    def _init():
        h0_ref[...] = jnp.zeros_like(h0_ref)
        c0_ref[...] = jnp.zeros_like(c0_ref)
        h1_ref[...] = jnp.zeros_like(h1_ref)
        c1_ref[...] = jnp.zeros_like(c1_ref)

    whh0 = whh0_ref[...]
    wih1 = wih1_ref[...]
    whh1 = whh1_ref[...]
    # Pre-broadcast once per chunk (JAX does not CSE broadcast_in_dim).
    b1 = jnp.broadcast_to(b1_ref[...], (Bp, 4 * H))

    def lstm_update(gates, c_prev):
        # Gate order after prep-time permutation: i, f, o, g
        sig = jax.nn.sigmoid(gates[:, :3 * H])        # one contiguous (B,3H) slab
        i = sig[:, 0 * H:1 * H]
        f = sig[:, 1 * H:2 * H]
        o = sig[:, 2 * H:3 * H]
        g = jnp.tanh(gates[:, 3 * H:4 * H])
        c_new = f * c_prev + i * g
        h_new = o * jnp.tanh(c_new)
        return h_new, c_new

    def run_steps(n_steps):
        h0 = h0_ref[...]
        c0 = c0_ref[...]
        h1 = h1_ref[...]
        c1 = c1_ref[...]
        # Layer-1 recurrent partial for the first step of this chunk (one
        # extra matmul per chunk; all later steps get it from the carry, so
        # it is off the per-step serial chain).
        g1_pre = jnp.dot(h1, whh1, preferred_element_type=jnp.float32) + b1

        def step(j, carry):
            h0, c0, h1, c1, g1_pre = carry
            # Layer 0: x-projection (incl. b0) was hoisted; only the
            # recurrent matmul sits on the serial path. bf16 -> f32 widen of
            # xp is off-chain (independent of h0).
            gates0 = xp_ref[j].astype(jnp.float32) + jnp.dot(
                h0, whh0, preferred_element_type=jnp.float32)
            h0n, c0n = lstm_update(gates0, c0)
            # TODO(synk): nn.LSTM inter-layer dropout is train-mode only;
            # eval/inference semantics (no dropout) are implemented here.
            # Layer 1: only the input matmul depends on h0n.
            gates1 = g1_pre + jnp.dot(h0n, wih1,
                                      preferred_element_type=jnp.float32)
            h1n, c1n = lstm_update(gates1, c1)
            # Next step's layer-1 recurrent partial — runs in MXU slack,
            # not on the chain feeding step j+1's layer-0 matmul.
            g1n = jnp.dot(h1n, whh1, preferred_element_type=jnp.float32) + b1
            return h0n, c0n, h1n, c1n, g1n

        h0, c0, h1, c1, _ = lax.fori_loop(
            0, n_steps, step, (h0, c0, h1, c1, g1_pre),
            unroll=min(8, n_steps))
        h0_ref[...] = h0
        c0_ref[...] = c0
        h1_ref[...] = h1
        c1_ref[...] = c1

    if rem_steps == chunk:
        # chunk divides T: every grid step runs the unmasked steady-state loop.
        run_steps(chunk)
    else:
        @pl.when(cidx < n_chunks - 1)
        def _full():
            run_steps(chunk)

        @pl.when(cidx == n_chunks - 1)
        def _tail():
            run_steps(rem_steps)          # static remainder, no per-step masks

    @pl.when(cidx == n_chunks - 1)
    def _finalize():
        # Lane-dense (Bp, H) store; the 1-wide fc happens in the wrapper.
        h1_out_ref[...] = h1_ref[...]


def _gate_perm(H):
    # PyTorch gate order (i, f, g, o) -> (i, f, o, g).
    return jnp.concatenate([jnp.arange(0, 2 * H),
                            jnp.arange(3 * H, 4 * H),
                            jnp.arange(2 * H, 3 * H)])


def _prepare_params(p, *, hidden_dim):
    """PyTorch-layout nn.LSTM/nn.Linear params -> kernel layout (f32 weights)."""
    H = hidden_dim
    perm = _gate_perm(H)

    def rm(w):  # PyTorch (4H, in) -> right-multiply (in, 4H), gate-permuted
        return jnp.transpose(w)[:, perm].astype(jnp.float32)

    wih0 = rm(p["weight_ih_l0"])                                        # (D, 4H)
    whh0 = rm(p["weight_hh_l0"])                                        # (H, 4H)
    b0 = (p["bias_ih_l0"] + p["bias_hh_l0"])[perm][None].astype(jnp.float32)
    wih1 = rm(p["weight_ih_l1"])                                        # (H, 4H)
    whh1 = rm(p["weight_hh_l1"])                                        # (H, 4H)
    b1 = (p["bias_ih_l1"] + p["bias_hh_l1"])[perm][None].astype(jnp.float32)
    return dict(wih0=wih0, whh0=whh0, b0=b0, wih1=wih1, whh1=whh1, b1=b1)


def lstm_regressor_forward(x, params, *, hidden_dim, chunk=None):
    """x: (B, T, D) float32, batch_first (PyTorch convention)."""
    B, T, D = x.shape
    H = hidden_dim
    kp = _prepare_params(params, hidden_dim=H)

    Bp = max(8, ((B + 7) // 8) * 8)          # pad batch to sublane granule

    # Chunk selection: big enough to amortize ~0.35 us/grid-step overhead,
    # capped so the double-buffered bf16 xp block stays small even on v7x's
    # 64-MiB VMEM (target <= ~12 MiB of xp buffers).
    if chunk is None:
        bytes_per_step = Bp * 4 * H * 2      # bf16 xp row
        cap = max(8, (12 << 20) // (2 * bytes_per_step))
        chunk = min(T, 512, cap)
    chunk = max(1, min(chunk, T))
    n_chunks = -(-T // chunk)
    T_pad = n_chunks * chunk
    rem = T - (n_chunks - 1) * chunk         # static steps in the last chunk

    # Pad x BEFORE the layer-0 projection (cheap: 4 B/step) and hoist the
    # projection out of the recurrence. D=1 -> broadcast multiply, not a
    # degenerate K=1 matmul. Result is time-major & lane-dense (T_pad, Bp, 4H).
    x = x.astype(jnp.float32)
    x_pad = jnp.pad(x, ((0, Bp - B), (0, T_pad - T), (0, 0)))
    if D == 1:
        xp = (jnp.transpose(x_pad[:, :, 0])[:, :, None]
              * kp["wih0"][0][None, None, :] + kp["b0"])
    else:
        xp = jnp.einsum("btd,dg->tbg", x_pad, kp["wih0"]) + kp["b0"]
    xp = xp.astype(jnp.bfloat16)             # halve xp HBM traffic / VMEM

    kernel = functools.partial(_lstm_chunk_kernel, hidden_dim=H,
                               chunk=chunk, rem_steps=rem)
    h1_final = pl.pallas_call(
        kernel,
        out_shape=jax.ShapeDtypeStruct((Bp, H), jnp.float32),
        grid_spec=pltpu.PrefetchScalarGridSpec(
            num_scalar_prefetch=0,
            grid=(n_chunks,),
            in_specs=[
                pl.BlockSpec((chunk, Bp, 4 * H), lambda c: (c, 0, 0)),  # xp chunk
                pl.BlockSpec((H, 4 * H), lambda c: (0, 0)),             # whh0
                pl.BlockSpec((H, 4 * H), lambda c: (0, 0)),             # wih1
                pl.BlockSpec((H, 4 * H), lambda c: (0, 0)),             # whh1
                pl.BlockSpec((1, 4 * H), lambda c: (0, 0)),             # b1
            ],
            out_specs=pl.BlockSpec((Bp, H), lambda c: (0, 0)),
            scratch_shapes=[pltpu.VMEM((Bp, H), jnp.float32)] * 4,      # h0,c0,h1,c1
        ),
        compiler_params=pltpu.CompilerParams(
            dimension_semantics=("arbitrary",),          # time is serial
            vmem_limit_bytes=40 * 1024 * 1024),          # headroom on v7x 64 MiB
    )(xp, kp["whh0"], kp["wih1"], kp["whh1"], kp["b1"])

    # fc on the last hidden state (1-wide) done lane-side in the wrapper.
    fcw = params["fc_weight"].astype(jnp.float32)        # (1, H)
    fcb = params["fc_bias"].astype(jnp.float32)          # (1,)
    return h1_final[:B] @ jnp.transpose(fcw) + fcb


def init_params(key, input_dim, hidden_dim):
    """Deterministic synthetic init in PyTorch nn.LSTM / nn.Linear layout."""
    H = hidden_dim
    k = 1.0 / jnp.sqrt(jnp.float32(H))
    names_shapes = [
        ("weight_ih_l0", (4 * H, input_dim)),
        ("weight_hh_l0", (4 * H, H)),
        ("bias_ih_l0", (4 * H,)),
        ("bias_hh_l0", (4 * H,)),
        ("weight_ih_l1", (4 * H, H)),
        ("weight_hh_l1", (4 * H, H)),
        ("bias_ih_l1", (4 * H,)),
        ("bias_hh_l1", (4 * H,)),
        ("fc_weight", (1, H)),
        ("fc_bias", (1,)),
    ]
    keys = jax.random.split(key, len(names_shapes))
    return {n: jax.random.uniform(kk, s, jnp.float32, -k, k)
            for kk, (n, s) in zip(keys, names_shapes)}


def _reference_forward(x, p, *, hidden_dim):
    """Pure-JAX f32 reference matching PyTorch eval-mode semantics."""
    H = hidden_dim

    def cell(x_t, h, c, wih, whh, b):
        gates = x_t @ wih.T + h @ whh.T + b
        i = jax.nn.sigmoid(gates[:, 0 * H:1 * H])
        f = jax.nn.sigmoid(gates[:, 1 * H:2 * H])
        g = jnp.tanh(gates[:, 2 * H:3 * H])
        o = jax.nn.sigmoid(gates[:, 3 * H:4 * H])
        c = f * c + i * g
        h = o * jnp.tanh(c)
        return h, c

    B, T, _ = x.shape
    h0 = c0 = h1 = c1 = jnp.zeros((B, H), jnp.float32)
    b0 = p["bias_ih_l0"] + p["bias_hh_l0"]
    b1 = p["bias_ih_l1"] + p["bias_hh_l1"]
    for t in range(T):
        h0, c0 = cell(x[:, t], h0, c0, p["weight_ih_l0"], p["weight_hh_l0"], b0)
        h1, c1 = cell(h0, h1, c1, p["weight_ih_l1"], p["weight_hh_l1"], b1)
    return h1 @ p["fc_weight"].T + p["fc_bias"]


if __name__ == "__main__":
    B, T, D, H = 2, 8, 1, 64   # module defaults: input_dim=1, hidden_dim=64

    key = jax.random.PRNGKey(0)
    k_x, k_p = jax.random.split(key)
    x = jax.random.normal(k_x, (B, T, D), jnp.float32)   # batch_first like PyTorch
    params = init_params(k_p, input_dim=D, hidden_dim=H)

    ref = _reference_forward(x, params, hidden_dim=H)

    # Default chunking (chunk == T for short sequences -> single grid step).
    out = jax.block_until_ready(lstm_regressor_forward(x, params, hidden_dim=H))
    assert out.shape == (B, 1), out.shape
    assert jnp.allclose(out, ref, atol=5e-2, rtol=5e-2), (out, ref)

    # Exercise the multi-chunk + static-remainder tail path (T=8, chunk=3).
    out2 = jax.block_until_ready(
        lstm_regressor_forward(x, params, hidden_dim=H, chunk=3))
    assert out2.shape == (B, 1), out2.shape
    assert jnp.allclose(out2, ref, atol=5e-2, rtol=5e-2), (out2, ref)

    print("KERNEL_OK")
</pallas_src>

<mosaic_0001>
module attributes {stable_mosaic.version = 11 : i64} {
  func.func @_lstm_chunk_kernel(%arg0: i32, %arg1: memref<8x8x256xbf16, #tpu.memory_space<vmem>>, %arg2: memref<64x256xf32, #tpu.memory_space<vmem>>, %arg3: memref<64x256xf32, #tpu.memory_space<vmem>>, %arg4: memref<64x256xf32, #tpu.memory_space<vmem>>, %arg5: memref<1x256xf32, #tpu.memory_space<vmem>>, %arg6: memref<8x64xf32, #tpu.memory_space<vmem>>, %arg7: memref<8x64xf32, #tpu.memory_space<vmem>>, %arg8: memref<8x64xf32, #tpu.memory_space<vmem>>, %arg9: memref<8x64xf32, #tpu.memory_space<vmem>>, %arg10: memref<8x64xf32, #tpu.memory_space<vmem>>) attributes {dimension_semantics = [#tpu.dimension_semantics<arbitrary>], iteration_bounds = array<i64: 1>, scalar_prefetch = 0 : i64, scratch_operands = 4 : i64, tpu.core_type = #tpu.core_type<tc>, window_params = [{transform_indices = @transform_0, window_bounds = array<i64: 8, 8, 256>}, {pipeline_mode = #tpu.pipeline_mode<synchronous>, transform_indices = @transform_1, window_bounds = array<i64: 64, 256>}, {pipeline_mode = #tpu.pipeline_mode<synchronous>, transform_indices = @transform_2, window_bounds = array<i64: 64, 256>}, {pipeline_mode = #tpu.pipeline_mode<synchronous>, transform_indices = @transform_3, window_bounds = array<i64: 64, 256>}, {pipeline_mode = #tpu.pipeline_mode<synchronous>, transform_indices = @transform_4, window_bounds = array<i64: 1, 256>}, {pipeline_mode = #tpu.pipeline_mode<synchronous>, transform_indices = @transform_5, window_bounds = array<i64: 8, 64>}]} {
    %c0_i32 = arith.constant 0 : i32
    %0 = arith.cmpi eq, %arg0, %c0_i32 : i32
    %1 = arith.extui %0 : i1 to i32
    %c0_i32_0 = arith.constant 0 : i32
    %2 = arith.cmpi ne, %1, %c0_i32_0 : i32
    scf.if %2 {
      %cst_83 = arith.constant 0.000000e+00 : f32
      %358 = vector.broadcast %cst_83 : f32 to vector<8x64xf32>
      %c0_84 = arith.constant 0 : index
      %c0_85 = arith.constant 0 : index
      %359 = vector.load %arg7[%c0_84, %c0_85] : memref<8x64xf32, #tpu.memory_space<vmem>>, vector<8x64xf32>
      tpu.vector_store %arg7[%c0_84, %c0_85], %358 {strides = array<i32>} : memref<8x64xf32, #tpu.memory_space<vmem>>, vector<8x64xf32>,
      %cst_86 = arith.constant 0.000000e+00 : f32
      %360 = vector.broadcast %cst_86 : f32 to vector<8x64xf32>
      %c0_87 = arith.constant 0 : index
      %c0_88 = arith.constant 0 : index
      %361 = vector.load %arg8[%c0_87, %c0_88] : memref<8x64xf32, #tpu.memory_space<vmem>>, vector<8x64xf32>
      tpu.vector_store %arg8[%c0_87, %c0_88], %360 {strides = array<i32>} : memref<8x64xf32, #tpu.memory_space<vmem>>, vector<8x64xf32>,
      %cst_89 = arith.constant 0.000000e+00 : f32
      %362 = vector.broadcast %cst_89 : f32 to vector<8x64xf32>
      %c0_90 = arith.constant 0 : index
      %c0_91 = arith.constant 0 : index
      %363 = vector.load %arg9[%c0_90, %c0_91] : memref<8x64xf32, #tpu.memory_space<vmem>>, vector<8x64xf32>
      tpu.vector_store %arg9[%c0_90, %c0_91], %362 {strides = array<i32>} : memref<8x64xf32, #tpu.memory_space<vmem>>, vector<8x64xf32>,
      %cst_92 = arith.constant 0.000000e+00 : f32
      %364 = vector.broadcast %cst_92 : f32 to vector<8x64xf32>
      %c0_93 = arith.constant 0 : index
      %c0_94 = arith.constant 0 : index
      %365 = vector.load %arg10[%c0_93, %c0_94] : memref<8x64xf32, #tpu.memory_space<vmem>>, vector<8x64xf32>
      tpu.vector_store %arg10[%c0_93, %c0_94], %364 {strides = array<i32>} : memref<8x64xf32, #tpu.memory_space<vmem>>, vector<8x64xf32>,
    } else {
    }
    %c0 = arith.constant 0 : index
    %c0_1 = arith.constant 0 : index
    %3 = vector.load %arg2[%c0, %c0_1] : memref<64x256xf32, #tpu.memory_space<vmem>>, vector<64x256xf32>
    %c0_2 = arith.constant 0 : index
    %c0_3 = arith.constant 0 : index
    %4 = vector.load %arg3[%c0_2, %c0_3] : memref<64x256xf32, #tpu.memory_space<vmem>>, vector<64x256xf32>
    %c0_4 = arith.constant 0 : index
    %c0_5 = arith.constant 0 : index
    %5 = vector.load %arg4[%c0_4, %c0_5] : memref<64x256xf32, #tpu.memory_space<vmem>>, vector<64x256xf32>
    %c0_6 = arith.constant 0 : index
    %c0_7 = arith.constant 0 : index
    %6 = vector.load %arg5[%c0_6, %c0_7] : memref<1x256xf32, #tpu.memory_space<vmem>>, vector<1x256xf32>
    %7 = vector.shape_cast %6 : vector<1x256xf32> to vector<1x256xf32>
    %8 = vector.broadcast %7 : vector<1x256xf32> to vector<8x256xf32>
    %c0_8 = arith.constant 0 : index
    %c0_9 = arith.constant 0 : index
    %9 = vector.load %arg7[%c0_8, %c0_9] : memref<8x64xf32, #tpu.memory_space<vmem>>, vector<8x64xf32>
    %c0_10 = arith.constant 0 : index
    %c0_11 = arith.constant 0 : index
    %10 = vector.load %arg8[%c0_10, %c0_11] : memref<8x64xf32, #tpu.memory_space<vmem>>, vector<8x64xf32>
    %c0_12 = arith.constant 0 : index
    %c0_13 = arith.constant 0 : index
    %11 = vector.load %arg9[%c0_12, %c0_13] : memref<8x64xf32, #tpu.memory_space<vmem>>, vector<8x64xf32>
    %c0_14 = arith.constant 0 : index
    %c0_15 = arith.constant 0 : index
    %12 = vector.load %arg10[%c0_14, %c0_15] : memref<8x64xf32, #tpu.memory_space<vmem>>, vector<8x64xf32>
    %cst = arith.constant dense<0.000000e+00> : vector<8x256xf32>
    %13 = tpu.matmul %11, %5, %cst {dimension_numbers = #tpu.dot_dimension_numbers<[1], [0], [0], [1], [0, 0, 1, 1], [], []>} : vector<8x64xf32>, vector<64x256xf32>, vector<8x256xf32> -> vector<8x256xf32>
    %14 = arith.addf %13, %8 : vector<8x256xf32>
    %c0_i32_16 = arith.constant 0 : i32
    %15 = arith.index_cast %c0_i32_16 : i32 to index
    %c0_17 = arith.constant 0 : index
    %c0_18 = arith.constant 0 : index
    %16 = vector.load %arg1[%15, %c0_17, %c0_18] : memref<8x8x256xbf16, #tpu.memory_space<vmem>>, vector<1x8x256xbf16>
    %17 = vector.shape_cast %16 : vector<1x8x256xbf16> to vector<8x256xbf16>
    %18 = arith.extf %17 : vector<8x256xbf16> to vector<8x256xf32>
    %cst_19 = arith.constant dense<0.000000e+00> : vector<8x256xf32>
    %19 = tpu.matmul %9, %3, %cst_19 {dimension_numbers = #tpu.dot_dimension_numbers<[1], [0], [0], [1], [0, 0, 1, 1], [], []>} : vector<8x64xf32>, vector<64x256xf32>, vector<8x256xf32> -> vector<8x256xf32>
    %20 = arith.addf %18, %19 : vector<8x256xf32>
    %21 = vector.extract_strided_slice %20 {offsets = [0, 0], sizes = [8, 192], strides = [1, 1]} : vector<8x256xf32> to vector<8x192xf32>
    %22 = arith.negf %21 : vector<8x192xf32>
    %23 = math.exp %22 : vector<8x192xf32>
    %cst_20 = arith.constant 1.000000e+00 : f32
    %24 = vector.broadcast %cst_20 : f32 to vector<8x192xf32>
    %25 = arith.addf %24, %23 : vector<8x192xf32>
    %26 = arith.divf %24, %25 : vector<8x192xf32>
    %27 = vector.extract_strided_slice %26 {offsets = [0, 0], sizes = [8, 64], strides = [1, 1]} : vector<8x192xf32> to vector<8x64xf32>
    %28 = vector.extract_strided_slice %26 {offsets = [0, 64], sizes = [8, 64], strides = [1, 1]} : vector<8x192xf32> to vector<8x64xf32>
    %29 = vector.extract_strided_slice %26 {offsets = [0, 128], sizes = [8, 64], strides = [1, 1]} : vector<8x192xf32> to vector<8x64xf32>
    %30 = vector.extract_strided_slice %20 {offsets = [0, 192], sizes = [8, 64], strides = [1, 1]} : vector<8x256xf32> to vector<8x64xf32>
    %31 = math.tanh %30 : vector<8x64xf32>
    %32 = arith.mulf %28, %10 : vector<8x64xf32>
    %33 = arith.mulf %27, %31 : vector<8x64xf32>
    %34 = arith.addf %32, %33 : vector<8x64xf32>
    %35 = math.tanh %34 : vector<8x64xf32>
    %36 = arith.mulf %29, %35 : vector<8x64xf32>
    %cst_21 = arith.constant dense<0.000000e+00> : vector<8x256xf32>
    %37 = tpu.matmul %36, %4, %cst_21 {dimension_numbers = #tpu.dot_dimension_numbers<[1], [0], [0], [1], [0, 0, 1, 1], [], []>} : vector<8x64xf32>, vector<64x256xf32>, vector<8x256xf32> -> vector<8x256xf32>
    %38 = arith.addf %14, %37 : vector<8x256xf32>
    %39 = vector.extract_strided_slice %38 {offsets = [0, 0], sizes = [8, 192], strides = [1, 1]} : vector<8x256xf32> to vector<8x192xf32>
    %40 = arith.negf %39 : vector<8x192xf32>
    %41 = math.exp %40 : vector<8x192xf32>
    %cst_22 = arith.constant 1.000000e+00 : f32
    %42 = vector.broadcast %cst_22 : f32 to vector<8x192xf32>
    %43 = arith.addf %42, %41 : vector<8x192xf32>
    %44 = arith.divf %42, %43 : vector<8x192xf32>
    %45 = vector.extract_strided_slice %44 {offsets = [0, 0], sizes = [8, 64], strides = [1, 1]} : vector<8x192xf32> to vector<8x64xf32>
    %46 = vector.extract_strided_slice %44 {offsets = [0, 64], sizes = [8, 64], strides = [1, 1]} : vector<8x192xf32> to vector<8x64xf32>
    %47 = vector.extract_strided_slice %44 {offsets = [0, 128], sizes = [8, 64], strides = [1, 1]} : vector<8x192xf32> to vector<8x64xf32>
    %48 = vector.extract_strided_slice %38 {offsets = [0, 192], sizes = [8, 64], strides = [1, 1]} : vector<8x256xf32> to vector<8x64xf32>
    %49 = math.tanh %48 : vector<8x64xf32>
    %50 = arith.mulf %46, %12 : vector<8x64xf32>
    %51 = arith.mulf %45, %49 : vector<8x64xf32>
    %52 = arith.addf %50, %51 : vector<8x64xf32>
    %53 = math.tanh %52 : vector<8x64xf32>
    %54 = arith.mulf %47, %53 : vector<8x64xf32>
    %cst_23 = arith.constant dense<0.000000e+00> : vector<8x256xf32>
    %55 = tpu.matmul %54, %5, %cst_23 {dimension_numbers = #tpu.dot_dimension_numbers<[1], [0], [0], [1], [0, 0, 1, 1], [], []>} : vector<8x64xf32>, vector<64x256xf32>, vector<8x256xf32> -> vector<8x256xf32>
    %56 = arith.addf %55, %8 : vector<8x256xf32>
    %c1_i32 = arith.constant 1 : i32
    %57 = arith.index_cast %c1_i32 : i32 to index
    %c0_24 = arith.constant 0 : index
    %c0_25 = arith.constant 0 : index
    %58 = vector.load %arg1[%57, %c0_24, %c0_25] : memref<8x8x256xbf16, #tpu.memory_space<vmem>>, vector<1x8x256xbf16>
    %59 = vector.shape_cast %58 : vector<1x8x256xbf16> to vector<8x256xbf16>
    %60 = arith.extf %59 : vector<8x256xbf16> to vector<8x256xf32>
    %cst_26 = arith.constant dense<0.000000e+00> : vector<8x256xf32>
    %61 = tpu.matmul %36, %3, %cst_26 {dimension_numbers = #tpu.dot_dimension_numbers<[1], [0], [0], [1], [0, 0, 1, 1], [], []>} : vector<8x64xf32>, vector<64x256xf32>, vector<8x256xf32> -> vector<8x256xf32>
    %62 = arith.addf %60, %61 : vector<8x256xf32>
    %63 = vector.extract_strided_slice %62 {offsets = [0, 0], sizes = [8, 192], strides = [1, 1]} : vector<8x256xf32> to vector<8x192xf32>
    %64 = arith.negf %63 : vector<8x192xf32>
    %65 = math.exp %64 : vector<8x192xf32>
    %cst_27 = arith.constant 1.000000e+00 : f32
    %66 = vector.broadcast %cst_27 : f32 to vector<8x192xf32>
    %67 = arith.addf %66, %65 : vector<8x192xf32>
    %68 = arith.divf %66, %67 : vector<8x192xf32>
    %69 = vector.extract_strided_slice %68 {offsets = [0, 0], sizes = [8, 64], strides = [1, 1]} : vector<8x192xf32> to vector<8x64xf32>
    %70 = vector.extract_strided_slice %68 {offsets = [0, 64], sizes = [8, 64], strides = [1, 1]} : vector<8x192xf32> to vector<8x64xf32>
    %71 = vector.extract_strided_slice %68 {offsets = [0, 128], sizes = [8, 64], strides = [1, 1]} : vector<8x192xf32> to vector<8x64xf32>
    %72 = vector.extract_strided_slice %62 {offsets = [0, 192], sizes = [8, 64], strides = [1, 1]} : vector<8x256xf32> to vector<8x64xf32>
    %73 = math.tanh %72 : vector<8x64xf32>
    %74 = arith.mulf %70, %34 : vector<8x64xf32>
    %75 = arith.mulf %69, %73 : vector<8x64xf32>
    %76 = arith.addf %74, %75 : vector<8x64xf32>
    %77 = math.tanh %76 : vector<8x64xf32>
    %78 = arith.mulf %71, %77 : vector<8x64xf32>
    %cst_28 = arith.constant dense<0.000000e+00> : vector<8x256xf32>
    %79 = tpu.matmul %78, %4, %cst_28 {dimension_numbers = #tpu.dot_dimension_numbers<[1], [0], [0], [1], [0, 0, 1, 1], [], []>} : vector<8x64xf32>, vector<64x256xf32>, vector<8x256xf32> -> vector<8x256xf32>
    %80 = arith.addf %56, %79 : vector<8x256xf32>
    %81 = vector.extract_strided_slice %80 {offsets = [0, 0], sizes = [8, 192], strides = [1, 1]} : vector<8x256xf32> to vector<8x192xf32>
    %82 = arith.negf %81 : vector<8x192xf32>
    %83 = math.exp %82 : vector<8x192xf32>
    %cst_29 = arith.constant 1.000000e+00 : f32
    %84 = vector.broadcast %cst_29 : f32 to vector<8x192xf32>
    %85 = arith.addf %84, %83 : vector<8x192xf32>
    %86 = arith.divf %84, %85 : vector<8x192xf32>
    %87 = vector.extract_strided_slice %86 {offsets = [0, 0], sizes = [8, 64], strides = [1, 1]} : vector<8x192xf32> to vector<8x64xf32>
    %88 = vector.extract_strided_slice %86 {offsets = [0, 64], sizes = [8, 64], strides = [1, 1]} : vector<8x192xf32> to vector<8x64xf32>
    %89 = vector.extract_strided_slice %86 {offsets = [0, 128], sizes = [8, 64], strides = [1, 1]} : vector<8x192xf32> to vector<8x64xf32>
    %90 = vector.extract_strided_slice %80 {offsets = [0, 192], sizes = [8, 64], strides = [1, 1]} : vector<8x256xf32> to vector<8x64xf32>
    %91 = math.tanh %90 : vector<8x64xf32>
    %92 = arith.mulf %88, %52 : vector<8x64xf32>
    %93 = arith.mulf %87, %91 : vector<8x64xf32>
    %94 = arith.addf %92, %93 : vector<8x64xf32>
    %95 = math.tanh %94 : vector<8x64xf32>
    %96 = arith.mulf %89, %95 : vector<8x64xf32>
    %cst_30 = arith.constant dense<0.000000e+00> : vector<8x256xf32>
    %97 = tpu.matmul %96, %5, %cst_30 {dimension_numbers = #tpu.dot_dimension_numbers<[1], [0], [0], [1], [0, 0, 1, 1], [], []>} : vector<8x64xf32>, vector<64x256xf32>, vector<8x256xf32> -> vector<8x256xf32>
    %98 = arith.addf %97, %8 : vector<8x256xf32>
    %c2_i32 = arith.constant 2 : i32
    %99 = arith.index_cast %c2_i32 : i32 to index
    %c0_31 = arith.constant 0 : index
    %c0_32 = arith.constant 0 : index
    %100 = vector.load %arg1[%99, %c0_31, %c0_32] : memref<8x8x256xbf16, #tpu.memory_space<vmem>>, vector<1x8x256xbf16>
    %101 = vector.shape_cast %100 : vector<1x8x256xbf16> to vector<8x256xbf16>
    %102 = arith.extf %101 : vector<8x256xbf16> to vector<8x256xf32>
    %cst_33 = arith.constant dense<0.000000e+00> : vector<8x256xf32>
    %103 = tpu.matmul %78, %3, %cst_33 {dimension_numbers = #tpu.dot_dimension_numbers<[1], [0], [0], [1], [0, 0, 1, 1], [], []>} : vector<8x64xf32>, vector<64x256xf32>, vector<8x256xf32> -> vector<8x256xf32>
    %104 = arith.addf %102, %103 : vector<8x256xf32>
    %105 = vector.extract_strided_slice %104 {offsets = [0, 0], sizes = [8, 192], strides = [1, 1]} : vector<8x256xf32> to vector<8x192xf32>
    %106 = arith.negf %105 : vector<8x192xf32>
    %107 = math.exp %106 : vector<8x192xf32>
    %cst_34 = arith.constant 1.000000e+00 : f32
    %108 = vector.broadcast %cst_34 : f32 to vector<8x192xf32>
    %109 = arith.addf %108, %107 : vector<8x192xf32>
    %110 = arith.divf %108, %109 : vector<8x192xf32>
    %111 = vector.extract_strided_slice %110 {offsets = [0, 0], sizes = [8, 64], strides = [1, 1]} : vector<8x192xf32> to vector<8x64xf32>
    %112 = vector.extract_strided_slice %110 {offsets = [0, 64], sizes = [8, 64], strides = [1, 1]} : vector<8x192xf32> to vector<8x64xf32>
    %113 = vector.extract_strided_slice %110 {offsets = [0, 128], sizes = [8, 64], strides = [1, 1]} : vector<8x192xf32> to vector<8x64xf32>
    %114 = vector.extract_strided_slice %104 {offsets = [0, 192], sizes = [8, 64], strides = [1, 1]} : vector<8x256xf32> to vector<8x64xf32>
    %115 = math.tanh %114 : vector<8x64xf32>
    %116 = arith.mulf %112, %76 : vector<8x64xf32>
    %117 = arith.mulf %111, %115 : vector<8x64xf32>
    %118 = arith.addf %116, %117 : vector<8x64xf32>
    %119 = math.tanh %118 : vector<8x64xf32>
    %120 = arith.mulf %113, %119 : vector<8x64xf32>
    %cst_35 = arith.constant dense<0.000000e+00> : vector<8x256xf32>
    %121 = tpu.matmul %120, %4, %cst_35 {dimension_numbers = #tpu.dot_dimension_numbers<[1], [0], [0], [1], [0, 0, 1, 1], [], []>} : vector<8x64xf32>, vector<64x256xf32>, vector<8x256xf32> -> vector<8x256xf32>
    %122 = arith.addf %98, %121 : vector<8x256xf32>
    %123 = vector.extract_strided_slice %122 {offsets = [0, 0], sizes = [8, 192], strides = [1, 1]} : vector<8x256xf32> to vector<8x192xf32>
    %124 = arith.negf %123 : vector<8x192xf32>
    %125 = math.exp %124 : vector<8x192xf32>
    %cst_36 = arith.constant 1.000000e+00 : f32
    %126 = vector.broadcast %cst_36 : f32 to vector<8x192xf32>
    %127 = arith.addf %126, %125 : vector<8x192xf32>
    %128 = arith.divf %126, %127 : vector<8x192xf32>
    %129 = vector.extract_strided_slice %128 {offsets = [0, 0], sizes = [8, 64], strides = [1, 1]} : vector<8x192xf32> to vector<8x64xf32>
    %130 = vector.extract_strided_slice %128 {offsets = [0, 64], sizes = [8, 64], strides = [1, 1]} : vector<8x192xf32> to vector<8x64xf32>
    %131 = vector.extract_strided_slice %128 {offsets = [0, 128], sizes = [8, 64], strides = [1, 1]} : vector<8x192xf32> to vector<8x64xf32>
    %132 = vector.extract_strided_slice %122 {offsets = [0, 192], sizes = [8, 64], strides = [1, 1]} : vector<8x256xf32> to vector<8x64xf32>
    %133 = math.tanh %132 : vector<8x64xf32>
    %134 = arith.mulf %130, %94 : vector<8x64xf32>
    %135 = arith.mulf %129, %133 : vector<8x64xf32>
    %136 = arith.addf %134, %135 : vector<8x64xf32>
    %137 = math.tanh %136 : vector<8x64xf32>
    %138 = arith.mulf %131, %137 : vector<8x64xf32>
    %cst_37 = arith.constant dense<0.000000e+00> : vector<8x256xf32>
    %139 = tpu.matmul %138, %5, %cst_37 {dimension_numbers = #tpu.dot_dimension_numbers<[1], [0], [0], [1], [0, 0, 1, 1], [], []>} : vector<8x64xf32>, vector<64x256xf32>, vector<8x256xf32> -> vector<8x256xf32>
    %140 = arith.addf %139, %8 : vector<8x256xf32>
    %c3_i32 = arith.constant 3 : i32
    %141 = arith.index_cast %c3_i32 : i32 to index
    %c0_38 = arith.constant 0 : index
    %c0_39 = arith.constant 0 : index
    %142 = vector.load %arg1[%141, %c0_38, %c0_39] : memref<8x8x256xbf16, #tpu.memory_space<vmem>>, vector<1x8x256xbf16>
    %143 = vector.shape_cast %142 : vector<1x8x256xbf16> to vector<8x256xbf16>
    %144 = arith.extf %143 : vector<8x256xbf16> to vector<8x256xf32>
    %cst_40 = arith.constant dense<0.000000e+00> : vector<8x256xf32>
    %145 = tpu.matmul %120, %3, %cst_40 {dimension_numbers = #tpu.dot_dimension_numbers<[1], [0], [0], [1], [0, 0, 1, 1], [], []>} : vector<8x64xf32>, vector<64x256xf32>, vector<8x256xf32> -> vector<8x256xf32>
    %146 = arith.addf %144, %145 : vector<8x256xf32>
    %147 = vector.extract_strided_slice %146 {offsets = [0, 0], sizes = [8, 192], strides = [1, 1]} : vector<8x256xf32> to vector<8x192xf32>
    %148 = arith.negf %147 : vector<8x192xf32>
    %149 = math.exp %148 : vector<8x192xf32>
    %cst_41 = arith.constant 1.000000e+00 : f32
    %150 = vector.broadcast %cst_41 : f32 to vector<8x192xf32>
    %151 = arith.addf %150, %149 : vector<8x192xf32>
    %152 = arith.divf %150, %151 : vector<8x192xf32>
    %153 = vector.extract_strided_slice %152 {offsets = [0, 0], sizes = [8, 64], strides = [1, 1]} : vector<8x192xf32> to vector<8x64xf32>
    %154 = vector.extract_strided_slice %152 {offsets = [0, 64], sizes = [8, 64], strides = [1, 1]} : vector<8x192xf32> to vector<8x64xf32>
    %155 = vector.extract_strided_slice %152 {offsets = [0, 128], sizes = [8, 64], strides = [1, 1]} : vector<8x192xf32> to vector<8x64xf32>
    %156 = vector.extract_strided_slice %146 {offsets = [0, 192], sizes = [8, 64], strides = [1, 1]} : vector<8x256xf32> to vector<8x64xf32>
    %157 = math.tanh %156 : vector<8x64xf32>
    %158 = arith.mulf %154, %118 : vector<8x64xf32>
    %159 = arith.mulf %153, %157 : vector<8x64xf32>
    %160 = arith.addf %158, %159 : vector<8x64xf32>
    %161 = math.tanh %160 : vector<8x64xf32>
    %162 = arith.mulf %155, %161 : vector<8x64xf32>
    %cst_42 = arith.constant dense<0.000000e+00> : vector<8x256xf32>
    %163 = tpu.matmul %162, %4, %cst_42 {dimension_numbers = #tpu.dot_dimension_numbers<[1], [0], [0], [1], [0, 0, 1, 1], [], []>} : vector<8x64xf32>, vector<64x256xf32>, vector<8x256xf32> -> vector<8x256xf32>
    %164 = arith.addf %140, %163 : vector<8x256xf32>
    %165 = vector.extract_strided_slice %164 {offsets = [0, 0], sizes = [8, 192], strides = [1, 1]} : vector<8x256xf32> to vector<8x192xf32>
    %166 = arith.negf %165 : vector<8x192xf32>
    %167 = math.exp %166 : vector<8x192xf32>
    %cst_43 = arith.constant 1.000000e+00 : f32
    %168 = vector.broadcast %cst_43 : f32 to vector<8x192xf32>
    %169 = arith.addf %168, %167 : vector<8x192xf32>
    %170 = arith.divf %168, %169 : vector<8x192xf32>
    %171 = vector.extract_strided_slice %170 {offsets = [0, 0], sizes = [8, 64], strides = [1, 1]} : vector<8x192xf32> to vector<8x64xf32>
    %172 = vector.extract_strided_slice %170 {offsets = [0, 64], sizes = [8, 64], strides = [1, 1]} : vector<8x192xf32> to vector<8x64xf32>
    %173 = vector.extract_strided_slice %170 {offsets = [0, 128], sizes = [8, 64], strides = [1, 1]} : vector<8x192xf32> to vector<8x64xf32>
    %174 = vector.extract_strided_slice %164 {offsets = [0, 192], sizes = [8, 64], strides = [1, 1]} : vector<8x256xf32> to vector<8x64xf32>
    %175 = math.tanh %174 : vector<8x64xf32>
    %176 = arith.mulf %172, %136 : vector<8x64xf32>
    %177 = arith.mulf %171, %175 : vector<8x64xf32>
    %178 = arith.addf %176, %177 : vector<8x64xf32>
    %179 = math.tanh %178 : vector<8x64xf32>
    %180 = arith.mulf %173, %179 : vector<8x64xf32>
    %cst_44 = arith.constant dense<0.000000e+00> : vector<8x256xf32>
    %181 = tpu.matmul %180, %5, %cst_44 {dimension_numbers = #tpu.dot_dimension_numbers<[1], [0], [0], [1], [0, 0, 1, 1], [], []>} : vector<8x64xf32>, vector<64x256xf32>, vector<8x256xf32> -> vector<8x256xf32>
    %182 = arith.addf %181, %8 : vector<8x256xf32>
    %c4_i32 = arith.constant 4 : i32
    %183 = arith.index_cast %c4_i32 : i32 to index
    %c0_45 = arith.constant 0 : index
    %c0_46 = arith.constant 0 : index
    %184 = vector.load %arg1[%183, %c0_45, %c0_46] : memref<8x8x256xbf16, #tpu.memory_space<vmem>>, vector<1x8x256xbf16>
    %185 = vector.shape_cast %184 : vector<1x8x256xbf16> to vector<8x256xbf16>
    %186 = arith.extf %185 : vector<8x256xbf16> to vector<8x256xf32>
    %cst_47 = arith.constant dense<0.000000e+00> : vector<8x256xf32>
    %187 = tpu.matmul %162, %3, %cst_47 {dimension_numbers = #tpu.dot_dimension_numbers<[1], [0], [0], [1], [0, 0, 1, 1], [], []>} : vector<8x64xf32>, vector<64x256xf32>, vector<8x256xf32> -> vector<8x256xf32>
    %188 = arith.addf %186, %187 : vector<8x256xf32>
    %189 = vector.extract_strided_slice %188 {offsets = [0, 0], sizes = [8, 192], strides = [1, 1]} : vector<8x256xf32> to vector<8x192xf32>
    %190 = arith.negf %189 : vector<8x192xf32>
    %191 = math.exp %190 : vector<8x192xf32>
    %cst_48 = arith.constant 1.000000e+00 : f32
    %192 = vector.broadcast %cst_48 : f32 to vector<8x192xf32>
    %193 = arith.addf %192, %191 : vector<8x192xf32>
    %194 = arith.divf %192, %193 : vector<8x192xf32>
    %195 = vector.extract_strided_slice %194 {offsets = [0, 0], sizes = [8, 64], strides = [1, 1]} : vector<8x192xf32> to vector<8x64xf32>
    %196 = vector.extract_strided_slice %194 {offsets = [0, 64], sizes = [8, 64], strides = [1, 1]} : vector<8x192xf32> to vector<8x64xf32>
    %197 = vector.extract_strided_slice %194 {offsets = [0, 128], sizes = [8, 64], strides = [1, 1]} : vector<8x192xf32> to vector<8x64xf32>
    %198 = vector.extract_strided_slice %188 {offsets = [0, 192], sizes = [8, 64], strides = [1, 1]} : vector<8x256xf32> to vector<8x64xf32>
    %199 = math.tanh %198 : vector<8x64xf32>
    %200 = arith.mulf %196, %160 : vector<8x64xf32>
    %201 = arith.mulf %195, %199 : vector<8x64xf32>
    %202 = arith.addf %200, %201 : vector<8x64xf32>
    %203 = math.tanh %202 : vector<8x64xf32>
    %204 = arith.mulf %197, %203 : vector<8x64xf32>
    %cst_49 = arith.constant dense<0.000000e+00> : vector<8x256xf32>
    %205 = tpu.matmul %204, %4, %cst_49 {dimension_numbers = #tpu.dot_dimension_numbers<[1], [0], [0], [1], [0, 0, 1, 1], [], []>} : vector<8x64xf32>, vector<64x256xf32>, vector<8x256xf32> -> vector<8x256xf32>
    %206 = arith.addf %182, %205 : vector<8x256xf32>
    %207 = vector.extract_strided_slice %206 {offsets = [0, 0], sizes = [8, 192], strides = [1, 1]} : vector<8x256xf32> to vector<8x192xf32>
    %208 = arith.negf %207 : vector<8x192xf32>
    %209 = math.exp %208 : vector<8x192xf32>
    %cst_50 = arith.constant 1.000000e+00 : f32
    %210 = vector.broadcast %cst_50 : f32 to vector<8x192xf32>
    %211 = arith.addf %210, %209 : vector<8x192xf32>
    %212 = arith.divf %210, %211 : vector<8x192xf32>
    %213 = vector.extract_strided_slice %212 {offsets = [0, 0], sizes = [8, 64], strides = [1, 1]} : vector<8x192xf32> to vector<8x64xf32>
    %214 = vector.extract_strided_slice %212 {offsets = [0, 64], sizes = [8, 64], strides = [1, 1]} : vector<8x192xf32> to vector<8x64xf32>
    %215 = vector.extract_strided_slice %212 {offsets = [0, 128], sizes = [8, 64], strides = [1, 1]} : vector<8x192xf32> to vector<8x64xf32>
    %216 = vector.extract_strided_slice %206 {offsets = [0, 192], sizes = [8, 64], strides = [1, 1]} : vector<8x256xf32> to vector<8x64xf32>
    %217 = math.tanh %216 : vector<8x64xf32>
    %218 = arith.mulf %214, %178 : vector<8x64xf32>
    %219 = arith.mulf %213, %217 : vector<8x64xf32>
    %220 = arith.addf %218, %219 : vector<8x64xf32>
    %221 = math.tanh %220 : vector<8x64xf32>
    %222 = arith.mulf %215, %221 : vector<8x64xf32>
    %cst_51 = arith.constant dense<0.000000e+00> : vector<8x256xf32>
    %223 = tpu.matmul %222, %5, %cst_51 {dimension_numbers = #tpu.dot_dimension_numbers<[1], [0], [0], [1], [0, 0, 1, 1], [], []>} : vector<8x64xf32>, vector<64x256xf32>, vector<8x256xf32> -> vector<8x256xf32>
    %224 = arith.addf %223, %8 : vector<8x256xf32>
    %c5_i32 = arith.constant 5 : i32
    %225 = arith.index_cast %c5_i32 : i32 to index
    %c0_52 = arith.constant 0 : index
    %c0_53 = arith.constant 0 : index
    %226 = vector.load %arg1[%225, %c0_52, %c0_53] : memref<8x8x256xbf16, #tpu.memory_space<vmem>>, vector<1x8x256xbf16>
    %227 = vector.shape_cast %226 : vector<1x8x256xbf16> to vector<8x256xbf16>
    %228 = arith.extf %227 : vector<8x256xbf16> to vector<8x256xf32>
    %cst_54 = arith.constant dense<0.000000e+00> : vector<8x256xf32>
    %229 = tpu.matmul %204, %3, %cst_54 {dimension_numbers = #tpu.dot_dimension_numbers<[1], [0], [0], [1], [0, 0, 1, 1], [], []>} : vector<8x64xf32>, vector<64x256xf32>, vector<8x256xf32> -> vector<8x256xf32>
    %230 = arith.addf %228, %229 : vector<8x256xf32>
    %231 = vector.extract_strided_slice %230 {offsets = [0, 0], sizes = [8, 192], strides = [1, 1]} : vector<8x256xf32> to vector<8x192xf32>
    %232 = arith.negf %231 : vector<8x192xf32>
    %233 = math.exp %232 : vector<8x192xf32>
    %cst_55 = arith.constant 1.000000e+00 : f32
    %234 = vector.broadcast %cst_55 : f32 to vector<8x192xf32>
    %235 = arith.addf %234, %233 : vector<8x192xf32>
    %236 = arith.divf %234, %235 : vector<8x192xf32>
    %237 = vector.extract_strided_slice %236 {offsets = [0, 0], sizes = [8, 64], strides = [1, 1]} : vector<8x192xf32> to vector<8x64xf32>
    %238 = vector.extract_strided_slice %236 {offsets = [0, 64], sizes = [8, 64], strides = [1, 1]} : vector<8x192xf32> to vector<8x64xf32>
    %239 = vector.extract_strided_slice %236 {offsets = [0, 128], sizes = [8, 64], strides = [1, 1]} : vector<8x192xf32> to vector<8x64xf32>
    %240 = vector.extract_strided_slice %230 {offsets = [0, 192], sizes = [8, 64], strides = [1, 1]} : vector<8x256xf32> to vector<8x64xf32>
    %241 = math.tanh %240 : vector<8x64xf32>
    %242 = arith.mulf %238, %202 : vector<8x64xf32>
    %243 = arith.mulf %237, %241 : vector<8x64xf32>
    %244 = arith.addf %242, %243 : vector<8x64xf32>
    %245 = math.tanh %244 : vector<8x64xf32>
    %246 = arith.mulf %239, %245 : vector<8x64xf32>
    %cst_56 = arith.constant dense<0.000000e+00> : vector<8x256xf32>
    %247 = tpu.matmul %246, %4, %cst_56 {dimension_numbers = #tpu.dot_dimension_numbers<[1], [0], [0], [1], [0, 0, 1, 1], [], []>} : vector<8x64xf32>, vector<64x256xf32>, vector<8x256xf32> -> vector<8x256xf32>
    %248 = arith.addf %224, %247 : vector<8x256xf32>
    %249 = vector.extract_strided_slice %248 {offsets = [0, 0], sizes = [8, 192], strides = [1, 1]} : vector<8x256xf32> to vector<8x192xf32>
    %250 = arith.negf %249 : vector<8x192xf32>
    %251 = math.exp %250 : vector<8x192xf32>
    %cst_57 = arith.constant 1.000000e+00 : f32
    %252 = vector.broadcast %cst_57 : f32 to vector<8x192xf32>
    %253 = arith.addf %252, %251 : vector<8x192xf32>
    %254 = arith.divf %252, %253 : vector<8x192xf32>
    %255 = vector.extract_strided_slice %254 {offsets = [0, 0], sizes = [8, 64], strides = [1, 1]} : vector<8x192xf32> to vector<8x64xf32>
    %256 = vector.extract_strided_slice %254 {offsets = [0, 64], sizes = [8, 64], strides = [1, 1]} : vector<8x192xf32> to vector<8x64xf32>
    %257 = vector.extract_strided_slice %254 {offsets = [0, 128], sizes = [8, 64], strides = [1, 1]} : vector<8x192xf32> to vector<8x64xf32>
    %258 = vector.extract_strided_slice %248 {offsets = [0, 192], sizes = [8, 64], strides = [1, 1]} : vector<8x256xf32> to vector<8x64xf32>
    %259 = math.tanh %258 : vector<8x64xf32>
    %260 = arith.mulf %256, %220 : vector<8x64xf32>
    %261 = arith.mulf %255, %259 : vector<8x64xf32>
    %262 = arith.addf %260, %261 : vector<8x64xf32>
    %263 = math.tanh %262 : vector<8x64xf32>
    %264 = arith.mulf %257, %263 : vector<8x64xf32>
    %cst_58 = arith.constant dense<0.000000e+00> : vector<8x256xf32>
    %265 = tpu.matmul %264, %5, %cst_58 {dimension_numbers = #tpu.dot_dimension_numbers<[1], [0], [0], [1], [0, 0, 1, 1], [], []>} : vector<8x64xf32>, vector<64x256xf32>, vector<8x256xf32> -> vector<8x256xf32>
    %266 = arith.addf %265, %8 : vector<8x256xf32>
    %c6_i32 = arith.constant 6 : i32
    %267 = arith.index_cast %c6_i32 : i32 to index
    %c0_59 = arith.constant 0 : index
    %c0_60 = arith.constant 0 : index
    %268 = vector.load %arg1[%267, %c0_59, %c0_60] : memref<8x8x256xbf16, #tpu.memory_space<vmem>>, vector<1x8x256xbf16>
    %269 = vector.shape_cast %268 : vector<1x8x256xbf16> to vector<8x256xbf16>
    %270 = arith.extf %269 : vector<8x256xbf16> to vector<8x256xf32>
    %cst_61 = arith.constant dense<0.000000e+00> : vector<8x256xf32>
    %271 = tpu.matmul %246, %3, %cst_61 {dimension_numbers = #tpu.dot_dimension_numbers<[1], [0], [0], [1], [0, 0, 1, 1], [], []>} : vector<8x64xf32>, vector<64x256xf32>, vector<8x256xf32> -> vector<8x256xf32>
    %272 = arith.addf %270, %271 : vector<8x256xf32>
    %273 = vector.extract_strided_slice %272 {offsets = [0, 0], sizes = [8, 192], strides = [1, 1]} : vector<8x256xf32> to vector<8x192xf32>
    %274 = arith.negf %273 : vector<8x192xf32>
    %275 = math.exp %274 : vector<8x192xf32>
    %cst_62 = arith.constant 1.000000e+00 : f32
    %276 = vector.broadcast %cst_62 : f32 to vector<8x192xf32>
    %277 = arith.addf %276, %275 : vector<8x192xf32>
    %278 = arith.divf %276, %277 : vector<8x192xf32>
    %279 = vector.extract_strided_slice %278 {offsets = [0, 0], sizes = [8, 64], strides = [1, 1]} : vector<8x192xf32> to vector<8x64xf32>
    %280 = vector.extract_strided_slice %278 {offsets = [0, 64], sizes = [8, 64], strides = [1, 1]} : vector<8x192xf32> to vector<8x64xf32>
    %281 = vector.extract_strided_slice %278 {offsets = [0, 128], sizes = [8, 64], strides = [1, 1]} : vector<8x192xf32> to vector<8x64xf32>
    %282 = vector.extract_strided_slice %272 {offsets = [0, 192], sizes = [8, 64], strides = [1, 1]} : vector<8x256xf32> to vector<8x64xf32>
    %283 = math.tanh %282 : vector<8x64xf32>
    %284 = arith.mulf %280, %244 : vector<8x64xf32>
    %285 = arith.mulf %279, %283 : vector<8x64xf32>
    %286 = arith.addf %284, %285 : vector<8x64xf32>
    %287 = math.tanh %286 : vector<8x64xf32>
    %288 = arith.mulf %281, %287 : vector<8x64xf32>
    %cst_63 = arith.constant dense<0.000000e+00> : vector<8x256xf32>
    %289 = tpu.matmul %288, %4, %cst_63 {dimension_numbers = #tpu.dot_dimension_numbers<[1], [0], [0], [1], [0, 0, 1, 1], [], []>} : vector<8x64xf32>, vector<64x256xf32>, vector<8x256xf32> -> vector<8x256xf32>
    %290 = arith.addf %266, %289 : vector<8x256xf32>
    %291 = vector.extract_strided_slice %290 {offsets = [0, 0], sizes = [8, 192], strides = [1, 1]} : vector<8x256xf32> to vector<8x192xf32>
    %292 = arith.negf %291 : vector<8x192xf32>
    %293 = math.exp %292 : vector<8x192xf32>
    %cst_64 = arith.constant 1.000000e+00 : f32
    %294 = vector.broadcast %cst_64 : f32 to vector<8x192xf32>
    %295 = arith.addf %294, %293 : vector<8x192xf32>
    %296 = arith.divf %294, %295 : vector<8x192xf32>
    %297 = vector.extract_strided_slice %296 {offsets = [0, 0], sizes = [8, 64], strides = [1, 1]} : vector<8x192xf32> to vector<8x64xf32>
    %298 = vector.extract_strided_slice %296 {offsets = [0, 64], sizes = [8, 64], strides = [1, 1]} : vector<8x192xf32> to vector<8x64xf32>
    %299 = vector.extract_strided_slice %296 {offsets = [0, 128], sizes = [8, 64], strides = [1, 1]} : vector<8x192xf32> to vector<8x64xf32>
    %300 = vector.extract_strided_slice %290 {offsets = [0, 192], sizes = [8, 64], strides = [1, 1]} : vector<8x256xf32> to vector<8x64xf32>
    %301 = math.tanh %300 : vector<8x64xf32>
    %302 = arith.mulf %298, %262 : vector<8x64xf32>
    %303 = arith.mulf %297, %301 : vector<8x64xf32>
    %304 = arith.addf %302, %303 : vector<8x64xf32>
    %305 = math.tanh %304 : vector<8x64xf32>
    %306 = arith.mulf %299, %305 : vector<8x64xf32>
    %cst_65 = arith.constant dense<0.000000e+00> : vector<8x256xf32>
    %307 = tpu.matmul %306, %5, %cst_65 {dimension_numbers = #tpu.dot_dimension_numbers<[1], [0], [0], [1], [0, 0, 1, 1], [], []>} : vector<8x64xf32>, vector<64x256xf32>, vector<8x256xf32> -> vector<8x256xf32>
    %308 = arith.addf %307, %8 : vector<8x256xf32>
    %c7_i32 = arith.constant 7 : i32
    %309 = arith.index_cast %c7_i32 : i32 to index
    %c0_66 = arith.constant 0 : index
    %c0_67 = arith.constant 0 : index
    %310 = vector.load %arg1[%309, %c0_66, %c0_67] : memref<8x8x256xbf16, #tpu.memory_space<vmem>>, vector<1x8x256xbf16>
    %311 = vector.shape_cast %310 : vector<1x8x256xbf16> to vector<8x256xbf16>
    %312 = arith.extf %311 : vector<8x256xbf16> to vector<8x256xf32>
    %cst_68 = arith.constant dense<0.000000e+00> : vector<8x256xf32>
    %313 = tpu.matmul %288, %3, %cst_68 {dimension_numbers = #tpu.dot_dimension_numbers<[1], [0], [0], [1], [0, 0, 1, 1], [], []>} : vector<8x64xf32>, vector<64x256xf32>, vector<8x256xf32> -> vector<8x256xf32>
    %314 = arith.addf %312, %313 : vector<8x256xf32>
    %315 = vector.extract_strided_slice %314 {offsets = [0, 0], sizes = [8, 192], strides = [1, 1]} : vector<8x256xf32> to vector<8x192xf32>
    %316 = arith.negf %315 : vector<8x192xf32>
    %317 = math.exp %316 : vector<8x192xf32>
    %cst_69 = arith.constant 1.000000e+00 : f32
    %318 = vector.broadcast %cst_69 : f32 to vector<8x192xf32>
    %319 = arith.addf %318, %317 : vector<8x192xf32>
    %320 = arith.divf %318, %319 : vector<8x192xf32>
    %321 = vector.extract_strided_slice %320 {offsets = [0, 0], sizes = [8, 64], strides = [1, 1]} : vector<8x192xf32> to vector<8x64xf32>
    %322 = vector.extract_strided_slice %320 {offsets = [0, 64], sizes = [8, 64], strides = [1, 1]} : vector<8x192xf32> to vector<8x64xf32>
    %323 = vector.extract_strided_slice %320 {offsets = [0, 128], sizes = [8, 64], strides = [1, 1]} : vector<8x192xf32> to vector<8x64xf32>
    %324 = vector.extract_strided_slice %314 {offsets = [0, 192], sizes = [8, 64], strides = [1, 1]} : vector<8x256xf32> to vector<8x64xf32>
    %325 = math.tanh %324 : vector<8x64xf32>
    %326 = arith.mulf %322, %286 : vector<8x64xf32>
    %327 = arith.mulf %321, %325 : vector<8x64xf32>
    %328 = arith.addf %326, %327 : vector<8x64xf32>
    %329 = math.tanh %328 : vector<8x64xf32>
    %330 = arith.mulf %323, %329 : vector<8x64xf32>
    %cst_70 = arith.constant dense<0.000000e+00> : vector<8x256xf32>
    %331 = tpu.matmul %330, %4, %cst_70 {dimension_numbers = #tpu.dot_dimension_numbers<[1], [0], [0], [1], [0, 0, 1, 1], [], []>} : vector<8x64xf32>, vector<64x256xf32>, vector<8x256xf32> -> vector<8x256xf32>
    %332 = arith.addf %308, %331 : vector<8x256xf32>
    %333 = vector.extract_strided_slice %332 {offsets = [0, 0], sizes = [8, 192], strides = [1, 1]} : vector<8x256xf32> to vector<8x192xf32>
    %334 = arith.negf %333 : vector<8x192xf32>
    %335 = math.exp %334 : vector<8x192xf32>
    %cst_71 = arith.constant 1.000000e+00 : f32
    %336 = vector.broadcast %cst_71 : f32 to vector<8x192xf32>
    %337 = arith.addf %336, %335 : vector<8x192xf32>
    %338 = arith.divf %336, %337 : vector<8x192xf32>
    %339 = vector.extract_strided_slice %338 {offsets = [0, 0], sizes = [8, 64], strides = [1, 1]} : vector<8x192xf32> to vector<8x64xf32>
    %340 = vector.extract_strided_slice %338 {offsets = [0, 64], sizes = [8, 64], strides = [1, 1]} : vector<8x192xf32> to vector<8x64xf32>
    %341 = vector.extract_strided_slice %338 {offsets = [0, 128], sizes = [8, 64], strides = [1, 1]} : vector<8x192xf32> to vector<8x64xf32>
    %342 = vector.extract_strided_slice %332 {offsets = [0, 192], sizes = [8, 64], strides = [1, 1]} : vector<8x256xf32> to vector<8x64xf32>
    %343 = math.tanh %342 : vector<8x64xf32>
    %344 = arith.mulf %340, %304 : vector<8x64xf32>
    %345 = arith.mulf %339, %343 : vector<8x64xf32>
    %346 = arith.addf %344, %345 : vector<8x64xf32>
    %347 = math.tanh %346 : vector<8x64xf32>
    %348 = arith.mulf %341, %347 : vector<8x64xf32>
    %cst_72 = arith.constant dense<0.000000e+00> : vector<8x256xf32>
    %349 = tpu.matmul %348, %5, %cst_72 {dimension_numbers = #tpu.dot_dimension_numbers<[1], [0], [0], [1], [0, 0, 1, 1], [], []>} : vector<8x64xf32>, vector<64x256xf32>, vector<8x256xf32> -> vector<8x256xf32>
    %350 = arith.addf %349, %8 : vector<8x256xf32>
    %c8_i32 = arith.constant 8 : i32
    %c0_73 = arith.constant 0 : index
    %c0_74 = arith.constant 0 : index
    %351 = vector.load %arg7[%c0_73, %c0_74] : memref<8x64xf32, #tpu.memory_space<vmem>>, vector<8x64xf32>
    tpu.vector_store %arg7[%c0_73, %c0_74], %330 {strides = array<i32>} : memref<8x64xf32, #tpu.memory_space<vmem>>, vector<8x64xf32>,
    %c0_75 = arith.constant 0 : index
    %c0_76 = arith.constant 0 : index
    %352 = vector.load %arg8[%c0_75, %c0_76] : memref<8x64xf32, #tpu.memory_space<vmem>>, vector<8x64xf32>
    tpu.vector_store %arg8[%c0_75, %c0_76], %328 {strides = array<i32>} : memref<8x64xf32, #tpu.memory_space<vmem>>, vector<8x64xf32>,
    %c0_77 = arith.constant 0 : index
    %c0_78 = arith.constant 0 : index
    %353 = vector.load %arg9[%c0_77, %c0_78] : memref<8x64xf32, #tpu.memory_space<vmem>>, vector<8x64xf32>
    tpu.vector_store %arg9[%c0_77, %c0_78], %348 {strides = array<i32>} : memref<8x64xf32, #tpu.memory_space<vmem>>, vector<8x64xf32>,
    %c0_79 = arith.constant 0 : index
    %c0_80 = arith.constant 0 : index
    %354 = vector.load %arg10[%c0_79, %c0_80] : memref<8x64xf32, #tpu.memory_space<vmem>>, vector<8x64xf32>
    tpu.vector_store %arg10[%c0_79, %c0_80], %346 {strides = array<i32>} : memref<8x64xf32, #tpu.memory_space<vmem>>, vector<8x64xf32>,
    %c0_i32_81 = arith.constant 0 : i32
    %355 = arith.cmpi eq, %arg0, %c0_i32_81 : i32
    %356 = arith.extui %355 : i1 to i32
    %c0_i32_82 = arith.constant 0 : i32
    %357 = arith.cmpi ne, %356, %c0_i32_82 : i32
    scf.if %357 {
      %c0_83 = arith.constant 0 : index
      %c0_84 = arith.constant 0 : index
      %358 = vector.load %arg9[%c0_83, %c0_84] : memref<8x64xf32, #tpu.memory_space<vmem>>, vector<8x64xf32>
      %c0_85 = arith.constant 0 : index
      %c0_86 = arith.constant 0 : index
      %359 = vector.load %arg6[%c0_85, %c0_86] : memref<8x64xf32, #tpu.memory_space<vmem>>, vector<8x64xf32>
      tpu.vector_store %arg6[%c0_85, %c0_86], %358 {strides = array<i32>} : memref<8x64xf32, #tpu.memory_space<vmem>>, vector<8x64xf32>,
    } else {
    }
    return
  }
  func.func @transform_0(%arg0: i32) -> (i32, i32, i32) {
    %c0_i32 = arith.constant 0 : i32
    %c0_i32_0 = arith.constant 0 : i32
    %c0_i32_1 = arith.constant 0 : i32
    return %arg0, %c0_i32, %c0_i32_0 : i32, i32, i32
  }
  func.func @transform_1(%arg0: i32) -> (i32, i32) {
    %c0_i32 = arith.constant 0 : i32
    %c0_i32_0 = arith.constant 0 : i32
    %c0_i32_1 = arith.constant 0 : i32
    return %c0_i32, %c0_i32_0 : i32, i32
  }
  func.func @transform_2(%arg0: i32) -> (i32, i32) {
    %c0_i32 = arith.constant 0 : i32
    %c0_i32_0 = arith.constant 0 : i32
    %c0_i32_1 = arith.constant 0 : i32
    return %c0_i32, %c0_i32_0 : i32, i32
  }
  func.func @transform_3(%arg0: i32) -> (i32, i32) {
    %c0_i32 = arith.constant 0 : i32
    %c0_i32_0 = arith.constant 0 : i32
    %c0_i32_1 = arith.constant 0 : i32
    return %c0_i32, %c0_i32_0 : i32, i32
  }
  func.func @transform_4(%arg0: i32) -> (i32, i32) {
    %c0_i32 = arith.constant 0 : i32
    %c0_i32_0 = arith.constant 0 : i32
    %c0_i32_1 = arith.constant 0 : i32
    return %c0_i32, %c0_i32_0 : i32, i32
  }
  func.func @transform_5(%arg0: i32) -> (i32, i32) {
    %c0_i32 = arith.constant 0 : i32
    %c0_i32_0 = arith.constant 0 : i32
    %c0_i32_1 = arith.constant 0 : i32
    return %c0_i32, %c0_i32_0 : i32, i32
  }
}

</mosaic_0001>

<llo_original>
// kernel: tpu_custom_call.1
$region0: #{tpu_custom_call.1}
  #allocation0 [shape = 'u32[]', space=smem, size = 0x4, offset = 0x4, fixed_abs, tag = 'smem constant byte address 0x4 - core index']
  #allocation1 [shape = 'u32[144,128]{1,0:T(1,128)}', space=vmem, size = 0x12000, scoped, tag = 'internal scratch']
  #allocation2 [shape = 'f32[8,64]{1,0:T(8,128)}', space=vmem, size = 0x1000, scoped, tag = 'scratch operand']
  #allocation3 [shape = 'f32[8,64]{1,0:T(8,128)}', space=vmem, size = 0x1000, scoped, tag = 'scratch operand']
  #allocation4 [shape = 'f32[8,64]{1,0:T(8,128)}', space=vmem, size = 0x1000, scoped, tag = 'scratch operand']
  #allocation5 [shape = 'f32[8,64]{1,0:T(8,128)}', space=vmem, size = 0x1000, scoped, tag = 'scratch operand']
  %s0 = inlined_call_operand.hbm [shape: bf16[8,8,256], index: 0, kind: input, shape index: {}]
  %s1 = inlined_call_operand.hbm [shape: f32[64,256], index: 1, kind: input, shape index: {}]
  %s2 = inlined_call_operand.hbm [shape: f32[64,256], index: 2, kind: input, shape index: {}]
  %s3 = inlined_call_operand.hbm [shape: f32[64,256], index: 3, kind: input, shape index: {}]
  %s4 = inlined_call_operand.vmem [shape: f32[1,256], index: 4, kind: input, shape index: {}]
  %s5 = inlined_call_operand.hbm [shape: f32[8,64], index: 5, kind: output, shape index: {}]
  %s6 = sld [smem:[#allocation0]]
  $region54: #{tpu_custom_call.1} parent=0
    _
  %s8 = ssub.s32 1, %s6
  %s9 = scalar_select 0, %s8, %s6
  $region1: #{tpu_custom_call.1} parent=0
    #allocation6 [shape = 'u8[32768]{0}', space=vmem, size = 0x8000, scoped, tag = 'input window, operand 0, single buffered']
    #allocation7 [shape = 's32[1]{0}', space=sflag, size = 0x4, scoped, tag = 'scoped memory for tpu_custom_call.1']
    #allocation8 [shape = 's32[1]{0}', space=sflag, size = 0x4, scoped, tag = 'scoped memory for tpu_custom_call.1']
    #allocation9 [shape = 'u8[65536]{0}', space=vmem, size = 0x10000, scoped, tag = 'input window, operand 1, single buffered']
    #allocation10 [shape = 's32[1]{0}', space=sflag, size = 0x4, scoped, tag = 'scoped memory for tpu_custom_call.1']
    #allocation11 [shape = 'u8[65536]{0}', space=vmem, size = 0x10000, scoped, tag = 'input window, operand 2, single buffered']
    #allocation12 [shape = 'u8[65536]{0}', space=vmem, size = 0x10000, scoped, tag = 'input window, operand 3, single buffered']
    #allocation13 [shape = 's32[1]{0}', space=sflag, size = 0x4, scoped, tag = 'scoped memory for tpu_custom_call.1']
    #allocation14 [shape = 'u8[4096]{0}', space=vmem, size = 0x1000, scoped, tag = 'output window, operand 0, single buffered']
    %10 = vsyncpa [#allocation7], 0
    %11 = vsyncpa [#allocation10], 0
    %12 = vsyncpa [#allocation13], 0
    %13 = vsyncpa [#allocation8], 0
    // Predicated region
    $region2: #{tpu_custom_call.1} parent=1 // pred_check
      _
    $region3: #{tpu_custom_call.1} parent=1 // pred_check_branch
      %15 = sbr.rel (0) target = $region5
    $region4: #{tpu_custom_call.1} parent=1 // pred_region
      %s17 = ssub.s32 1024, 1024
      %18 = vsyncadd [#allocation7], %s17
      %s19 = sshll.u32 [#allocation6], 4
      %s20 = int_to_ptr.vmem [resolvable:$true] %s19
      %25 = dma.hbm_to_vmem [thread:$0]  %s0, 1024, %s20, [#allocation7], 128, 128, 8
    $region5: #{tpu_custom_call.1} parent=1 // pred_fallthru
      _
    // Predicated region
    $region6: #{tpu_custom_call.1} parent=1 // pred_check
      _
    $region7: #{tpu_custom_call.1} parent=1 // pred_check_branch
      %27 = sbr.rel (0) target = $region9
    $region8: #{tpu_custom_call.1} parent=1 // pred_region
      %s29 = ssub.s32 2048, 2048
      %30 = vsyncadd [#allocation10], %s29
      %s31 = sshll.u32 [#allocation9], 4
      %s32 = int_to_ptr.vmem [resolvable:$true] %s31
      %37 = dma.hbm_to_vmem [thread:$0]  %s1, 2048, %s32, [#allocation10], 256, 256, 16
    $region9: #{tpu_custom_call.1} parent=1 // pred_fallthru
      _
    // Predicated region
    $region10: #{tpu_custom_call.1} parent=1 // pred_check
      _
    $region11: #{tpu_custom_call.1} parent=1 // pred_check_branch
      %39 = sbr.rel (0) target = $region13
    $region12: #{tpu_custom_call.1} parent=1 // pred_region
      %s41 = ssub.s32 2048, 2048
      %42 = vsyncadd [#allocation10], %s41
      %s43 = sshll.u32 [#allocation11], 4
      %s44 = int_to_ptr.vmem [resolvable:$true] %s43
      %49 = dma.hbm_to_vmem [thread:$0]  %s2, 2048, %s44, [#allocation10], 256, 256, 16
    $region13: #{tpu_custom_call.1} parent=1 // pred_fallthru
      _
    // Predicated region
    $region14: #{tpu_custom_call.1} parent=1 // pred_check
      _
    $region15: #{tpu_custom_call.1} parent=1 // pred_check_branch
      %51 = sbr.rel (0) target = $region17
    $region16: #{tpu_custom_call.1} parent=1 // pred_region
      %s53 = ssub.s32 2048, 2048
      %54 = vsyncadd [#allocation13], %s53
      %s55 = sshll.u32 [#allocation12], 4
      %s56 = int_to_ptr.vmem [resolvable:$true] %s55
      %61 = dma.hbm_to_vmem [thread:$0]  %s3, 2048, %s56, [#allocation13], 256, 256, 16
    $region17: #{tpu_custom_call.1} parent=1 // pred_fallthru
      _
    // Predicated region
    $region18: #{tpu_custom_call.1} parent=1 // pred_check
      _
    $region19: #{tpu_custom_call.1} parent=1 // pred_check_branch
      %63 = sbr.rel (0) target = $region21
    $region20: #{tpu_custom_call.1} parent=1 // pred_region
      _
    $region21: #{tpu_custom_call.1} parent=1 // pred_fallthru
      _
    // Predicated region
    $region22: #{tpu_custom_call.1} parent=1 // pred_check
      _
    $region23: #{tpu_custom_call.1} parent=1 // pred_check_branch
      %65 = sbr.rel (0) target = $region25
    $region24: #{tpu_custom_call.1} parent=1 // pred_region
      %66 = dma.done [#allocation7], 1024
    $region25: #{tpu_custom_call.1} parent=1 // pred_fallthru
      _
    // Predicated region
    $region26: #{tpu_custom_call.1} parent=1 // pred_check
      _
    $region27: #{tpu_custom_call.1} parent=1 // pred_check_branch
      %68 = sbr.rel (0) target = $region29
    $region28: #{tpu_custom_call.1} parent=1 // pred_region
      %69 = dma.done [#allocation10], 2048
    $region29: #{tpu_custom_call.1} parent=1 // pred_fallthru
      _
    // Predicated region
    $region30: #{tpu_custom_call.1} parent=1 // pred_check
      _
    $region31: #{tpu_custom_call.1} parent=1 // pred_check_branch
      %71 = sbr.rel (0) target = $region33
    $region32: #{tpu_custom_call.1} parent=1 // pred_region
      %72 = dma.done [#allocation10], 2048
    $region33: #{tpu_custom_call.1} parent=1 // pred_fallthru
      _
    // Predicated region
    $region34: #{tpu_custom_call.1} parent=1 // pred_check
      _
    $region35: #{tpu_custom_call.1} parent=1 // pred_check_branch
      %74 = sbr.rel (0) target = $region37
    $region36: #{tpu_custom_call.1} parent=1 // pred_region
      %75 = dma.done [#allocation13], 2048
    $region37: #{tpu_custom_call.1} parent=1 // pred_fallthru
      _
    %p76 = scmp.eq.s32.totalorder 0, 0
    // Predicated region
    $region38: #{tpu_custom_call.1} parent=1 // pred_check
      %p77 = pneg %p76
    $region39: #{tpu_custom_call.1} parent=1 // pred_check_branch
      %79 = sbr.rel (%p77) target = $region41
    $region40: #{tpu_custom_call.1} parent=1 // pred_region
      %vm80 = vcmask 523264
      %81 = vst.msk [vmem:[#allocation2] sm:$0xff] %vm80, 0.0
      %82 = vst.msk [vmem:[#allocation3] sm:$0xff] %vm80, 0.0
      %83 = vst.msk [vmem:[#allocation4] sm:$0xff] %vm80, 0.0
      %84 = vst.msk [vmem:[#allocation5] sm:$0xff] %vm80, 0.0
    $region41: #{tpu_custom_call.1} parent=1 // pred_fallthru
      _
    %v85 = vld [vmem:[#allocation9] sm:$0xff]
    %v86 = vld [vmem:[#allocation9 + $0x8] sm:$0xff]
    %v87 = vld [vmem:[#allocation9 + $0x10] sm:$0xff]
    %v88 = vld [vmem:[#allocation9 + $0x18] sm:$0xff]
    %v89 = vld [vmem:[#allocation9 + $0x20] sm:$0xff]
    %v90 = vld [vmem:[#allocation9 + $0x28] sm:$0xff]
    %v91 = vld [vmem:[#allocation9 + $0x30] sm:$0xff]
    %v92 = vld [vmem:[#allocation9 + $0x38] sm:$0xff]
    %v93 = vld [vmem:[#allocation9 + $0x40] sm:$0xff]
    %v94 = vld [vmem:[#allocation9 + $0x48] sm:$0xff]
    %v95 = vld [vmem:[#allocation9 + $0x50] sm:$0xff]
    %v96 = vld [vmem:[#allocation9 + $0x58] sm:$0xff]
    %v97 = vld [vmem:[#allocation9 + $0x60] sm:$0xff]
    %v98 = vld [vmem:[#allocation9 + $0x68] sm:$0xff]
    %v99 = vld [vmem:[#allocation9 + $0x70] sm:$0xff]
    %v100 = vld [vmem:[#allocation9 + $0x78] sm:$0xff]
    %v101 = vld [vmem:[#allocation11] sm:$0xff]
    %v102 = vld [vmem:[#allocation11 + $0x8] sm:$0xff]
    %v103 = vld [vmem:[#allocation11 + $0x10] sm:$0xff]
    %v104 = vld [vmem:[#allocation11 + $0x18] sm:$0xff]
    %v105 = vld [vmem:[#allocation11 + $0x20] sm:$0xff]
    %v106 = vld [vmem:[#allocation11 + $0x28] sm:$0xff]
    %v107 = vld [vmem:[#allocation11 + $0x30] sm:$0xff]
    %v108 = vld [vmem:[#allocation11 + $0x38] sm:$0xff]
    %v109 = vld [vmem:[#allocation11 + $0x40] sm:$0xff]
    %v110 = vld [vmem:[#allocation11 + $0x48] sm:$0xff]
    %v111 = vld [vmem:[#allocation11 + $0x50] sm:$0xff]
    %v112 = vld [vmem:[#allocation11 + $0x58] sm:$0xff]
    %v113 = vld [vmem:[#allocation11 + $0x60] sm:$0xff]
    %v114 = vld [vmem:[#allocation11 + $0x68] sm:$0xff]
    %v115 = vld [vmem:[#allocation11 + $0x70] sm:$0xff]
    %v116 = vld [vmem:[#allocation11 + $0x78] sm:$0xff]
    %v117 = vld [vmem:[#allocation12] sm:$0xff]
    %v118 = vld [vmem:[#allocation12 + $0x8] sm:$0xff]
    %v119 = vld [vmem:[#allocation12 + $0x10] sm:$0xff]
    %v120 = vld [vmem:[#allocation12 + $0x18] sm:$0xff]
    %v121 = vld [vmem:[#allocation12 + $0x20] sm:$0xff]
    %v122 = vld [vmem:[#allocation12 + $0x28] sm:$0xff]
    %v123 = vld [vmem:[#allocation12 + $0x30] sm:$0xff]
    %v124 = vld [vmem:[#allocation12 + $0x38] sm:$0xff]
    %v125 = vld [vmem:[#allocation12 + $0x40] sm:$0xff]
    %v126 = vld [vmem:[#allocation12 + $0x48] sm:$0xff]
    %v127 = vld [vmem:[#allocation12 + $0x50] sm:$0xff]
    %v128 = vld [vmem:[#allocation12 + $0x58] sm:$0xff]
    %v129 = vld [vmem:[#allocation12 + $0x60] sm:$0xff]
    %v130 = vld [vmem:[#allocation12 + $0x68] sm:$0xff]
    %v131 = vld [vmem:[#allocation12 + $0x70] sm:$0xff]
    %v132 = vld [vmem:[#allocation12 + $0x78] sm:$0xff]
    %v133 = vld [vmem:[%s4] sm:$0x3]
    %v135 = vlaneseq
    %v136 = vshrl.u32 %v135, 7
    %v137 = vsub.s32 0, %v136
    %v138 = vrot.slane %v133, %v137
    %v139 = vlaneseq
    %v140 = vshrl.u32 %v139, 7
    %v141 = vsub.s32 1, %v140
    %v142 = vrot.slane %v133, %v141
    %v145 = vld [vmem:[#allocation2] sm:$0xff]
    %v146 = vld [vmem:[#allocation3] sm:$0xff]
    %v147 = vld [vmem:[#allocation4] sm:$0xff]
    %v148 = vld [vmem:[#allocation5] sm:$0xff]
    %vm149 = vcmask 523264
    %v151 = vsel %vm149, %v147, 0
    %153 = vmatprep.subr.mxu0 %v118
    %154 = vmatpush1.msra.mxu0 %v117
    %155 = vmatprep.subr.mxu0 %v120
    %156 = vmatpush1.msra.mxu0 %v119
    %157 = vmatprep.subr.mxu0 %v122
    %158 = vmatpush1.msra.mxu0 %v121
    %159 = vmatprep.subr.mxu0 %v124
    %160 = vmatpush1.msra.mxu0 %v123
    %161 = vmatprep.subr.mxu0 %v126
    %162 = vmatpush1.msra.mxu0 %v125
    %163 = vmatprep.subr.mxu0 %v128
    %164 = vmatpush1.msra.mxu0 %v127
    %165 = vmatprep.subr.mxu0 %v130
    %166 = vmatpush1.msra.mxu0 %v129
    %167 = vmatprep.subr.mxu0 %v132
    %168 = vmatpush1.msra.mxu0 %v131
    %169 = vmatprep.subr.mxu0 0.0
    %170 = vmatpush1.msra.mxu0 0.0
    %171 = vmatprep.subr.mxu0 0.0
    %172 = vmatpush1.msra.mxu0 0.0
    %173 = vmatprep.subr.mxu0 0.0
    %174 = vmatpush1.msra.mxu0 0.0
    %175 = vmatprep.subr.mxu0 0.0
    %176 = vmatpush1.msra.mxu0 0.0
    %177 = vmatprep.subr.mxu0 0.0
    %178 = vmatpush1.msra.mxu0 0.0
    %179 = vmatprep.subr.mxu0 0.0
    %180 = vmatpush1.msra.mxu0 0.0
    %181 = vmatprep.subr.mxu0 0.0
    %182 = vmatpush1.msra.mxu0 0.0
    %183 = vmatprep.subr.mxu0 0.0
    %184 = vmatpush1.msra.mxu0 0.0
    %185 = vmatprep.subr.mxu0 0.0
    %186 = vmatpush1.msra.mxu0 0.0
    %187 = vmatprep.subr.mxu0 0.0
    %188 = vmatpush1.msra.mxu0 0.0
    %189 = vmatprep.subr.mxu0 0.0
    %190 = vmatpush1.msra.mxu0 0.0
    %191 = vmatprep.subr.mxu0 0.0
    %192 = vmatpush1.msra.mxu0 0.0
    %193 = vmatprep.subr.mxu0 0.0
    %194 = vmatpush1.msra.mxu0 0.0
    %195 = vmatprep.subr.mxu0 0.0
    %196 = vmatpush1.msra.mxu0 0.0
    %197 = vmatprep.subr.mxu0 0.0
    %198 = vmatpush1.msra.mxu0 0.0
    %199 = vmatprep.subr.mxu0 0.0
    %200 = vmatpush1.msra.mxu0 0.0
    %201 = vmatprep.subr.mxu0 0.0
    %202 = vmatpush1.msra.mxu0 0.0
    %203 = vmatprep.subr.mxu0 0.0
    %204 = vmatpush1.msra.mxu0 0.0
    %205 = vmatprep.subr.mxu0 0.0
    %206 = vmatpush1.msra.mxu0 0.0
    %207 = vmatprep.subr.mxu0 0.0
    %208 = vmatpush1.msra.mxu0 0.0
    %209 = vmatprep.subr.mxu0 0.0
    %210 = vmatpush1.msra.mxu0 0.0
    %211 = vmatprep.subr.mxu0 0.0
    %212 = vmatpush1.msra.mxu0 0.0
    %213 = vmatprep.subr.mxu0 0.0
    %214 = vmatpush1.msra.mxu0 0.0
    %215 = vmatprep.subr.mxu0 0.0
    %216 = vmatpush1.msra.mxu0 0.0
    %217 = vmatprep.mubr.f32.mxu0 0.0
    %218 = vmatmul.mubr.f32.gmra.mrb[0].mxu0 %v151
    %v219 = vpop.f32.mrb[0].mxu0
    %v220 = vadd.f32 %v138, %v219
    %v221 = vpop.f32.mrb[0].mxu0
    %v222 = vadd.f32 %v142, %v221
    %223 = vdwg.mxu0
    %v224 = vld [vmem:[#allocation6] sm:$0xff]
    %v225 = vunpack.c.l.bf16 %v224
    %v226 = vunpack.c.h.bf16 %v224
    %v228 = vsel %vm149, %v145, 0
    %230 = vmatprep.subr.mxu0 %v86
    %231 = vmatpush1.msra.mxu0 %v85
    %232 = vmatprep.subr.mxu0 %v88
    %233 = vmatpush1.msra.mxu0 %v87
    %234 = vmatprep.subr.mxu0 %v90
    %235 = vmatpush1.msra.mxu0 %v89
    %236 = vmatprep.subr.mxu0 %v92
    %237 = vmatpush1.msra.mxu0 %v91
    %238 = vmatprep.subr.mxu0 %v94
    %239 = vmatpush1.msra.mxu0 %v93
    %240 = vmatprep.subr.mxu0 %v96
    %241 = vmatpush1.msra.mxu0 %v95
    %242 = vmatprep.subr.mxu0 %v98
    %243 = vmatpush1.msra.mxu0 %v97
    %244 = vmatprep.subr.mxu0 %v100
    %245 = vmatpush1.msra.mxu0 %v99
    %246 = vmatprep.subr.mxu0 0.0
    %247 = vmatpush1.msra.mxu0 0.0
    %248 = vmatprep.subr.mxu0 0.0
    %249 = vmatpush1.msra.mxu0 0.0
    %250 = vmatprep.subr.mxu0 0.0
    %251 = vmatpush1.msra.mxu0 0.0
    %252 = vmatprep.subr.mxu0 0.0
    %253 = vmatpush1.msra.mxu0 0.0
    %254 = vmatprep.subr.mxu0 0.0
    %255 = vmatpush1.msra.mxu0 0.0
    %256 = vmatprep.subr.mxu0 0.0
    %257 = vmatpush1.msra.mxu0 0.0
    %258 = vmatprep.subr.mxu0 0.0
    %259 = vmatpush1.msra.mxu0 0.0
    %260 = vmatprep.subr.mxu0 0.0
    %261 = vmatpush1.msra.mxu0 0.0
    %262 = vmatprep.subr.mxu0 0.0
    %263 = vmatpush1.msra.mxu0 0.0
    %264 = vmatprep.subr.mxu0 0.0
    %265 = vmatpush1.msra.mxu0 0.0
    %266 = vmatprep.subr.mxu0 0.0
    %267 = vmatpush1.msra.mxu0 0.0
    %268 = vmatprep.subr.mxu0 0.0
    %269 = vmatpush1.msra.mxu0 0.0
    %270 = vmatprep.subr.mxu0 0.0
    %271 = vmatpush1.msra.mxu0 0.0
    %272 = vmatprep.subr.mxu0 0.0
    %273 = vmatpush1.msra.mxu0 0.0
    %274 = vmatprep.subr.mxu0 0.0
    %275 = vmatpush1.msra.mxu0 0.0
    %276 = vmatprep.subr.mxu0 0.0
    %277 = vmatpush1.msra.mxu0 0.0
    %278 = vmatprep.subr.mxu0 0.0
    %279 = vmatpush1.msra.mxu0 0.0
    %280 = vmatprep.subr.mxu0 0.0
    %281 = vmatpush1.msra.mxu0 0.0
    %282 = vmatprep.subr.mxu0 0.0
    %283 = vmatpush1.msra.mxu0 0.0
    %284 = vmatprep.subr.mxu0 0.0
    %285 = vmatpush1.msra.mxu0 0.0
    %286 = vmatprep.subr.mxu0 0.0
    %287 = vmatpush1.msra.mxu0 0.0
    %288 = vmatprep.subr.mxu0 0.0
    %289 = vmatpush1.msra.mxu0 0.0
    %290 = vmatprep.subr.mxu0 0.0
    %291 = vmatpush1.msra.mxu0 0.0
    %292 = vmatprep.subr.mxu0 0.0
    %293 = vmatpush1.msra.mxu0 0.0
    %294 = vmatprep.mubr.f32.mxu0 0.0
    %295 = vmatmul.mubr.f32.gmra.mrb[0].mxu0 %v228
    %v296 = vpop.f32.mrb[0].mxu0
    %v297 = vadd.f32 0.0, %v296
    %v298 = vpop.f32.mrb[0].mxu0
    %v299 = vadd.f32 0.0, %v298
    %300 = vdwg.mxu0
    %v301 = vadd.f32 %v225, %v297
    %v302 = vadd.f32 %v226, %v299
    %v303 = vxor.u32 %v301, 2147483648
    %v304 = vxor.u32 %v302, 2147483648
    %v305 = vmul.f32 %v303, 1.442695
    %v306 = vpow.pop %v305
    %v307 = vmul.f32 %v304, 1.442695
    %v308 = vpow.pop %v307
    %v309 = vadd.f32 %v306, 1.0
    %v310 = vadd.f32 %v308, 1.0
    %v311 = vrcp.pop %v309
    %v312 = vmul.f32 1.0, %v311
    %v313 = vrcp.pop %v310
    %v314 = vmul.f32 1.0, %v313
    %v315 = vtanh.pop %v302
    %317 = vrot.lane.b32.xlu0 %v146, 64
    %v318 = vpop.permute.xlu0 %317
    %v320 = vmul.f32 %v312, %v318
    %322 = vrot.lane.b32.xlu0 %v315, 64
    %v323 = vpop.permute.xlu0 %322
    %v325 = vmul.f32 %v312, %v323
    %327 = vrot.lane.b32.xlu0 %v325, 64
    %v328 = vpop.permute.xlu0 %327
    %v330 = vadd.f32 %v320, %v328
    %v331 = vtanh.pop %v330
    %333 = vrot.lane.b32.xlu0 %v331, 64
    %v334 = vpop.permute.xlu0 %333
    %v336 = vmul.f32 %v314, %v334
    %v338 = vsel %vm149, %v336, 0
    %340 = vmatprep.subr.mxu0 %v102
    %341 = vmatpush1.msra.mxu0 %v101
    %342 = vmatprep.subr.mxu0 %v104
    %343 = vmatpush1.msra.mxu0 %v103
    %344 = vmatprep.subr.mxu0 %v106
    %345 = vmatpush1.msra.mxu0 %v105
    %346 = vmatprep.subr.mxu0 %v108
    %347 = vmatpush1.msra.mxu0 %v107
    %348 = vmatprep.subr.mxu0 %v110
    %349 = vmatpush1.msra.mxu0 %v109
    %350 = vmatprep.subr.mxu0 %v112
    %351 = vmatpush1.msra.mxu0 %v111
    %352 = vmatprep.subr.mxu0 %v114
    %353 = vmatpush1.msra.mxu0 %v113
    %354 = vmatprep.subr.mxu0 %v116
    %355 = vmatpush1.msra.mxu0 %v115
    %356 = vmatprep.subr.mxu0 0.0
    %357 = vmatpush1.msra.mxu0 0.0
    %358 = vmatprep.subr.mxu0 0.0
    %359 = vmatpush1.msra.mxu0 0.0
    %360 = vmatprep.subr.mxu0 0.0
    %361 = vmatpush1.msra.mxu0 0.0
    %362 = vmatprep.subr.mxu0 0.0
    %363 = vmatpush1.msra.mxu0 0.0
    %364 = vmatprep.subr.mxu0 0.0
    %365 = vmatpush1.msra.mxu0 0.0
    %366 = vmatprep.subr.mxu0 0.0
    %367 = vmatpush1.msra.mxu0 0.0
    %368 = vmatprep.subr.mxu0 0.0
    %369 = vmatpush1.msra.mxu0 0.0
    %370 = vmatprep.subr.mxu0 0.0
    %371 = vmatpush1.msra.mxu0 0.0
    %372 = vmatprep.subr.mxu0 0.0
    %373 = vmatpush1.msra.mxu0 0.0
    %374 = vmatprep.subr.mxu0 0.0
    %375 = vmatpush1.msra.mxu0 0.0
    %376 = vmatprep.subr.mxu0 0.0
    %377 = vmatpush1.msra.mxu0 0.0
    %378 = vmatprep.subr.mxu0 0.0
    %379 = vmatpush1.msra.mxu0 0.0
    %380 = vmatprep.subr.mxu0 0.0
    %381 = vmatpush1.msra.mxu0 0.0
    %382 = vmatprep.subr.mxu0 0.0
    %383 = vmatpush1.msra.mxu0 0.0
    %384 = vmatprep.subr.mxu0 0.0
    %385 = vmatpush1.msra.mxu0 0.0
    %386 = vmatprep.subr.mxu0 0.0
    %387 = vmatpush1.msra.mxu0 0.0
    %388 = vmatprep.subr.mxu0 0.0
    %389 = vmatpush1.msra.mxu0 0.0
    %390 = vmatprep.subr.mxu0 0.0
    %391 = vmatpush1.msra.mxu0 0.0
    %392 = vmatprep.subr.mxu0 0.0
    %393 = vmatpush1.msra.mxu0 0.0
    %394 = vmatprep.subr.mxu0 0.0
    %395 = vmatpush1.msra.mxu0 0.0
    %396 = vmatprep.subr.mxu0 0.0
    %397 = vmatpush1.msra.mxu0 0.0
    %398 = vmatprep.subr.mxu0 0.0
    %399 = vmatpush1.msra.mxu0 0.0
    %400 = vmatprep.subr.mxu0 0.0
    %401 = vmatpush1.msra.mxu0 0.0
    %402 = vmatprep.subr.mxu0 0.0
    %403 = vmatpush1.msra.mxu0 0.0
    %404 = vmatprep.mubr.f32.mxu0 0.0
    %405 = vmatmul.mubr.f32.gmra.mrb[0].mxu0 %v338
    %v406 = vpop.f32.mrb[0].mxu0
    %v407 = vadd.f32 0.0, %v406
    %v408 = vpop.f32.mrb[0].mxu0
    %v409 = vadd.f32 0.0, %v408
    %410 = vdwg.mxu0
    %v411 = vadd.f32 %v220, %v407
    %v412 = vadd.f32 %v222, %v409
    %v413 = vxor.u32 %v411, 2147483648
    %v414 = vxor.u32 %v412, 2147483648
    %v415 = vmul.f32 %v413, 1.442695
    %v416 = vpow.pop %v415
    %v417 = vmul.f32 %v414, 1.442695
    %v418 = vpow.pop %v417
    %v419 = vadd.f32 %v416, 1.0
    %v420 = vadd.f32 %v418, 1.0
    %v421 = vrcp.pop %v419
    %v422 = vmul.f32 1.0, %v421
    %v423 = vrcp.pop %v420
    %v424 = vmul.f32 1.0, %v423
    %v425 = vtanh.pop %v412
    %427 = vrot.lane.b32.xlu0 %v148, 64
    %v428 = vpop.permute.xlu0 %427
    %v430 = vmul.f32 %v422, %v428
    %432 = vrot.lane.b32.xlu0 %v425, 64
    %v433 = vpop.permute.xlu0 %432
    %v435 = vmul.f32 %v422, %v433
    %437 = vrot.lane.b32.xlu0 %v435, 64
    %v438 = vpop.permute.xlu0 %437
    %v440 = vadd.f32 %v430, %v438
    %v441 = vtanh.pop %v440
    %443 = vrot.lane.b32.xlu0 %v441, 64
    %v444 = vpop.permute.xlu0 %443
    %v446 = vmul.f32 %v424, %v444
    %v448 = vsel %vm149, %v446, 0
    %450 = vmatprep.subr.mxu0 %v118
    %451 = vmatpush1.msra.mxu0 %v117
    %452 = vmatprep.subr.mxu0 %v120
    %453 = vmatpush1.msra.mxu0 %v119
    %454 = vmatprep.subr.mxu0 %v122
    %455 = vmatpush1.msra.mxu0 %v121
    %456 = vmatprep.subr.mxu0 %v124
    %457 = vmatpush1.msra.mxu0 %v123
    %458 = vmatprep.subr.mxu0 %v126
    %459 = vmatpush1.msra.mxu0 %v125
    %460 = vmatprep.subr.mxu0 %v128
    %461 = vmatpush1.msra.mxu0 %v127
    %462 = vmatprep.subr.mxu0 %v130
    %463 = vmatpush1.msra.mxu0 %v129
    %464 = vmatprep.subr.mxu0 %v132
    %465 = vmatpush1.msra.mxu0 %v131
    %466 = vmatprep.subr.mxu0 0.0
    %467 = vmatpush1.msra.mxu0 0.0
    %468 = vmatprep.subr.mxu0 0.0
    %469 = vmatpush1.msra.mxu0 0.0
    %470 = vmatprep.subr.mxu0 0.0
    %471 = vmatpush1.msra.mxu0 0.0
    %472 = vmatprep.subr.mxu0 0.0
    %473 = vmatpush1.msra.mxu0 0.0
    %474 = vmatprep.subr.mxu0 0.0
    %475 = vmatpush1.msra.mxu0 0.0
    %476 = vmatprep.subr.mxu0 0.0
    %477 = vmatpush1.msra.mxu0 0.0
    %478 = vmatprep.subr.mxu0 0.0
    %479 = vmatpush1.msra.mxu0 0.0
    %480 = vmatprep.subr.mxu0 0.0
    %481 = vmatpush1.msra.mxu0 0.0
    %482 = vmatprep.subr.mxu0 0.0
    %483 = vmatpush1.msra.mxu0 0.0
    %484 = vmatprep.subr.mxu0 0.0
    %485 = vmatpush1.msra.mxu0 0.0
    %486 = vmatprep.subr.mxu0 0.0
    %487 = vmatpush1.msra.mxu0 0.0
    %488 = vmatprep.subr.mxu0 0.0
    %489 = vmatpush1.msra.mxu0 0.0
    %490 = vmatprep.subr.mxu0 0.0
    %491 = vmatpush1.msra.mxu0 0.0
    %492 = vmatprep.subr.mxu0 0.0
    %493 = vmatpush1.msra.mxu0 0.0
    %494 = vmatprep.subr.mxu0 0.0
    %495 = vmatpush1.msra.mxu0 0.0
    %496 = vmatprep.subr.mxu0 0.0
    %497 = vmatpush1.msra.mxu0 0.0
    %498 = vmatprep.subr.mxu0 0.0
    %499 = vmatpush1.msra.mxu0 0.0
    %500 = vmatprep.subr.mxu0 0.0
    %501 = vmatpush1.msra.mxu0 0.0
    %502 = vmatprep.subr.mxu0 0.0
    %503 = vmatpush1.msra.mxu0 0.0
    %504 = vmatprep.subr.mxu0 0.0
    %505 = vmatpush1.msra.mxu0 0.0
    %506 = vmatprep.subr.mxu0 0.0
    %507 = vmatpush1.msra.mxu0 0.0
    %508 = vmatprep.subr.mxu0 0.0
    %509 = vmatpush1.msra.mxu0 0.0
    %510 = vmatprep.subr.mxu0 0.0
    %511 = vmatpush1.msra.mxu0 0.0
    %512 = vmatprep.subr.mxu0 0.0
    %513 = vmatpush1.msra.mxu0 0.0
    %514 = vmatprep.mubr.f32.mxu0 0.0
    %515 = vmatmul.mubr.f32.gmra.mrb[0].mxu0 %v448
    %v516 = vpop.f32.mrb[0].mxu0
    %v517 = vadd.f32 %v138, %v516
    %v518 = vpop.f32.mrb[0].mxu0
    %v519 = vadd.f32 %v142, %v518
    %520 = vdwg.mxu0
    %s521 = scalar_lea.vmem [#allocation6], 8
    %v522 = vld [vmem:[%s521] sm:$0xff]
    %v523 = vunpack.c.l.bf16 %v522
    %v524 = vunpack.c.h.bf16 %v522
    %525 = vmatprep.subr.mxu0 %v86
    %526 = vmatpush1.msra.mxu0 %v85
    %527 = vmatprep.subr.mxu0 %v88
    %528 = vmatpush1.msra.mxu0 %v87
    %529 = vmatprep.subr.mxu0 %v90
    %530 = vmatpush1.msra.mxu0 %v89
    %531 = vmatprep.subr.mxu0 %v92
    %532 = vmatpush1.msra.mxu0 %v91
    %533 = vmatprep.subr.mxu0 %v94
    %534 = vmatpush1.msra.mxu0 %v93
    %535 = vmatprep.subr.mxu0 %v96
    %536 = vmatpush1.msra.mxu0 %v95
    %537 = vmatprep.subr.mxu0 %v98
    %538 = vmatpush1.msra.mxu0 %v97
    %539 = vmatprep.subr.mxu0 %v100
    %540 = vmatpush1.msra.mxu0 %v99
    %541 = vmatprep.subr.mxu0 0.0
    %542 = vmatpush1.msra.mxu0 0.0
    %543 = vmatprep.subr.mxu0 0.0
    %544 = vmatpush1.msra.mxu0 0.0
    %545 = vmatprep.subr.mxu0 0.0
    %546 = vmatpush1.msra.mxu0 0.0
    %547 = vmatprep.subr.mxu0 0.0
    %548 = vmatpush1.msra.mxu0 0.0
    %549 = vmatprep.subr.mxu0 0.0
    %550 = vmatpush1.msra.mxu0 0.0
    %551 = vmatprep.subr.mxu0 0.0
    %552 = vmatpush1.msra.mxu0 0.0
    %553 = vmatprep.subr.mxu0 0.0
    %554 = vmatpush1.msra.mxu0 0.0
    %555 = vmatprep.subr.mxu0 0.0
    %556 = vmatpush1.msra.mxu0 0.0
    %557 = vmatprep.subr.mxu0 0.0
    %558 = vmatpush1.msra.mxu0 0.0
    %559 = vmatprep.subr.mxu0 0.0
    %560 = vmatpush1.msra.mxu0 0.0
    %561 = vmatprep.subr.mxu0 0.0
    %562 = vmatpush1.msra.mxu0 0.0
    %563 = vmatprep.subr.mxu0 0.0
    %564 = vmatpush1.msra.mxu0 0.0
    %565 = vmatprep.subr.mxu0 0.0
    %566 = vmatpush1.msra.mxu0 0.0
    %567 = vmatprep.subr.mxu0 0.0
    %568 = vmatpush1.msra.mxu0 0.0
    %569 = vmatprep.subr.mxu0 0.0
    %570 = vmatpush1.msra.mxu0 0.0
    %571 = vmatprep.subr.mxu0 0.0
    %572 = vmatpush1.msra.mxu0 0.0
    %573 = vmatprep.subr.mxu0 0.0
    %574 = vmatpush1.msra.mxu0 0.0
    %575 = vmatprep.subr.mxu0 0.0
    %576 = vmatpush1.msra.mxu0 0.0
    %577 = vmatprep.subr.mxu0 0.0
    %578 = vmatpush1.msra.mxu0 0.0
    %579 = vmatprep.subr.mxu0 0.0
    %580 = vmatpush1.msra.mxu0 0.0
    %581 = vmatprep.subr.mxu0 0.0
    %582 = vmatpush1.msra.mxu0 0.0
    %583 = vmatprep.subr.mxu0 0.0
    %584 = vmatpush1.msra.mxu0 0.0
    %585 = vmatprep.subr.mxu0 0.0
    %586 = vmatpush1.msra.mxu0 0.0
    %587 = vmatprep.subr.mxu0 0.0
    %588 = vmatpush1.msra.mxu0 0.0
    %589 = vmatprep.mubr.f32.mxu0 0.0
    %590 = vmatmul.mubr.f32.gmra.mrb[0].mxu0 %v338
    %v591 = vpop.f32.mrb[0].mxu0
    %v592 = vadd.f32 0.0, %v591
    %v593 = vpop.f32.mrb[0].mxu0
    %v594 = vadd.f32 0.0, %v593
    %595 = vdwg.mxu0
    %v596 = vadd.f32 %v523, %v592
    %v597 = vadd.f32 %v524, %v594
    %v598 = vxor.u32 %v596, 2147483648
    %v599 = vxor.u32 %v597, 2147483648
    %v600 = vmul.f32 %v598, 1.442695
    %v601 = vpow.pop %v600
    %v602 = vmul.f32 %v599, 1.442695
    %v603 = vpow.pop %v602
    %v604 = vadd.f32 %v601, 1.0
    %v605 = vadd.f32 %v603, 1.0
    %v606 = vrcp.pop %v604
    %v607 = vmul.f32 1.0, %v606
    %v608 = vrcp.pop %v605
    %v609 = vmul.f32 1.0, %v608
    %v610 = vtanh.pop %v597
    %v611 = vmul.f32 %v607, %v330
    %613 = vrot.lane.b32.xlu0 %v610, 64
    %v614 = vpop.permute.xlu0 %613
    %v616 = vmul.f32 %v607, %v614
    %618 = vrot.lane.b32.xlu0 %v616, 64
    %v619 = vpop.permute.xlu0 %618
    %v621 = vadd.f32 %v611, %v619
    %v622 = vtanh.pop %v621
    %624 = vrot.lane.b32.xlu0 %v622, 64
    %v625 = vpop.permute.xlu0 %624
    %v627 = vmul.f32 %v609, %v625
    %v629 = vsel %vm149, %v627, 0
    %631 = vmatprep.subr.mxu0 %v102
    %632 = vmatpush1.msra.mxu0 %v101
    %633 = vmatprep.subr.mxu0 %v104
    %634 = vmatpush1.msra.mxu0 %v103
    %635 = vmatprep.subr.mxu0 %v106
    %636 = vmatpush1.msra.mxu0 %v105
    %637 = vmatprep.subr.mxu0 %v108
    %638 = vmatpush1.msra.mxu0 %v107
    %639 = vmatprep.subr.mxu0 %v110
    %640 = vmatpush1.msra.mxu0 %v109
    %641 = vmatprep.subr.mxu0 %v112
    %642 = vmatpush1.msra.mxu0 %v111
    %643 = vmatprep.subr.mxu0 %v114
    %644 = vmatpush1.msra.mxu0 %v113
    %645 = vmatprep.subr.mxu0 %v116
    %646 = vmatpush1.msra.mxu0 %v115
    %647 = vmatprep.subr.mxu0 0.0
    %648 = vmatpush1.msra.mxu0 0.0
    %649 = vmatprep.subr.mxu0 0.0
    %650 = vmatpush1.msra.mxu0 0.0
    %651 = vmatprep.subr.mxu0 0.0
    %652 = vmatpush1.msra.mxu0 0.0
    %653 = vmatprep.subr.mxu0 0.0
    %654 = vmatpush1.msra.mxu0 0.0
    %655 = vmatprep.subr.mxu0 0.0
    %656 = vmatpush1.msra.mxu0 0.0
    %657 = vmatprep.subr.mxu0 0.0
    %658 = vmatpush1.msra.mxu0 0.0
    %659 = vmatprep.subr.mxu0 0.0
    %660 = vmatpush1.msra.mxu0 0.0
    %661 = vmatprep.subr.mxu0 0.0
    %662 = vmatpush1.msra.mxu0 0.0
    %663 = vmatprep.subr.mxu0 0.0
    %664 = vmatpush1.msra.mxu0 0.0
    %665 = vmatprep.subr.mxu0 0.0
    %666 = vmatpush1.msra.mxu0 0.0
    %667 = vmatprep.subr.mxu0 0.0
    %668 = vmatpush1.msra.mxu0 0.0
    %669 = vmatprep.subr.mxu0 0.0
    %670 = vmatpush1.msra.mxu0 0.0
    %671 = vmatprep.subr.mxu0 0.0
    %672 = vmatpush1.msra.mxu0 0.0
    %673 = vmatprep.subr.mxu0 0.0
    %674 = vmatpush1.msra.mxu0 0.0
    %675 = vmatprep.subr.mxu0 0.0
    %676 = vmatpush1.msra.mxu0 0.0
    %677 = vmatprep.subr.mxu0 0.0
    %678 = vmatpush1.msra.mxu0 0.0
    %679 = vmatprep.subr.mxu0 0.0
    %680 = vmatpush1.msra.mxu0 0.0
    %681 = vmatprep.subr.mxu0 0.0
    %682 = vmatpush1.msra.mxu0 0.0
    %683 = vmatprep.subr.mxu0 0.0
    %684 = vmatpush1.msra.mxu0 0.0
    %685 = vmatprep.subr.mxu0 0.0
    %686 = vmatpush1.msra.mxu0 0.0
    %687 = vmatprep.subr.mxu0 0.0
    %688 = vmatpush1.msra.mxu0 0.0
    %689 = vmatprep.subr.mxu0 0.0
    %690 = vmatpush1.msra.mxu0 0.0
    %691 = vmatprep.subr.mxu0 0.0
    %692 = vmatpush1.msra.mxu0 0.0
    %693 = vmatprep.subr.mxu0 0.0
    %694 = vmatpush1.msra.mxu0 0.0
    %695 = vmatprep.mubr.f32.mxu0 0.0
    %696 = vmatmul.mubr.f32.gmra.mrb[0].mxu0 %v629
    %v697 = vpop.f32.mrb[0].mxu0
    %v698 = vadd.f32 0.0, %v697
    %v699 = vpop.f32.mrb[0].mxu0
    %v700 = vadd.f32 0.0, %v699
    %701 = vdwg.mxu0
    %v702 = vadd.f32 %v517, %v698
    %v703 = vadd.f32 %v519, %v700
    %v704 = vxor.u32 %v702, 2147483648
    %v705 = vxor.u32 %v703, 2147483648
    %v706 = vmul.f32 %v704, 1.442695
    %v707 = vpow.pop %v706
    %v708 = vmul.f32 %v705, 1.442695
    %v709 = vpow.pop %v708
    %v710 = vadd.f32 %v707, 1.0
    %v711 = vadd.f32 %v709, 1.0
    %v712 = vrcp.pop %v710
    %v713 = vmul.f32 1.0, %v712
    %v714 = vrcp.pop %v711
    %v715 = vmul.f32 1.0, %v714
    %v716 = vtanh.pop %v703
    %v717 = vmul.f32 %v713, %v440
    %719 = vrot.lane.b32.xlu0 %v716, 64
    %v720 = vpop.permute.xlu0 %719
    %v722 = vmul.f32 %v713, %v720
    %724 = vrot.lane.b32.xlu0 %v722, 64
    %v725 = vpop.permute.xlu0 %724
    %v727 = vadd.f32 %v717, %v725
    %v728 = vtanh.pop %v727
    %730 = vrot.lane.b32.xlu0 %v728, 64
    %v731 = vpop.permute.xlu0 %730
    %v733 = vmul.f32 %v715, %v731
    %v735 = vsel %vm149, %v733, 0
    %737 = vmatprep.subr.mxu0 %v118
    %738 = vmatpush1.msra.mxu0 %v117
    %739 = vmatprep.subr.mxu0 %v120
    %740 = vmatpush1.msra.mxu0 %v119
    %741 = vmatprep.subr.mxu0 %v122
    %742 = vmatpush1.msra.mxu0 %v121
    %743 = vmatprep.subr.mxu0 %v124
    %744 = vmatpush1.msra.mxu0 %v123
    %745 = vmatprep.subr.mxu0 %v126
    %746 = vmatpush1.msra.mxu0 %v125
    %747 = vmatprep.subr.mxu0 %v128
    %748 = vmatpush1.msra.mxu0 %v127
    %749 = vmatprep.subr.mxu0 %v130
    %750 = vmatpush1.msra.mxu0 %v129
    %751 = vmatprep.subr.mxu0 %v132
    %752 = vmatpush1.msra.mxu0 %v131
    %753 = vmatprep.subr.mxu0 0.0
    %754 = vmatpush1.msra.mxu0 0.0
    %755 = vmatprep.subr.mxu0 0.0
    %756 = vmatpush1.msra.mxu0 0.0
    %757 = vmatprep.subr.mxu0 0.0
    %758 = vmatpush1.msra.mxu0 0.0
    %759 = vmatprep.subr.mxu0 0.0
    %760 = vmatpush1.msra.mxu0 0.0
    %761 = vmatprep.subr.mxu0 0.0
    %762 = vmatpush1.msra.mxu0 0.0
    %763 = vmatprep.subr.mxu0 0.0
    %764 = vmatpush1.msra.mxu0 0.0
    %765 = vmatprep.subr.mxu0 0.0
    %766 = vmatpush1.msra.mxu0 0.0
    %767 = vmatprep.subr.mxu0 0.0
    %768 = vmatpush1.msra.mxu0 0.0
    %769 = vmatprep.subr.mxu0 0.0
    %770 = vmatpush1.msra.mxu0 0.0
    %771 = vmatprep.subr.mxu0 0.0
    %772 = vmatpush1.msra.mxu0 0.0
    %773 = vmatprep.subr.mxu0 0.0
    %774 = vmatpush1.msra.mxu0 0.0
    %775 = vmatprep.subr.mxu0 0.0
    %776 = vmatpush1.msra.mxu0 0.0
    %777 = vmatprep.subr.mxu0 0.0
    %778 = vmatpush1.msra.mxu0 0.0
    %779 = vmatprep.subr.mxu0 0.0
    %780 = vmatpush1.msra.mxu0 0.0
    %781 = vmatprep.subr.mxu0 0.0
    %782 = vmatpush1.msra.mxu0 0.0
    %783 = vmatprep.subr.mxu0 0.0
    %784 = vmatpush1.msra.mxu0 0.0
    %785 = vmatprep.subr.mxu0 0.0
    %786 = vmatpush1.msra.mxu0 0.0
    %787 = vmatprep.subr.mxu0 0.0
    %788 = vmatpush1.msra.mxu0 0.0
    %789 = vmatprep.subr.mxu0 0.0
    %790 = vmatpush1.msra.mxu0 0.0
    %791 = vmatprep.subr.mxu0 0.0
    %792 = vmatpush1.msra.mxu0 0.0
    %793 = vmatprep.subr.mxu0 0.0
    %794 = vmatpush1.msra.mxu0 0.0
    %795 = vmatprep.subr.mxu0 0.0
    %796 = vmatpush1.msra.mxu0 0.0
    %797 = vmatprep.subr.mxu0 0.0
    %798 = vmatpush1.msra.mxu0 0.0
    %799 = vmatprep.subr.mxu0 0.0
    %800 = vmatpush1.msra.mxu0 0.0
    %801 = vmatprep.mubr.f32.mxu0 0.0
    %802 = vmatmul.mubr.f32.gmra.mrb[0].mxu0 %v735
    %v803 = vpop.f32.mrb[0].mxu0
    %v804 = vadd.f32 %v138, %v803
    %v805 = vpop.f32.mrb[0].mxu0
    %v806 = vadd.f32 %v142, %v805
    %807 = vdwg.mxu0
    %s808 = scalar_lea.vmem [#allocation6], 16
    %v809 = vld [vmem:[%s808] sm:$0xff]
    %v810 = vunpack.c.l.bf16 %v809
    %v811 = vunpack.c.h.bf16 %v809
    %812 = vmatprep.subr.mxu0 %v86
    %813 = vmatpush1.msra.mxu0 %v85
    %814 = vmatprep.subr.mxu0 %v88
    %815 = vmatpush1.msra.mxu0 %v87
    %816 = vmatprep.subr.mxu0 %v90
    %817 = vmatpush1.msra.mxu0 %v89
    %818 = vmatprep.subr.mxu0 %v92
    %819 = vmatpush1.msra.mxu0 %v91
    %820 = vmatprep.subr.mxu0 %v94
    %821 = vmatpush1.msra.mxu0 %v93
    %822 = vmatprep.subr.mxu0 %v96
    %823 = vmatpush1.msra.mxu0 %v95
    %824 = vmatprep.subr.mxu0 %v98
    %825 = vmatpush1.msra.mxu0 %v97
    %826 = vmatprep.subr.mxu0 %v100
    %827 = vmatpush1.msra.mxu0 %v99
    %828 = vmatprep.subr.mxu0 0.0
    %829 = vmatpush1.msra.mxu0 0.0
    %830 = vmatprep.subr.mxu0 0.0
    %831 = vmatpush1.msra.mxu0 0.0
    %832 = vmatprep.subr.mxu0 0.0
    %833 = vmatpush1.msra.mxu0 0.0
    %834 = vmatprep.subr.mxu0 0.0
    %835 = vmatpush1.msra.mxu0 0.0
    %836 = vmatprep.subr.mxu0 0.0
    %837 = vmatpush1.msra.mxu0 0.0
    %838 = vmatprep.subr.mxu0 0.0
    %839 = vmatpush1.msra.mxu0 0.0
    %840 = vmatprep.subr.mxu0 0.0
    %841 = vmatpush1.msra.mxu0 0.0
    %842 = vmatprep.subr.mxu0 0.0
    %843 = vmatpush1.msra.mxu0 0.0
    %844 = vmatprep.subr.mxu0 0.0
    %845 = vmatpush1.msra.mxu0 0.0
    %846 = vmatprep.subr.mxu0 0.0
    %847 = vmatpush1.msra.mxu0 0.0
    %848 = vmatprep.subr.mxu0 0.0
    %849 = vmatpush1.msra.mxu0 0.0
    %850 = vmatprep.subr.mxu0 0.0
    %851 = vmatpush1.msra.mxu0 0.0
    %852 = vmatprep.subr.mxu0 0.0
    %853 = vmatpush1.msra.mxu0 0.0
    %854 = vmatprep.subr.mxu0 0.0
    %855 = vmatpush1.msra.mxu0 0.0
    %856 = vmatprep.subr.mxu0 0.0
    %857 = vmatpush1.msra.mxu0 0.0
    %858 = vmatprep.subr.mxu0 0.0
    %859 = vmatpush1.msra.mxu0 0.0
    %860 = vmatprep.subr.mxu0 0.0
    %861 = vmatpush1.msra.mxu0 0.0
    %862 = vmatprep.subr.mxu0 0.0
    %863 = vmatpush1.msra.mxu0 0.0
    %864 = vmatprep.subr.mxu0 0.0
    %865 = vmatpush1.msra.mxu0 0.0
    %866 = vmatprep.subr.mxu0 0.0
    %867 = vmatpush1.msra.mxu0 0.0
    %868 = vmatprep.subr.mxu0 0.0
    %869 = vmatpush1.msra.mxu0 0.0
    %870 = vmatprep.subr.mxu0 0.0
    %871 = vmatpush1.msra.mxu0 0.0
    %872 = vmatprep.subr.mxu0 0.0
    %873 = vmatpush1.msra.mxu0 0.0
    %874 = vmatprep.subr.mxu0 0.0
    %875 = vmatpush1.msra.mxu0 0.0
    %876 = vmatprep.mubr.f32.mxu0 0.0
    %877 = vmatmul.mubr.f32.gmra.mrb[0].mxu0 %v629
    %v878 = vpop.f32.mrb[0].mxu0
    %v879 = vadd.f32 0.0, %v878
    %v880 = vpop.f32.mrb[0].mxu0
    %v881 = vadd.f32 0.0, %v880
    %882 = vdwg.mxu0
    %v883 = vadd.f32 %v810, %v879
    %v884 = vadd.f32 %v811, %v881
    %v885 = vxor.u32 %v883, 2147483648
    %v886 = vxor.u32 %v884, 2147483648
    %v887 = vmul.f32 %v885, 1.442695
    %v888 = vpow.pop %v887
    %v889 = vmul.f32 %v886, 1.442695
    %v890 = vpow.pop %v889
    %v891 = vadd.f32 %v888, 1.0
    %v892 = vadd.f32 %v890, 1.0
    %v893 = vrcp.pop %v891
    %v894 = vmul.f32 1.0, %v893
    %v895 = vrcp.pop %v892
    %v896 = vmul.f32 1.0, %v895
    %v897 = vtanh.pop %v884
    %v898 = vmul.f32 %v894, %v621
    %900 = vrot.lane.b32.xlu0 %v897, 64
    %v901 = vpop.permute.xlu0 %900
    %v903 = vmul.f32 %v894, %v901
    %905 = vrot.lane.b32.xlu0 %v903, 64
    %v906 = vpop.permute.xlu0 %905
    %v908 = vadd.f32 %v898, %v906
    %v909 = vtanh.pop %v908
    %911 = vrot.lane.b32.xlu0 %v909, 64
    %v912 = vpop.permute.xlu0 %911
    %v914 = vmul.f32 %v896, %v912
    %v916 = vsel %vm149, %v914, 0
    %918 = vmatprep.subr.mxu0 %v102
    %919 = vmatpush1.msra.mxu0 %v101
    %920 = vmatprep.subr.mxu0 %v104
    %921 = vmatpush1.msra.mxu0 %v103
    %922 = vmatprep.subr.mxu0 %v106
    %923 = vmatpush1.msra.mxu0 %v105
    %924 = vmatprep.subr.mxu0 %v108
    %925 = vmatpush1.msra.mxu0 %v107
    %926 = vmatprep.subr.mxu0 %v110
    %927 = vmatpush1.msra.mxu0 %v109
    %928 = vmatprep.subr.mxu0 %v112
    %929 = vmatpush1.msra.mxu0 %v111
    %930 = vmatprep.subr.mxu0 %v114
    %931 = vmatpush1.msra.mxu0 %v113
    %932 = vmatprep.subr.mxu0 %v116
    %933 = vmatpush1.msra.mxu0 %v115
    %934 = vmatprep.subr.mxu0 0.0
    %935 = vmatpush1.msra.mxu0 0.0
    %936 = vmatprep.subr.mxu0 0.0
    %937 = vmatpush1.msra.mxu0 0.0
    %938 = vmatprep.subr.mxu0 0.0
    %939 = vmatpush1.msra.mxu0 0.0
    %940 = vmatprep.subr.mxu0 0.0
    %941 = vmatpush1.msra.mxu0 0.0
    %942 = vmatprep.subr.mxu0 0.0
    %943 = vmatpush1.msra.mxu0 0.0
    %944 = vmatprep.subr.mxu0 0.0
    %945 = vmatpush1.msra.mxu0 0.0
    %946 = vmatprep.subr.mxu0 0.0
    %947 = vmatpush1.msra.mxu0 0.0
    %948 = vmatprep.subr.mxu0 0.0
    %949 = vmatpush1.msra.mxu0 0.0
    %950 = vmatprep.subr.mxu0 0.0
    %951 = vmatpush1.msra.mxu0 0.0
    %952 = vmatprep.subr.mxu0 0.0
    %953 = vmatpush1.msra.mxu0 0.0
    %954 = vmatprep.subr.mxu0 0.0
    %955 = vmatpush1.msra.mxu0 0.0
    %956 = vmatprep.subr.mxu0 0.0
    %957 = vmatpush1.msra.mxu0 0.0
    %958 = vmatprep.subr.mxu0 0.0
    %959 = vmatpush1.msra.mxu0 0.0
    %960 = vmatprep.subr.mxu0 0.0
    %961 = vmatpush1.msra.mxu0 0.0
    %962 = vmatprep.subr.mxu0 0.0
    %963 = vmatpush1.msra.mxu0 0.0
    %964 = vmatprep.subr.mxu0 0.0
    %965 = vmatpush1.msra.mxu0 0.0
    %966 = vmatprep.subr.mxu0 0.0
    %967 = vmatpush1.msra.mxu0 0.0
    %968 = vmatprep.subr.mxu0 0.0
    %969 = vmatpush1.msra.mxu0 0.0
    %970 = vmatprep.subr.mxu0 0.0
    %971 = vmatpush1.msra.mxu0 0.0
    %972 = vmatprep.subr.mxu0 0.0
    %973 = vmatpush1.msra.mxu0 0.0
    %974 = vmatprep.subr.mxu0 0.0
    %975 = vmatpush1.msra.mxu0 0.0
    %976 = vmatprep.subr.mxu0 0.0
    %977 = vmatpush1.msra.mxu0 0.0
    %978 = vmatprep.subr.mxu0 0.0
    %979 = vmatpush1.msra.mxu0 0.0
    %980 = vmatprep.subr.mxu0 0.0
    %981 = vmatpush1.msra.mxu0 0.0
    %982 = vmatprep.mubr.f32.mxu0 0.0
    %983 = vmatmul.mubr.f32.gmra.mrb[0].mxu0 %v916
    %v984 = vpop.f32.mrb[0].mxu0
    %v985 = vadd.f32 0.0, %v984
    %v986 = vpop.f32.mrb[0].mxu0
    %v987 = vadd.f32 0.0, %v986
    %988 = vdwg.mxu0
    %v989 = vadd.f32 %v804, %v985
    %v990 = vadd.f32 %v806, %v987
    %v991 = vxor.u32 %v989, 2147483648
    %v992 = vxor.u32 %v990, 2147483648
    %v993 = vmul.f32 %v991, 1.442695
    %v994 = vpow.pop %v993
    %v995 = vmul.f32 %v992, 1.442695
    %v996 = vpow.pop %v995
    %v997 = vadd.f32 %v994, 1.0
    %v998 = vadd.f32 %v996, 1.0
    %v999 = vrcp.pop %v997
    %v1000 = vmul.f32 1.0, %v999
    %v1001 = vrcp.pop %v998
    %v1002 = vmul.f32 1.0, %v1001
    %v1003 = vtanh.pop %v990
    %v1004 = vmul.f32 %v1000, %v727
    %1006 = vrot.lane.b32.xlu0 %v1003, 64
    %v1007 = vpop.permute.xlu0 %1006
    %v1009 = vmul.f32 %v1000, %v1007
    %1011 = vrot.lane.b32.xlu0 %v1009, 64
    %v1012 = vpop.permute.xlu0 %1011
    %v1014 = vadd.f32 %v1004, %v1012
    %v1015 = vtanh.pop %v1014
    %1017 = vrot.lane.b32.xlu0 %v1015, 64
    %v1018 = vpop.permute.xlu0 %1017
    %v1020 = vmul.f32 %v1002, %v1018
    %v1022 = vsel %vm149, %v1020, 0
    %1024 = vmatprep.subr.mxu0 %v118
    %1025 = vmatpush1.msra.mxu0 %v117
    %1026 = vmatprep.subr.mxu0 %v120
    %1027 = vmatpush1.msra.mxu0 %v119
    %1028 = vmatprep.subr.mxu0 %v122
    %1029 = vmatpush1.msra.mxu0 %v121
    %1030 = vmatprep.subr.mxu0 %v124
    %1031 = vmatpush1.msra.mxu0 %v123
    %1032 = vmatprep.subr.mxu0 %v126
    %1033 = vmatpush1.msra.mxu0 %v125
    %1034 = vmatprep.subr.mxu0 %v128
    %1035 = vmatpush1.msra.mxu0 %v127
    %1036 = vmatprep.subr.mxu0 %v130
    %1037 = vmatpush1.msra.mxu0 %v129
    %1038 = vmatprep.subr.mxu0 %v132
    %1039 = vmatpush1.msra.mxu0 %v131
    %1040 = vmatprep.subr.mxu0 0.0
    %1041 = vmatpush1.msra.mxu0 0.0
    %1042 = vmatprep.subr.mxu0 0.0
    %1043 = vmatpush1.msra.mxu0 0.0
    %1044 = vmatprep.subr.mxu0 0.0
    %1045 = vmatpush1.msra.mxu0 0.0
    %1046 = vmatprep.subr.mxu0 0.0
    %1047 = vmatpush1.msra.mxu0 0.0
    %1048 = vmatprep.subr.mxu0 0.0
    %1049 = vmatpush1.msra.mxu0 0.0
    %1050 = vmatprep.subr.mxu0 0.0
    %1051 = vmatpush1.msra.mxu0 0.0
    %1052 = vmatprep.subr.mxu0 0.0
    %1053 = vmatpush1.msra.mxu0 0.0
    %1054 = vmatprep.subr.mxu0 0.0
    %1055 = vmatpush1.msra.mxu0 0.0
    %1056 = vmatprep.subr.mxu0 0.0
    %1057 = vmatpush1.msra.mxu0 0.0
    %1058 = vmatprep.subr.mxu0 0.0
    %1059 = vmatpush1.msra.mxu0 0.0
    %1060 = vmatprep.subr.mxu0 0.0
    %1061 = vmatpush1.msra.mxu0 0.0
    %1062 = vmatprep.subr.mxu0 0.0
    %1063 = vmatpush1.msra.mxu0 0.0
    %1064 = vmatprep.subr.mxu0 0.0
    %1065 = vmatpush1.msra.mxu0 0.0
    %1066 = vmatprep.subr.mxu0 0.0
    %1067 = vmatpush1.msra.mxu0 0.0
    %1068 = vmatprep.subr.mxu0 0.0
    %1069 = vmatpush1.msra.mxu0 0.0
    %1070 = vmatprep.subr.mxu0 0.0
    %1071 = vmatpush1.msra.mxu0 0.0
    %1072 = vmatprep.subr.mxu0 0.0
    %1073 = vmatpush1.msra.mxu0 0.0
    %1074 = vmatprep.subr.mxu0 0.0
    %1075 = vmatpush1.msra.mxu0 0.0
    %1076 = vmatprep.subr.mxu0 0.0
    %1077 = vmatpush1.msra.mxu0 0.0
    %1078 = vmatprep.subr.mxu0 0.0
    %1079 = vmatpush1.msra.mxu0 0.0
    %1080 = vmatprep.subr.mxu0 0.0
    %1081 = vmatpush1.msra.mxu0 0.0
    %1082 = vmatprep.subr.mxu0 0.0
    %1083 = vmatpush1.msra.mxu0 0.0
    %1084 = vmatprep.subr.mxu0 0.0
    %1085 = vmatpush1.msra.mxu0 0.0
    %1086 = vmatprep.subr.mxu0 0.0
    %1087 = vmatpush1.msra.mxu0 0.0
    %1088 = vmatprep.mubr.f32.mxu0 0.0
    %1089 = vmatmul.mubr.f32.gmra.mrb[0].mxu0 %v1022
    %v1090 = vpop.f32.mrb[0].mxu0
    %v1091 = vadd.f32 %v138, %v1090
    %v1092 = vpop.f32.mrb[0].mxu0
    %v1093 = vadd.f32 %v142, %v1092
    %1094 = vdwg.mxu0
    %s1095 = scalar_lea.vmem [#allocation6], 24
    %v1096 = vld [vmem:[%s1095] sm:$0xff]
    %v1097 = vunpack.c.l.bf16 %v1096
    %v1098 = vunpack.c.h.bf16 %v1096
    %1099 = vmatprep.subr.mxu0 %v86
    %1100 = vmatpush1.msra.mxu0 %v85
    %1101 = vmatprep.subr.mxu0 %v88
    %1102 = vmatpush1.msra.mxu0 %v87
    %1103 = vmatprep.subr.mxu0 %v90
    %1104 = vmatpush1.msra.mxu0 %v89
    %1105 = vmatprep.subr.mxu0 %v92
    %1106 = vmatpush1.msra.mxu0 %v91
    %1107 = vmatprep.subr.mxu0 %v94
    %1108 = vmatpush1.msra.mxu0 %v93
    %1109 = vmatprep.subr.mxu0 %v96
    %1110 = vmatpush1.msra.mxu0 %v95
    %1111 = vmatprep.subr.mxu0 %v98
    %1112 = vmatpush1.msra.mxu0 %v97
    %1113 = vmatprep.subr.mxu0 %v100
    %1114 = vmatpush1.msra.mxu0 %v99
    %1115 = vmatprep.subr.mxu0 0.0
    %1116 = vmatpush1.msra.mxu0 0.0
    %1117 = vmatprep.subr.mxu0 0.0
    %1118 = vmatpush1.msra.mxu0 0.0
    %1119 = vmatprep.subr.mxu0 0.0
    %1120 = vmatpush1.msra.mxu0 0.0
    %1121 = vmatprep.subr.mxu0 0.0
    %1122 = vmatpush1.msra.mxu0 0.0
    %1123 = vmatprep.subr.mxu0 0.0
    %1124 = vmatpush1.msra.mxu0 0.0
    %1125 = vmatprep.subr.mxu0 0.0
    %1126 = vmatpush1.msra.mxu0 0.0
    %1127 = vmatprep.subr.mxu0 0.0
    %1128 = vmatpush1.msra.mxu0 0.0
    %1129 = vmatprep.subr.mxu0 0.0
    %1130 = vmatpush1.msra.mxu0 0.0
    %1131 = vmatprep.subr.mxu0 0.0
    %1132 = vmatpush1.msra.mxu0 0.0
    %1133 = vmatprep.subr.mxu0 0.0
    %1134 = vmatpush1.msra.mxu0 0.0
    %1135 = vmatprep.subr.mxu0 0.0
    %1136 = vmatpush1.msra.mxu0 0.0
    %1137 = vmatprep.subr.mxu0 0.0
    %1138 = vmatpush1.msra.mxu0 0.0
    %1139 = vmatprep.subr.mxu0 0.0
    %1140 = vmatpush1.msra.mxu0 0.0
    %1141 = vmatprep.subr.mxu0 0.0
    %1142 = vmatpush1.msra.mxu0 0.0
    %1143 = vmatprep.subr.mxu0 0.0
    %1144 = vmatpush1.msra.mxu0 0.0
    %1145 = vmatprep.subr.mxu0 0.0
    %1146 = vmatpush1.msra.mxu0 0.0
    %1147 = vmatprep.subr.mxu0 0.0
    %1148 = vmatpush1.msra.mxu0 0.0
    %1149 = vmatprep.subr.mxu0 0.0
    %1150 = vmatpush1.msra.mxu0 0.0
    %1151 = vmatprep.subr.mxu0 0.0
    %1152 = vmatpush1.msra.mxu0 0.0
    %1153 = vmatprep.subr.mxu0 0.0
    %1154 = vmatpush1.msra.mxu0 0.0
    %1155 = vmatprep.subr.mxu0 0.0
    %1156 = vmatpush1.msra.mxu0 0.0
    %1157 = vmatprep.subr.mxu0 0.0
    %1158 = vmatpush1.msra.mxu0 0.0
    %1159 = vmatprep.subr.mxu0 0.0
    %1160 = vmatpush1.msra.mxu0 0.0
    %1161 = vmatprep.subr.mxu0 0.0
    %1162 = vmatpush1.msra.mxu0 0.0
    %1163 = vmatprep.mubr.f32.mxu0 0.0
    %1164 = vmatmul.mubr.f32.gmra.mrb[0].mxu0 %v916
    %v1165 = vpop.f32.mrb[0].mxu0
    %v1166 = vadd.f32 0.0, %v1165
    %v1167 = vpop.f32.mrb[0].mxu0
    %v1168 = vadd.f32 0.0, %v1167
    %1169 = vdwg.mxu0
    %v1170 = vadd.f32 %v1097, %v1166
    %v1171 = vadd.f32 %v1098, %v1168
    %v1172 = vxor.u32 %v1170, 2147483648
    %v1173 = vxor.u32 %v1171, 2147483648
    %v1174 = vmul.f32 %v1172, 1.442695
    %v1175 = vpow.pop %v1174
    %v1176 = vmul.f32 %v1173, 1.442695
    %v1177 = vpow.pop %v1176
    %v1178 = vadd.f32 %v1175, 1.0
    %v1179 = vadd.f32 %v1177, 1.0
    %v1180 = vrcp.pop %v1178
    %v1181 = vmul.f32 1.0, %v1180
    %v1182 = vrcp.pop %v1179
    %v1183 = vmul.f32 1.0, %v1182
    %v1184 = vtanh.pop %v1171
    %v1185 = vmul.f32 %v1181, %v908
    %1187 = vrot.lane.b32.xlu0 %v1184, 64
    %v1188 = vpop.permute.xlu0 %1187
    %v1190 = vmul.f32 %v1181, %v1188
    %1192 = vrot.lane.b32.xlu0 %v1190, 64
    %v1193 = vpop.permute.xlu0 %1192
    %v1195 = vadd.f32 %v1185, %v1193
    %v1196 = vtanh.pop %v1195
    %1198 = vrot.lane.b32.xlu0 %v1196, 64
    %v1199 = vpop.permute.xlu0 %1198
    %v1201 = vmul.f32 %v1183, %v1199
    %v1203 = vsel %vm149, %v1201, 0
    %1205 = vmatprep.subr.mxu0 %v102
    %1206 = vmatpush1.msra.mxu0 %v101
    %1207 = vmatprep.subr.mxu0 %v104
    %1208 = vmatpush1.msra.mxu0 %v103
    %1209 = vmatprep.subr.mxu0 %v106
    %1210 = vmatpush1.msra.mxu0 %v105
    %1211 = vmatprep.subr.mxu0 %v108
    %1212 = vmatpush1.msra.mxu0 %v107
    %1213 = vmatprep.subr.mxu0 %v110
    %1214 = vmatpush1.msra.mxu0 %v109
    %1215 = vmatprep.subr.mxu0 %v112
    %1216 = vmatpush1.msra.mxu0 %v111
    %1217 = vmatprep.subr.mxu0 %v114
    %1218 = vmatpush1.msra.mxu0 %v113
    %1219 = vmatprep.subr.mxu0 %v116
    %1220 = vmatpush1.msra.mxu0 %v115
    %1221 = vmatprep.subr.mxu0 0.0
    %1222 = vmatpush1.msra.mxu0 0.0
    %1223 = vmatprep.subr.mxu0 0.0
    %1224 = vmatpush1.msra.mxu0 0.0
    %1225 = vmatprep.subr.mxu0 0.0
    %1226 = vmatpush1.msra.mxu0 0.0
    %1227 = vmatprep.subr.mxu0 0.0
    %1228 = vmatpush1.msra.mxu0 0.0
    %1229 = vmatprep.subr.mxu0 0.0
    %1230 = vmatpush1.msra.mxu0 0.0
    %1231 = vmatprep.subr.mxu0 0.0
    %1232 = vmatpush1.msra.mxu0 0.0
    %1233 = vmatprep.subr.mxu0 0.0
    %1234 = vmatpush1.msra.mxu0 0.0
    %1235 = vmatprep.subr.mxu0 0.0
    %1236 = vmatpush1.msra.mxu0 0.0
    %1237 = vmatprep.subr.mxu0 0.0
    %1238 = vmatpush1.msra.mxu0 0.0
    %1239 = vmatprep.subr.mxu0 0.0
    %1240 = vmatpush1.msra.mxu0 0.0
    %1241 = vmatprep.subr.mxu0 0.0
    %1242 = vmatpush1.msra.mxu0 0.0
    %1243 = vmatprep.subr.mxu0 0.0
    %1244 = vmatpush1.msra.mxu0 0.0
    %1245 = vmatprep.subr.mxu0 0.0
    %1246 = vmatpush1.msra.mxu0 0.0
    %1247 = vmatprep.subr.mxu0 0.0
    %1248 = vmatpush1.msra.mxu0 0.0
    %1249 = vmatprep.subr.mxu0 0.0
    %1250 = vmatpush1.msra.mxu0 0.0
    %1251 = vmatprep.subr.mxu0 0.0
    %1252 = vmatpush1.msra.mxu0 0.0
    %1253 = vmatprep.subr.mxu0 0.0
    %1254 = vmatpush1.msra.mxu0 0.0
    %1255 = vmatprep.subr.mxu0 0.0
    %1256 = vmatpush1.msra.mxu0 0.0
    %1257 = vmatprep.subr.mxu0 0.0
    %1258 = vmatpush1.msra.mxu0 0.0
    %1259 = vmatprep.subr.mxu0 0.0
    %1260 = vmatpush1.msra.mxu0 0.0
    %1261 = vmatprep.subr.mxu0 0.0
    %1262 = vmatpush1.msra.mxu0 0.0
    %1263 = vmatprep.subr.mxu0 0.0
    %1264 = vmatpush1.msra.mxu0 0.0
    %1265 = vmatprep.subr.mxu0 0.0
    %1266 = vmatpush1.msra.mxu0 0.0
    %1267 = vmatprep.subr.mxu0 0.0
    %1268 = vmatpush1.msra.mxu0 0.0
    %1269 = vmatprep.mubr.f32.mxu0 0.0
    %1270 = vmatmul.mubr.f32.gmra.mrb[0].mxu0 %v1203
    %v1271 = vpop.f32.mrb[0].mxu0
    %v1272 = vadd.f32 0.0, %v1271
    %v1273 = vpop.f32.mrb[0].mxu0
    %v1274 = vadd.f32 0.0, %v1273
    %1275 = vdwg.mxu0
    %v1276 = vadd.f32 %v1091, %v1272
    %v1277 = vadd.f32 %v1093, %v1274
    %v1278 = vxor.u32 %v1276, 2147483648
    %v1279 = vxor.u32 %v1277, 2147483648
    %v1280 = vmul.f32 %v1278, 1.442695
    %v1281 = vpow.pop %v1280
    %v1282 = vmul.f32 %v1279, 1.442695
    %v1283 = vpow.pop %v1282
    %v1284 = vadd.f32 %v1281, 1.0
    %v1285 = vadd.f32 %v1283, 1.0
    %v1286 = vrcp.pop %v1284
    %v1287 = vmul.f32 1.0, %v1286
    %v1288 = vrcp.pop %v1285
    %v1289 = vmul.f32 1.0, %v1288
    %v1290 = vtanh.pop %v1277
    %v1291 = vmul.f32 %v1287, %v1014
    %1293 = vrot.lane.b32.xlu0 %v1290, 64
    %v1294 = vpop.permute.xlu0 %1293
    %v1296 = vmul.f32 %v1287, %v1294
    %1298 = vrot.lane.b32.xlu0 %v1296, 64
    %v1299 = vpop.permute.xlu0 %1298
    %v1301 = vadd.f32 %v1291, %v1299
    %v1302 = vtanh.pop %v1301
    %1304 = vrot.lane.b32.xlu0 %v1302, 64
    %v1305 = vpop.permute.xlu0 %1304
    %v1307 = vmul.f32 %v1289, %v1305
    %v1309 = vsel %vm149, %v1307, 0
    %1311 = vmatprep.subr.mxu0 %v118
    %1312 = vmatpush1.msra.mxu0 %v117
    %1313 = vmatprep.subr.mxu0 %v120
    %1314 = vmatpush1.msra.mxu0 %v119
    %1315 = vmatprep.subr.mxu0 %v122
    %1316 = vmatpush1.msra.mxu0 %v121
    %1317 = vmatprep.subr.mxu0 %v124
    %1318 = vmatpush1.msra.mxu0 %v123
    %1319 = vmatprep.subr.mxu0 %v126
    %1320 = vmatpush1.msra.mxu0 %v125
    %1321 = vmatprep.subr.mxu0 %v128
    %1322 = vmatpush1.msra.mxu0 %v127
    %1323 = vmatprep.subr.mxu0 %v130
    %1324 = vmatpush1.msra.mxu0 %v129
    %1325 = vmatprep.subr.mxu0 %v132
    %1326 = vmatpush1.msra.mxu0 %v131
    %1327 = vmatprep.subr.mxu0 0.0
    %1328 = vmatpush1.msra.mxu0 0.0
    %1329 = vmatprep.subr.mxu0 0.0
    %1330 = vmatpush1.msra.mxu0 0.0
    %1331 = vmatprep.subr.mxu0 0.0
    %1332 = vmatpush1.msra.mxu0 0.0
    %1333 = vmatprep.subr.mxu0 0.0
    %1334 = vmatpush1.msra.mxu0 0.0
    %1335 = vmatprep.subr.mxu0 0.0
    %1336 = vmatpush1.msra.mxu0 0.0
    %1337 = vmatprep.subr.mxu0 0.0
    %1338 = vmatpush1.msra.mxu0 0.0
    %1339 = vmatprep.subr.mxu0 0.0
    %1340 = vmatpush1.msra.mxu0 0.0
    %1341 = vmatprep.subr.mxu0 0.0
    %1342 = vmatpush1.msra.mxu0 0.0
    %1343 = vmatprep.subr.mxu0 0.0
    %1344 = vmatpush1.msra.mxu0 0.0
    %1345 = vmatprep.subr.mxu0 0.0
    %1346 = vmatpush1.msra.mxu0 0.0
    %1347 = vmatprep.subr.mxu0 0.0
    %1348 = vmatpush1.msra.mxu0 0.0
    %1349 = vmatprep.subr.mxu0 0.0
    %1350 = vmatpush1.msra.mxu0 0.0
    %1351 = vmatprep.subr.mxu0 0.0
    %1352 = vmatpush1.msra.mxu0 0.0
    %1353 = vmatprep.subr.mxu0 0.0
    %1354 = vmatpush1.msra.mxu0 0.0
    %1355 = vmatprep.subr.mxu0 0.0
    %1356 = vmatpush1.msra.mxu0 0.0
    %1357 = vmatprep.subr.mxu0 0.0
    %1358 = vmatpush1.msra.mxu0 0.0
    %1359 = vmatprep.subr.mxu0 0.0
    %1360 = vmatpush1.msra.mxu0 0.0
    %1361 = vmatprep.subr.mxu0 0.0
    %1362 = vmatpush1.msra.mxu0 0.0
    %1363 = vmatprep.subr.mxu0 0.0
    %1364 = vmatpush1.msra.mxu0 0.0
    %1365 = vmatprep.subr.mxu0 0.0
    %1366 = vmatpush1.msra.mxu0 0.0
    %1367 = vmatprep.subr.mxu0 0.0
    %1368 = vmatpush1.msra.mxu0 0.0
    %1369 = vmatprep.subr.mxu0 0.0
    %1370 = vmatpush1.msra.mxu0 0.0
    %1371 = vmatprep.subr.mxu0 0.0
    %1372 = vmatpush1.msra.mxu0 0.0
    %1373 = vmatprep.subr.mxu0 0.0
    %1374 = vmatpush1.msra.mxu0 0.0
    %1375 = vmatprep.mubr.f32.mxu0 0.0
    %1376 = vmatmul.mubr.f32.gmra.mrb[0].mxu0 %v1309
    %v1377 = vpop.f32.mrb[0].mxu0
    %v1378 = vadd.f32 %v138, %v1377
    %v1379 = vpop.f32.mrb[0].mxu0
    %v1380 = vadd.f32 %v142, %v1379
    %1381 = vdwg.mxu0
    %s1382 = scalar_lea.vmem [#allocation6], 32
    %v1383 = vld [vmem:[%s1382] sm:$0xff]
    %v1384 = vunpack.c.l.bf16 %v1383
    %v1385 = vunpack.c.h.bf16 %v1383
    %1386 = vmatprep.subr.mxu0 %v86
    %1387 = vmatpush1.msra.mxu0 %v85
    %1388 = vmatprep.subr.mxu0 %v88
    %1389 = vmatpush1.msra.mxu0 %v87
    %1390 = vmatprep.subr.mxu0 %v90
    %1391 = vmatpush1.msra.mxu0 %v89
    %1392 = vmatprep.subr.mxu0 %v92
    %1393 = vmatpush1.msra.mxu0 %v91
    %1394 = vmatprep.subr.mxu0 %v94
    %1395 = vmatpush1.msra.mxu0 %v93
    %1396 = vmatprep.subr.mxu0 %v96
    %1397 = vmatpush1.msra.mxu0 %v95
    %1398 = vmatprep.subr.mxu0 %v98
    %1399 = vmatpush1.msra.mxu0 %v97
    %1400 = vmatprep.subr.mxu0 %v100
    %1401 = vmatpush1.msra.mxu0 %v99
    %1402 = vmatprep.subr.mxu0 0.0
    %1403 = vmatpush1.msra.mxu0 0.0
    %1404 = vmatprep.subr.mxu0 0.0
    %1405 = vmatpush1.msra.mxu0 0.0
    %1406 = vmatprep.subr.mxu0 0.0
    %1407 = vmatpush1.msra.mxu0 0.0
    %1408 = vmatprep.subr.mxu0 0.0
    %1409 = vmatpush1.msra.mxu0 0.0
    %1410 = vmatprep.subr.mxu0 0.0
    %1411 = vmatpush1.msra.mxu0 0.0
    %1412 = vmatprep.subr.mxu0 0.0
    %1413 = vmatpush1.msra.mxu0 0.0
    %1414 = vmatprep.subr.mxu0 0.0
    %1415 = vmatpush1.msra.mxu0 0.0
    %1416 = vmatprep.subr.mxu0 0.0
    %1417 = vmatpush1.msra.mxu0 0.0
    %1418 = vmatprep.subr.mxu0 0.0
    %1419 = vmatpush1.msra.mxu0 0.0
    %1420 = vmatprep.subr.mxu0 0.0
    %1421 = vmatpush1.msra.mxu0 0.0
    %1422 = vmatprep.subr.mxu0 0.0
    %1423 = vmatpush1.msra.mxu0 0.0
    %1424 = vmatprep.subr.mxu0 0.0
    %1425 = vmatpush1.msra.mxu0 0.0
    %1426 = vmatprep.subr.mxu0 0.0
    %1427 = vmatpush1.msra.mxu0 0.0
    %1428 = vmatprep.subr.mxu0 0.0
    %1429 = vmatpush1.msra.mxu0 0.0
    %1430 = vmatprep.subr.mxu0 0.0
    %1431 = vmatpush1.msra.mxu0 0.0
    %1432 = vmatprep.subr.mxu0 0.0
    %1433 = vmatpush1.msra.mxu0 0.0
    %1434 = vmatprep.subr.mxu0 0.0
    %1435 = vmatpush1.msra.mxu0 0.0
    %1436 = vmatprep.subr.mxu0 0.0
    %1437 = vmatpush1.msra.mxu0 0.0
    %1438 = vmatprep.subr.mxu0 0.0
    %1439 = vmatpush1.msra.mxu0 0.0
    %1440 = vmatprep.subr.mxu0 0.0
    %1441 = vmatpush1.msra.mxu0 0.0
    %1442 = vmatprep.subr.mxu0 0.0
    %1443 = vmatpush1.msra.mxu0 0.0
    %1444 = vmatprep.subr.mxu0 0.0
    %1445 = vmatpush1.msra.mxu0 0.0
    %1446 = vmatprep.subr.mxu0 0.0
    %1447 = vmatpush1.msra.mxu0 0.0
    %1448 = vmatprep.subr.mxu0 0.0
    %1449 = vmatpush1.msra.mxu0 0.0
    %1450 = vmatprep.mubr.f32.mxu0 0.0
    %1451 = vmatmul.mubr.f32.gmra.mrb[0].mxu0 %v1203
    %v1452 = vpop.f32.mrb[0].mxu0
    %v1453 = vadd.f32 0.0, %v1452
    %v1454 = vpop.f32.mrb[0].mxu0
    %v1455 = vadd.f32 0.0, %v1454
    %1456 = vdwg.mxu0
    %v1457 = vadd.f32 %v1384, %v1453
    %v1458 = vadd.f32 %v1385, %v1455
    %v1459 = vxor.u32 %v1457, 2147483648
    %v1460 = vxor.u32 %v1458, 2147483648
    %v1461 = vmul.f32 %v1459, 1.442695
    %v1462 = vpow.pop %v1461
    %v1463 = vmul.f32 %v1460, 1.442695
    %v1464 = vpow.pop %v1463
    %v1465 = vadd.f32 %v1462, 1.0
    %v1466 = vadd.f32 %v1464, 1.0
    %v1467 = vrcp.pop %v1465
    %v1468 = vmul.f32 1.0, %v1467
    %v1469 = vrcp.pop %v1466
    %v1470 = vmul.f32 1.0, %v1469
    %v1471 = vtanh.pop %v1458
    %v1472 = vmul.f32 %v1468, %v1195
    %1474 = vrot.lane.b32.xlu0 %v1471, 64
    %v1475 = vpop.permute.xlu0 %1474
    %v1477 = vmul.f32 %v1468, %v1475
    %1479 = vrot.lane.b32.xlu0 %v1477, 64
    %v1480 = vpop.permute.xlu0 %1479
    %v1482 = vadd.f32 %v1472, %v1480
    %v1483 = vtanh.pop %v1482
    %1485 = vrot.lane.b32.xlu0 %v1483, 64
    %v1486 = vpop.permute.xlu0 %1485
    %v1488 = vmul.f32 %v1470, %v1486
    %v1490 = vsel %vm149, %v1488, 0
    %1492 = vmatprep.subr.mxu0 %v102
    %1493 = vmatpush1.msra.mxu0 %v101
    %1494 = vmatprep.subr.mxu0 %v104
    %1495 = vmatpush1.msra.mxu0 %v103
    %1496 = vmatprep.subr.mxu0 %v106
    %1497 = vmatpush1.msra.mxu0 %v105
    %1498 = vmatprep.subr.mxu0 %v108
    %1499 = vmatpush1.msra.mxu0 %v107
    %1500 = vmatprep.subr.mxu0 %v110
    %1501 = vmatpush1.msra.mxu0 %v109
    %1502 = vmatprep.subr.mxu0 %v112
    %1503 = vmatpush1.msra.mxu0 %v111
    %1504 = vmatprep.subr.mxu0 %v114
    %1505 = vmatpush1.msra.mxu0 %v113
    %1506 = vmatprep.subr.mxu0 %v116
    %1507 = vmatpush1.msra.mxu0 %v115
    %1508 = vmatprep.subr.mxu0 0.0
    %1509 = vmatpush1.msra.mxu0 0.0
    %1510 = vmatprep.subr.mxu0 0.0
    %1511 = vmatpush1.msra.mxu0 0.0
    %1512 = vmatprep.subr.mxu0 0.0
    %1513 = vmatpush1.msra.mxu0 0.0
    %1514 = vmatprep.subr.mxu0 0.0
    %1515 = vmatpush1.msra.mxu0 0.0
    %1516 = vmatprep.subr.mxu0 0.0
    %1517 = vmatpush1.msra.mxu0 0.0
    %1518 = vmatprep.subr.mxu0 0.0
    %1519 = vmatpush1.msra.mxu0 0.0
    %1520 = vmatprep.subr.mxu0 0.0
    %1521 = vmatpush1.msra.mxu0 0.0
    %1522 = vmatprep.subr.mxu0 0.0
    %1523 = vmatpush1.msra.mxu0 0.0
    %1524 = vmatprep.subr.mxu0 0.0
    %1525 = vmatpush1.msra.mxu0 0.0
    %1526 = vmatprep.subr.mxu0 0.0
    %1527 = vmatpush1.msra.mxu0 0.0
    %1528 = vmatprep.subr.mxu0 0.0
    %1529 = vmatpush1.msra.mxu0 0.0
    %1530 = vmatprep.subr.mxu0 0.0
    %1531 = vmatpush1.msra.mxu0 0.0
    %1532 = vmatprep.subr.mxu0 0.0
    %1533 = vmatpush1.msra.mxu0 0.0
    %1534 = vmatprep.subr.mxu0 0.0
    %1535 = vmatpush1.msra.mxu0 0.0
    %1536 = vmatprep.subr.mxu0 0.0
    %1537 = vmatpush1.msra.mxu0 0.0
    %1538 = vmatprep.subr.mxu0 0.0
    %1539 = vmatpush1.msra.mxu0 0.0
    %1540 = vmatprep.subr.mxu0 0.0
    %1541 = vmatpush1.msra.mxu0 0.0
    %1542 = vmatprep.subr.mxu0 0.0
    %1543 = vmatpush1.msra.mxu0 0.0
    %1544 = vmatprep.subr.mxu0 0.0
    %1545 = vmatpush1.msra.mxu0 0.0
    %1546 = vmatprep.subr.mxu0 0.0
    %1547 = vmatpush1.msra.mxu0 0.0
    %1548 = vmatprep.subr.mxu0 0.0
    %1549 = vmatpush1.msra.mxu0 0.0
    %1550 = vmatprep.subr.mxu0 0.0
    %1551 = vmatpush1.msra.mxu0 0.0
    %1552 = vmatprep.subr.mxu0 0.0
    %1553 = vmatpush1.msra.mxu0 0.0
    %1554 = vmatprep.subr.mxu0 0.0
    %1555 = vmatpush1.msra.mxu0 0.0
    %1556 = vmatprep.mubr.f32.mxu0 0.0
    %1557 = vmatmul.mubr.f32.gmra.mrb[0].mxu0 %v1490
    %v1558 = vpop.f32.mrb[0].mxu0
    %v1559 = vadd.f32 0.0, %v1558
    %v1560 = vpop.f32.mrb[0].mxu0
    %v1561 = vadd.f32 0.0, %v1560
    %1562 = vdwg.mxu0
    %v1563 = vadd.f32 %v1378, %v1559
    %v1564 = vadd.f32 %v1380, %v1561
    %v1565 = vxor.u32 %v1563, 2147483648
    %v1566 = vxor.u32 %v1564, 2147483648
    %v1567 = vmul.f32 %v1565, 1.442695
    %v1568 = vpow.pop %v1567
    %v1569 = vmul.f32 %v1566, 1.442695
    %v1570 = vpow.pop %v1569
    %v1571 = vadd.f32 %v1568, 1.0
    %v1572 = vadd.f32 %v1570, 1.0
    %v1573 = vrcp.pop %v1571
    %v1574 = vmul.f32 1.0, %v1573
    %v1575 = vrcp.pop %v1572
    %v1576 = vmul.f32 1.0, %v1575
    %v1577 = vtanh.pop %v1564
    %v1578 = vmul.f32 %v1574, %v1301
    %1580 = vrot.lane.b32.xlu0 %v1577, 64
    %v1581 = vpop.permute.xlu0 %1580
    %v1583 = vmul.f32 %v1574, %v1581
    %1585 = vrot.lane.b32.xlu0 %v1583, 64
    %v1586 = vpop.permute.xlu0 %1585
    %v1588 = vadd.f32 %v1578, %v1586
    %v1589 = vtanh.pop %v1588
    %1591 = vrot.lane.b32.xlu0 %v1589, 64
    %v1592 = vpop.permute.xlu0 %1591
    %v1594 = vmul.f32 %v1576, %v1592
    %v1596 = vsel %vm149, %v1594, 0
    %1598 = vmatprep.subr.mxu0 %v118
    %1599 = vmatpush1.msra.mxu0 %v117
    %1600 = vmatprep.subr.mxu0 %v120
    %1601 = vmatpush1.msra.mxu0 %v119
    %1602 = vmatprep.subr.mxu0 %v122
    %1603 = vmatpush1.msra.mxu0 %v121
    %1604 = vmatprep.subr.mxu0 %v124
    %1605 = vmatpush1.msra.mxu0 %v123
    %1606 = vmatprep.subr.mxu0 %v126
    %1607 = vmatpush1.msra.mxu0 %v125
    %1608 = vmatprep.subr.mxu0 %v128
    %1609 = vmatpush1.msra.mxu0 %v127
    %1610 = vmatprep.subr.mxu0 %v130
    %1611 = vmatpush1.msra.mxu0 %v129
    %1612 = vmatprep.subr.mxu0 %v132
    %1613 = vmatpush1.msra.mxu0 %v131
    %1614 = vmatprep.subr.mxu0 0.0
    %1615 = vmatpush1.msra.mxu0 0.0
    %1616 = vmatprep.subr.mxu0 0.0
    %1617 = vmatpush1.msra.mxu0 0.0
    %1618 = vmatprep.subr.mxu0 0.0
    %1619 = vmatpush1.msra.mxu0 0.0
    %1620 = vmatprep.subr.mxu0 0.0
    %1621 = vmatpush1.msra.mxu0 0.0
    %1622 = vmatprep.subr.mxu0 0.0
    %1623 = vmatpush1.msra.mxu0 0.0
    %1624 = vmatprep.subr.mxu0 0.0
    %1625 = vmatpush1.msra.mxu0 0.0
    %1626 = vmatprep.subr.mxu0 0.0
    %1627 = vmatpush1.msra.mxu0 0.0
    %1628 = vmatprep.subr.mxu0 0.0
    %1629 = vmatpush1.msra.mxu0 0.0
    %1630 = vmatprep.subr.mxu0 0.0
    %1631 = vmatpush1.msra.mxu0 0.0
    %1632 = vmatprep.subr.mxu0 0.0
    %1633 = vmatpush1.msra.mxu0 0.0
    %1634 = vmatprep.subr.mxu0 0.0
    %1635 = vmatpush1.msra.mxu0 0.0
    %1636 = vmatprep.subr.mxu0 0.0
    %1637 = vmatpush1.msra.mxu0 0.0
    %1638 = vmatprep.subr.mxu0 0.0
    %1639 = vmatpush1.msra.mxu0 0.0
    %1640 = vmatprep.subr.mxu0 0.0
    %1641 = vmatpush1.msra.mxu0 0.0
    %1642 = vmatprep.subr.mxu0 0.0
    %1643 = vmatpush1.msra.mxu0 0.0
    %1644 = vmatprep.subr.mxu0 0.0
    %1645 = vmatpush1.msra.mxu0 0.0
    %1646 = vmatprep.subr.mxu0 0.0
    %1647 = vmatpush1.msra.mxu0 0.0
    %1648 = vmatprep.subr.mxu0 0.0
    %1649 = vmatpush1.msra.mxu0 0.0
    %1650 = vmatprep.subr.mxu0 0.0
    %1651 = vmatpush1.msra.mxu0 0.0
    %1652 = vmatprep.subr.mxu0 0.0
    %1653 = vmatpush1.msra.mxu0 0.0
    %1654 = vmatprep.subr.mxu0 0.0
    %1655 = vmatpush1.msra.mxu0 0.0
    %1656 = vmatprep.subr.mxu0 0.0
    %1657 = vmatpush1.msra.mxu0 0.0
    %1658 = vmatprep.subr.mxu0 0.0
    %1659 = vmatpush1.msra.mxu0 0.0
    %1660 = vmatprep.subr.mxu0 0.0
    %1661 = vmatpush1.msra.mxu0 0.0
    %1662 = vmatprep.mubr.f32.mxu0 0.0
    %1663 = vmatmul.mubr.f32.gmra.mrb[0].mxu0 %v1596
    %v1664 = vpop.f32.mrb[0].mxu0
    %v1665 = vadd.f32 %v138, %v1664
    %v1666 = vpop.f32.mrb[0].mxu0
    %v1667 = vadd.f32 %v142, %v1666
    %1668 = vdwg.mxu0
    %s1669 = scalar_lea.vmem [#allocation6], 40
    %v1670 = vld [vmem:[%s1669] sm:$0xff]
    %v1671 = vunpack.c.l.bf16 %v1670
    %v1672 = vunpack.c.h.bf16 %v1670
    %1673 = vmatprep.subr.mxu0 %v86
    %1674 = vmatpush1.msra.mxu0 %v85
    %1675 = vmatprep.subr.mxu0 %v88
    %1676 = vmatpush1.msra.mxu0 %v87
    %1677 = vmatprep.subr.mxu0 %v90
    %1678 = vmatpush1.msra.mxu0 %v89
    %1679 = vmatprep.subr.mxu0 %v92
    %1680 = vmatpush1.msra.mxu0 %v91
    %1681 = vmatprep.subr.mxu0 %v94
    %1682 = vmatpush1.msra.mxu0 %v93
    %1683 = vmatprep.subr.mxu0 %v96
    %1684 = vmatpush1.msra.mxu0 %v95
    %1685 = vmatprep.subr.mxu0 %v98
    %1686 = vmatpush1.msra.mxu0 %v97
    %1687 = vmatprep.subr.mxu0 %v100
    %1688 = vmatpush1.msra.mxu0 %v99
    %1689 = vmatprep.subr.mxu0 0.0
    %1690 = vmatpush1.msra.mxu0 0.0
    %1691 = vmatprep.subr.mxu0 0.0
    %1692 = vmatpush1.msra.mxu0 0.0
    %1693 = vmatprep.subr.mxu0 0.0
    %1694 = vmatpush1.msra.mxu0 0.0
    %1695 = vmatprep.subr.mxu0 0.0
    %1696 = vmatpush1.msra.mxu0 0.0
    %1697 = vmatprep.subr.mxu0 0.0
    %1698 = vmatpush1.msra.mxu0 0.0
    %1699 = vmatprep.subr.mxu0 0.0
    %1700 = vmatpush1.msra.mxu0 0.0
    %1701 = vmatprep.subr.mxu0 0.0
    %1702 = vmatpush1.msra.mxu0 0.0
    %1703 = vmatprep.subr.mxu0 0.0
    %1704 = vmatpush1.msra.mxu0 0.0
    %1705 = vmatprep.subr.mxu0 0.0
    %1706 = vmatpush1.msra.mxu0 0.0
    %1707 = vmatprep.subr.mxu0 0.0
    %1708 = vmatpush1.msra.mxu0 0.0
    %1709 = vmatprep.subr.mxu0 0.0
    %1710 = vmatpush1.msra.mxu0 0.0
    %1711 = vmatprep.subr.mxu0 0.0
    %1712 = vmatpush1.msra.mxu0 0.0
    %1713 = vmatprep.subr.mxu0 0.0
    %1714 = vmatpush1.msra.mxu0 0.0
    %1715 = vmatprep.subr.mxu0 0.0
    %1716 = vmatpush1.msra.mxu0 0.0
    %1717 = vmatprep.subr.mxu0 0.0
    %1718 = vmatpush1.msra.mxu0 0.0
    %1719 = vmatprep.subr.mxu0 0.0
    %1720 = vmatpush1.msra.mxu0 0.0
    %1721 = vmatprep.subr.mxu0 0.0
    %1722 = vmatpush1.msra.mxu0 0.0
    %1723 = vmatprep.subr.mxu0 0.0
    %1724 = vmatpush1.msra.mxu0 0.0
    %1725 = vmatprep.subr.mxu0 0.0
    %1726 = vmatpush1.msra.mxu0 0.0
    %1727 = vmatprep.subr.mxu0 0.0
    %1728 = vmatpush1.msra.mxu0 0.0
    %1729 = vmatprep.subr.mxu0 0.0
    %1730 = vmatpush1.msra.mxu0 0.0
    %1731 = vmatprep.subr.mxu0 0.0
    %1732 = vmatpush1.msra.mxu0 0.0
    %1733 = vmatprep.subr.mxu0 0.0
    %1734 = vmatpush1.msra.mxu0 0.0
    %1735 = vmatprep.subr.mxu0 0.0
    %1736 = vmatpush1.msra.mxu0 0.0
    %1737 = vmatprep.mubr.f32.mxu0 0.0
    %1738 = vmatmul.mubr.f32.gmra.mrb[0].mxu0 %v1490
    %v1739 = vpop.f32.mrb[0].mxu0
    %v1740 = vadd.f32 0.0, %v1739
    %v1741 = vpop.f32.mrb[0].mxu0
    %v1742 = vadd.f32 0.0, %v1741
    %1743 = vdwg.mxu0
    %v1744 = vadd.f32 %v1671, %v1740
    %v1745 = vadd.f32 %v1672, %v1742
    %v1746 = vxor.u32 %v1744, 2147483648
    %v1747 = vxor.u32 %v1745, 2147483648
    %v1748 = vmul.f32 %v1746, 1.442695
    %v1749 = vpow.pop %v1748
    %v1750 = vmul.f32 %v1747, 1.442695
    %v1751 = vpow.pop %v1750
    %v1752 = vadd.f32 %v1749, 1.0
    %v1753 = vadd.f32 %v1751, 1.0
    %v1754 = vrcp.pop %v1752
    %v1755 = vmul.f32 1.0, %v1754
    %v1756 = vrcp.pop %v1753
    %v1757 = vmul.f32 1.0, %v1756
    %v1758 = vtanh.pop %v1745
    %v1759 = vmul.f32 %v1755, %v1482
    %1761 = vrot.lane.b32.xlu0 %v1758, 64
    %v1762 = vpop.permute.xlu0 %1761
    %v1764 = vmul.f32 %v1755, %v1762
    %1766 = vrot.lane.b32.xlu0 %v1764, 64
    %v1767 = vpop.permute.xlu0 %1766
    %v1769 = vadd.f32 %v1759, %v1767
    %v1770 = vtanh.pop %v1769
    %1772 = vrot.lane.b32.xlu0 %v1770, 64
    %v1773 = vpop.permute.xlu0 %1772
    %v1775 = vmul.f32 %v1757, %v1773
    %v1777 = vsel %vm149, %v1775, 0
    %1779 = vmatprep.subr.mxu0 %v102
    %1780 = vmatpush1.msra.mxu0 %v101
    %1781 = vmatprep.subr.mxu0 %v104
    %1782 = vmatpush1.msra.mxu0 %v103
    %1783 = vmatprep.subr.mxu0 %v106
    %1784 = vmatpush1.msra.mxu0 %v105
    %1785 = vmatprep.subr.mxu0 %v108
    %1786 = vmatpush1.msra.mxu0 %v107
    %1787 = vmatprep.subr.mxu0 %v110
    %1788 = vmatpush1.msra.mxu0 %v109
    %1789 = vmatprep.subr.mxu0 %v112
    %1790 = vmatpush1.msra.mxu0 %v111
    %1791 = vmatprep.subr.mxu0 %v114
    %1792 = vmatpush1.msra.mxu0 %v113
    %1793 = vmatprep.subr.mxu0 %v116
    %1794 = vmatpush1.msra.mxu0 %v115
    %1795 = vmatprep.subr.mxu0 0.0
    %1796 = vmatpush1.msra.mxu0 0.0
    %1797 = vmatprep.subr.mxu0 0.0
    %1798 = vmatpush1.msra.mxu0 0.0
    %1799 = vmatprep.subr.mxu0 0.0
    %1800 = vmatpush1.msra.mxu0 0.0
    %1801 = vmatprep.subr.mxu0 0.0
    %1802 = vmatpush1.msra.mxu0 0.0
    %1803 = vmatprep.subr.mxu0 0.0
    %1804 = vmatpush1.msra.mxu0 0.0
    %1805 = vmatprep.subr.mxu0 0.0
    %1806 = vmatpush1.msra.mxu0 0.0
    %1807 = vmatprep.subr.mxu0 0.0
    %1808 = vmatpush1.msra.mxu0 0.0
    %1809 = vmatprep.subr.mxu0 0.0
    %1810 = vmatpush1.msra.mxu0 0.0
    %1811 = vmatprep.subr.mxu0 0.0
    %1812 = vmatpush1.msra.mxu0 0.0
    %1813 = vmatprep.subr.mxu0 0.0
    %1814 = vmatpush1.msra.mxu0 0.0
    %1815 = vmatprep.subr.mxu0 0.0
    %1816 = vmatpush1.msra.mxu0 0.0
    %1817 = vmatprep.subr.mxu0 0.0
    %1818 = vmatpush1.msra.mxu0 0.0
    %1819 = vmatprep.subr.mxu0 0.0
    %1820 = vmatpush1.msra.mxu0 0.0
    %1821 = vmatprep.subr.mxu0 0.0
    %1822 = vmatpush1.msra.mxu0 0.0
    %1823 = vmatprep.subr.mxu0 0.0
    %1824 = vmatpush1.msra.mxu0 0.0
    %1825 = vmatprep.subr.mxu0 0.0
    %1826 = vmatpush1.msra.mxu0 0.0
    %1827 = vmatprep.subr.mxu0 0.0
    %1828 = vmatpush1.msra.mxu0 0.0
    %1829 = vmatprep.subr.mxu0 0.0
    %1830 = vmatpush1.msra.mxu0 0.0
    %1831 = vmatprep.subr.mxu0 0.0
    %1832 = vmatpush1.msra.mxu0 0.0
    %1833 = vmatprep.subr.mxu0 0.0
    %1834 = vmatpush1.msra.mxu0 0.0
    %1835 = vmatprep.subr.mxu0 0.0
    %1836 = vmatpush1.msra.mxu0 0.0
    %1837 = vmatprep.subr.mxu0 0.0
    %1838 = vmatpush1.msra.mxu0 0.0
    %1839 = vmatprep.subr.mxu0 0.0
    %1840 = vmatpush1.msra.mxu0 0.0
    %1841 = vmatprep.subr.mxu0 0.0
    %1842 = vmatpush1.msra.mxu0 0.0
    %1843 = vmatprep.mubr.f32.mxu0 0.0
    %1844 = vmatmul.mubr.f32.gmra.mrb[0].mxu0 %v1777
    %v1845 = vpop.f32.mrb[0].mxu0
    %v1846 = vadd.f32 0.0, %v1845
    %v1847 = vpop.f32.mrb[0].mxu0
    %v1848 = vadd.f32 0.0, %v1847
    %1849 = vdwg.mxu0
    %v1850 = vadd.f32 %v1665, %v1846
    %v1851 = vadd.f32 %v1667, %v1848
    %v1852 = vxor.u32 %v1850, 2147483648
    %v1853 = vxor.u32 %v1851, 2147483648
    %v1854 = vmul.f32 %v1852, 1.442695
    %v1855 = vpow.pop %v1854
    %v1856 = vmul.f32 %v1853, 1.442695
    %v1857 = vpow.pop %v1856
    %v1858 = vadd.f32 %v1855, 1.0
    %v1859 = vadd.f32 %v1857, 1.0
    %v1860 = vrcp.pop %v1858
    %v1861 = vmul.f32 1.0, %v1860
    %v1862 = vrcp.pop %v1859
    %v1863 = vmul.f32 1.0, %v1862
    %v1864 = vtanh.pop %v1851
    %v1865 = vmul.f32 %v1861, %v1588
    %1867 = vrot.lane.b32.xlu0 %v1864, 64
    %v1868 = vpop.permute.xlu0 %1867
    %v1870 = vmul.f32 %v1861, %v1868
    %1872 = vrot.lane.b32.xlu0 %v1870, 64
    %v1873 = vpop.permute.xlu0 %1872
    %v1875 = vadd.f32 %v1865, %v1873
    %v1876 = vtanh.pop %v1875
    %1878 = vrot.lane.b32.xlu0 %v1876, 64
    %v1879 = vpop.permute.xlu0 %1878
    %v1881 = vmul.f32 %v1863, %v1879
    %v1883 = vsel %vm149, %v1881, 0
    %1885 = vmatprep.subr.mxu0 %v118
    %1886 = vmatpush1.msra.mxu0 %v117
    %1887 = vmatprep.subr.mxu0 %v120
    %1888 = vmatpush1.msra.mxu0 %v119
    %1889 = vmatprep.subr.mxu0 %v122
    %1890 = vmatpush1.msra.mxu0 %v121
    %1891 = vmatprep.subr.mxu0 %v124
    %1892 = vmatpush1.msra.mxu0 %v123
    %1893 = vmatprep.subr.mxu0 %v126
    %1894 = vmatpush1.msra.mxu0 %v125
    %1895 = vmatprep.subr.mxu0 %v128
    %1896 = vmatpush1.msra.mxu0 %v127
    %1897 = vmatprep.subr.mxu0 %v130
    %1898 = vmatpush1.msra.mxu0 %v129
    %1899 = vmatprep.subr.mxu0 %v132
    %1900 = vmatpush1.msra.mxu0 %v131
    %1901 = vmatprep.subr.mxu0 0.0
    %1902 = vmatpush1.msra.mxu0 0.0
    %1903 = vmatprep.subr.mxu0 0.0
    %1904 = vmatpush1.msra.mxu0 0.0
    %1905 = vmatprep.subr.mxu0 0.0
    %1906 = vmatpush1.msra.mxu0 0.0
    %1907 = vmatprep.subr.mxu0 0.0
    %1908 = vmatpush1.msra.mxu0 0.0
    %1909 = vmatprep.subr.mxu0 0.0
    %1910 = vmatpush1.msra.mxu0 0.0
    %1911 = vmatprep.subr.mxu0 0.0
    %1912 = vmatpush1.msra.mxu0 0.0
    %1913 = vmatprep.subr.mxu0 0.0
    %1914 = vmatpush1.msra.mxu0 0.0
    %1915 = vmatprep.subr.mxu0 0.0
    %1916 = vmatpush1.msra.mxu0 0.0
    %1917 = vmatprep.subr.mxu0 0.0
    %1918 = vmatpush1.msra.mxu0 0.0
    %1919 = vmatprep.subr.mxu0 0.0
    %1920 = vmatpush1.msra.mxu0 0.0
    %1921 = vmatprep.subr.mxu0 0.0
    %1922 = vmatpush1.msra.mxu0 0.0
    %1923 = vmatprep.subr.mxu0 0.0
    %1924 = vmatpush1.msra.mxu0 0.0
    %1925 = vmatprep.subr.mxu0 0.0
    %1926 = vmatpush1.msra.mxu0 0.0
    %1927 = vmatprep.subr.mxu0 0.0
    %1928 = vmatpush1.msra.mxu0 0.0
    %1929 = vmatprep.subr.mxu0 0.0
    %1930 = vmatpush1.msra.mxu0 0.0
    %1931 = vmatprep.subr.mxu0 0.0
    %1932 = vmatpush1.msra.mxu0 0.0
    %1933 = vmatprep.subr.mxu0 0.0
    %1934 = vmatpush1.msra.mxu0 0.0
    %1935 = vmatprep.subr.mxu0 0.0
    %1936 = vmatpush1.msra.mxu0 0.0
    %1937 = vmatprep.subr.mxu0 0.0
    %1938 = vmatpush1.msra.mxu0 0.0
    %1939 = vmatprep.subr.mxu0 0.0
    %1940 = vmatpush1.msra.mxu0 0.0
    %1941 = vmatprep.subr.mxu0 0.0
    %1942 = vmatpush1.msra.mxu0 0.0
    %1943 = vmatprep.subr.mxu0 0.0
    %1944 = vmatpush1.msra.mxu0 0.0
    %1945 = vmatprep.subr.mxu0 0.0
    %1946 = vmatpush1.msra.mxu0 0.0
    %1947 = vmatprep.subr.mxu0 0.0
    %1948 = vmatpush1.msra.mxu0 0.0
    %1949 = vmatprep.mubr.f32.mxu0 0.0
    %1950 = vmatmul.mubr.f32.gmra.mrb[0].mxu0 %v1883
    %v1951 = vpop.f32.mrb[0].mxu0
    %v1952 = vadd.f32 %v138, %v1951
    %v1953 = vpop.f32.mrb[0].mxu0
    %v1954 = vadd.f32 %v142, %v1953
    %1955 = vdwg.mxu0
    %s1956 = scalar_lea.vmem [#allocation6], 48
    %v1957 = vld [vmem:[%s1956] sm:$0xff]
    %v1958 = vunpack.c.l.bf16 %v1957
    %v1959 = vunpack.c.h.bf16 %v1957
    %1960 = vmatprep.subr.mxu0 %v86
    %1961 = vmatpush1.msra.mxu0 %v85
    %1962 = vmatprep.subr.mxu0 %v88
    %1963 = vmatpush1.msra.mxu0 %v87
    %1964 = vmatprep.subr.mxu0 %v90
    %1965 = vmatpush1.msra.mxu0 %v89
    %1966 = vmatprep.subr.mxu0 %v92
    %1967 = vmatpush1.msra.mxu0 %v91
    %1968 = vmatprep.subr.mxu0 %v94
    %1969 = vmatpush1.msra.mxu0 %v93
    %1970 = vmatprep.subr.mxu0 %v96
    %1971 = vmatpush1.msra.mxu0 %v95
    %1972 = vmatprep.subr.mxu0 %v98
    %1973 = vmatpush1.msra.mxu0 %v97
    %1974 = vmatprep.subr.mxu0 %v100
    %1975 = vmatpush1.msra.mxu0 %v99
    %1976 = vmatprep.subr.mxu0 0.0
    %1977 = vmatpush1.msra.mxu0 0.0
    %1978 = vmatprep.subr.mxu0 0.0
    %1979 = vmatpush1.msra.mxu0 0.0
    %1980 = vmatprep.subr.mxu0 0.0
    %1981 = vmatpush1.msra.mxu0 0.0
    %1982 = vmatprep.subr.mxu0 0.0
    %1983 = vmatpush1.msra.mxu0 0.0
    %1984 = vmatprep.subr.mxu0 0.0
    %1985 = vmatpush1.msra.mxu0 0.0
    %1986 = vmatprep.subr.mxu0 0.0
    %1987 = vmatpush1.msra.mxu0 0.0
    %1988 = vmatprep.subr.mxu0 0.0
    %1989 = vmatpush1.msra.mxu0 0.0
    %1990 = vmatprep.subr.mxu0 0.0
    %1991 = vmatpush1.msra.mxu0 0.0
    %1992 = vmatprep.subr.mxu0 0.0
    %1993 = vmatpush1.msra.mxu0 0.0
    %1994 = vmatprep.subr.mxu0 0.0
    %1995 = vmatpush1.msra.mxu0 0.0
    %1996 = vmatprep.subr.mxu0 0.0
    %1997 = vmatpush1.msra.mxu0 0.0
    %1998 = vmatprep.subr.mxu0 0.0
    %1999 = vmatpush1.msra.mxu0 0.0
    %2000 = vmatprep.subr.mxu0 0.0
    %2001 = vmatpush1.msra.mxu0 0.0
    %2002 = vmatprep.subr.mxu0 0.0
    %2003 = vmatpush1.msra.mxu0 0.0
    %2004 = vmatprep.subr.mxu0 0.0
    %2005 = vmatpush1.msra.mxu0 0.0
    %2006 = vmatprep.subr.mxu0 0.0
    %2007 = vmatpush1.msra.mxu0 0.0
    %2008 = vmatprep.subr.mxu0 0.0
    %2009 = vmatpush1.msra.mxu0 0.0
    %2010 = vmatprep.subr.mxu0 0.0
    %2011 = vmatpush1.msra.mxu0 0.0
    %2012 = vmatprep.subr.mxu0 0.0
    %2013 = vmatpush1.msra.mxu0 0.0
    %2014 = vmatprep.subr.mxu0 0.0
    %2015 = vmatpush1.msra.mxu0 0.0
    %2016 = vmatprep.subr.mxu0 0.0
    %2017 = vmatpush1.msra.mxu0 0.0
    %2018 = vmatprep.subr.mxu0 0.0
    %2019 = vmatpush1.msra.mxu0 0.0
    %2020 = vmatprep.subr.mxu0 0.0
    %2021 = vmatpush1.msra.mxu0 0.0
    %2022 = vmatprep.subr.mxu0 0.0
    %2023 = vmatpush1.msra.mxu0 0.0
    %2024 = vmatprep.mubr.f32.mxu0 0.0
    %2025 = vmatmul.mubr.f32.gmra.mrb[0].mxu0 %v1777
    %v2026 = vpop.f32.mrb[0].mxu0
    %v2027 = vadd.f32 0.0, %v2026
    %v2028 = vpop.f32.mrb[0].mxu0
    %v2029 = vadd.f32 0.0, %v2028
    %2030 = vdwg.mxu0
    %v2031 = vadd.f32 %v1958, %v2027
    %v2032 = vadd.f32 %v1959, %v2029
    %v2033 = vxor.u32 %v2031, 2147483648
    %v2034 = vxor.u32 %v2032, 2147483648
    %v2035 = vmul.f32 %v2033, 1.442695
    %v2036 = vpow.pop %v2035
    %v2037 = vmul.f32 %v2034, 1.442695
    %v2038 = vpow.pop %v2037
    %v2039 = vadd.f32 %v2036, 1.0
    %v2040 = vadd.f32 %v2038, 1.0
    %v2041 = vrcp.pop %v2039
    %v2042 = vmul.f32 1.0, %v2041
    %v2043 = vrcp.pop %v2040
    %v2044 = vmul.f32 1.0, %v2043
    %v2045 = vtanh.pop %v2032
    %v2046 = vmul.f32 %v2042, %v1769
    %2048 = vrot.lane.b32.xlu0 %v2045, 64
    %v2049 = vpop.permute.xlu0 %2048
    %v2051 = vmul.f32 %v2042, %v2049
    %2053 = vrot.lane.b32.xlu0 %v2051, 64
    %v2054 = vpop.permute.xlu0 %2053
    %v2056 = vadd.f32 %v2046, %v2054
    %v2057 = vtanh.pop %v2056
    %2059 = vrot.lane.b32.xlu0 %v2057, 64
    %v2060 = vpop.permute.xlu0 %2059
    %v2062 = vmul.f32 %v2044, %v2060
    %v2064 = vsel %vm149, %v2062, 0
    %2066 = vmatprep.subr.mxu0 %v102
    %2067 = vmatpush1.msra.mxu0 %v101
    %2068 = vmatprep.subr.mxu0 %v104
    %2069 = vmatpush1.msra.mxu0 %v103
    %2070 = vmatprep.subr.mxu0 %v106
    %2071 = vmatpush1.msra.mxu0 %v105
    %2072 = vmatprep.subr.mxu0 %v108
    %2073 = vmatpush1.msra.mxu0 %v107
    %2074 = vmatprep.subr.mxu0 %v110
    %2075 = vmatpush1.msra.mxu0 %v109
    %2076 = vmatprep.subr.mxu0 %v112
    %2077 = vmatpush1.msra.mxu0 %v111
    %2078 = vmatprep.subr.mxu0 %v114
    %2079 = vmatpush1.msra.mxu0 %v113
    %2080 = vmatprep.subr.mxu0 %v116
    %2081 = vmatpush1.msra.mxu0 %v115
    %2082 = vmatprep.subr.mxu0 0.0
    %2083 = vmatpush1.msra.mxu0 0.0
    %2084 = vmatprep.subr.mxu0 0.0
    %2085 = vmatpush1.msra.mxu0 0.0
    %2086 = vmatprep.subr.mxu0 0.0
    %2087 = vmatpush1.msra.mxu0 0.0
    %2088 = vmatprep.subr.mxu0 0.0
    %2089 = vmatpush1.msra.mxu0 0.0
    %2090 = vmatprep.subr.mxu0 0.0
    %2091 = vmatpush1.msra.mxu0 0.0
    %2092 = vmatprep.subr.mxu0 0.0
    %2093 = vmatpush1.msra.mxu0 0.0
    %2094 = vmatprep.subr.mxu0 0.0
    %2095 = vmatpush1.msra.mxu0 0.0
    %2096 = vmatprep.subr.mxu0 0.0
    %2097 = vmatpush1.msra.mxu0 0.0
    %2098 = vmatprep.subr.mxu0 0.0
    %2099 = vmatpush1.msra.mxu0 0.0
    %2100 = vmatprep.subr.mxu0 0.0
    %2101 = vmatpush1.msra.mxu0 0.0
    %2102 = vmatprep.subr.mxu0 0.0
    %2103 = vmatpush1.msra.mxu0 0.0
    %2104 = vmatprep.subr.mxu0 0.0
    %2105 = vmatpush1.msra.mxu0 0.0
    %2106 = vmatprep.subr.mxu0 0.0
    %2107 = vmatpush1.msra.mxu0 0.0
    %2108 = vmatprep.subr.mxu0 0.0
    %2109 = vmatpush1.msra.mxu0 0.0
    %2110 = vmatprep.subr.mxu0 0.0
    %2111 = vmatpush1.msra.mxu0 0.0
    %2112 = vmatprep.subr.mxu0 0.0
    %2113 = vmatpush1.msra.mxu0 0.0
    %2114 = vmatprep.subr.mxu0 0.0
    %2115 = vmatpush1.msra.mxu0 0.0
    %2116 = vmatprep.subr.mxu0 0.0
    %2117 = vmatpush1.msra.mxu0 0.0
    %2118 = vmatprep.subr.mxu0 0.0
    %2119 = vmatpush1.msra.mxu0 0.0
    %2120 = vmatprep.subr.mxu0 0.0
    %2121 = vmatpush1.msra.mxu0 0.0
    %2122 = vmatprep.subr.mxu0 0.0
    %2123 = vmatpush1.msra.mxu0 0.0
    %2124 = vmatprep.subr.mxu0 0.0
    %2125 = vmatpush1.msra.mxu0 0.0
    %2126 = vmatprep.subr.mxu0 0.0
    %2127 = vmatpush1.msra.mxu0 0.0
    %2128 = vmatprep.subr.mxu0 0.0
    %2129 = vmatpush1.msra.mxu0 0.0
    %2130 = vmatprep.mubr.f32.mxu0 0.0
    %2131 = vmatmul.mubr.f32.gmra.mrb[0].mxu0 %v2064
    %v2132 = vpop.f32.mrb[0].mxu0
    %v2133 = vadd.f32 0.0, %v2132
    %v2134 = vpop.f32.mrb[0].mxu0
    %v2135 = vadd.f32 0.0, %v2134
    %2136 = vdwg.mxu0
    %v2137 = vadd.f32 %v1952, %v2133
    %v2138 = vadd.f32 %v1954, %v2135
    %v2139 = vxor.u32 %v2137, 2147483648
    %v2140 = vxor.u32 %v2138, 2147483648
    %v2141 = vmul.f32 %v2139, 1.442695
    %v2142 = vpow.pop %v2141
    %v2143 = vmul.f32 %v2140, 1.442695
    %v2144 = vpow.pop %v2143
    %v2145 = vadd.f32 %v2142, 1.0
    %v2146 = vadd.f32 %v2144, 1.0
    %v2147 = vrcp.pop %v2145
    %v2148 = vmul.f32 1.0, %v2147
    %v2149 = vrcp.pop %v2146
    %v2150 = vmul.f32 1.0, %v2149
    %v2151 = vtanh.pop %v2138
    %v2152 = vmul.f32 %v2148, %v1875
    %2154 = vrot.lane.b32.xlu0 %v2151, 64
    %v2155 = vpop.permute.xlu0 %2154
    %v2157 = vmul.f32 %v2148, %v2155
    %2159 = vrot.lane.b32.xlu0 %v2157, 64
    %v2160 = vpop.permute.xlu0 %2159
    %v2162 = vadd.f32 %v2152, %v2160
    %v2163 = vtanh.pop %v2162
    %2165 = vrot.lane.b32.xlu0 %v2163, 64
    %v2166 = vpop.permute.xlu0 %2165
    %v2168 = vmul.f32 %v2150, %v2166
    %v2170 = vsel %vm149, %v2168, 0
    %2172 = vmatprep.subr.mxu0 %v118
    %2173 = vmatpush1.msra.mxu0 %v117
    %2174 = vmatprep.subr.mxu0 %v120
    %2175 = vmatpush1.msra.mxu0 %v119
    %2176 = vmatprep.subr.mxu0 %v122
    %2177 = vmatpush1.msra.mxu0 %v121
    %2178 = vmatprep.subr.mxu0 %v124
    %2179 = vmatpush1.msra.mxu0 %v123
    %2180 = vmatprep.subr.mxu0 %v126
    %2181 = vmatpush1.msra.mxu0 %v125
    %2182 = vmatprep.subr.mxu0 %v128
    %2183 = vmatpush1.msra.mxu0 %v127
    %2184 = vmatprep.subr.mxu0 %v130
    %2185 = vmatpush1.msra.mxu0 %v129
    %2186 = vmatprep.subr.mxu0 %v132
    %2187 = vmatpush1.msra.mxu0 %v131
    %2188 = vmatprep.subr.mxu0 0.0
    %2189 = vmatpush1.msra.mxu0 0.0
    %2190 = vmatprep.subr.mxu0 0.0
    %2191 = vmatpush1.msra.mxu0 0.0
    %2192 = vmatprep.subr.mxu0 0.0
    %2193 = vmatpush1.msra.mxu0 0.0
    %2194 = vmatprep.subr.mxu0 0.0
    %2195 = vmatpush1.msra.mxu0 0.0
    %2196 = vmatprep.subr.mxu0 0.0
    %2197 = vmatpush1.msra.mxu0 0.0
    %2198 = vmatprep.subr.mxu0 0.0
    %2199 = vmatpush1.msra.mxu0 0.0
    %2200 = vmatprep.subr.mxu0 0.0
    %2201 = vmatpush1.msra.mxu0 0.0
    %2202 = vmatprep.subr.mxu0 0.0
    %2203 = vmatpush1.msra.mxu0 0.0
    %2204 = vmatprep.subr.mxu0 0.0
    %2205 = vmatpush1.msra.mxu0 0.0
    %2206 = vmatprep.subr.mxu0 0.0
    %2207 = vmatpush1.msra.mxu0 0.0
    %2208 = vmatprep.subr.mxu0 0.0
    %2209 = vmatpush1.msra.mxu0 0.0
    %2210 = vmatprep.subr.mxu0 0.0
    %2211 = vmatpush1.msra.mxu0 0.0
    %2212 = vmatprep.subr.mxu0 0.0
    %2213 = vmatpush1.msra.mxu0 0.0
    %2214 = vmatprep.subr.mxu0 0.0
    %2215 = vmatpush1.msra.mxu0 0.0
    %2216 = vmatprep.subr.mxu0 0.0
    %2217 = vmatpush1.msra.mxu0 0.0
    %2218 = vmatprep.subr.mxu0 0.0
    %2219 = vmatpush1.msra.mxu0 0.0
    %2220 = vmatprep.subr.mxu0 0.0
    %2221 = vmatpush1.msra.mxu0 0.0
    %2222 = vmatprep.subr.mxu0 0.0
    %2223 = vmatpush1.msra.mxu0 0.0
    %2224 = vmatprep.subr.mxu0 0.0
    %2225 = vmatpush1.msra.mxu0 0.0
    %2226 = vmatprep.subr.mxu0 0.0
    %2227 = vmatpush1.msra.mxu0 0.0
    %2228 = vmatprep.subr.mxu0 0.0
    %2229 = vmatpush1.msra.mxu0 0.0
    %2230 = vmatprep.subr.mxu0 0.0
    %2231 = vmatpush1.msra.mxu0 0.0
    %2232 = vmatprep.subr.mxu0 0.0
    %2233 = vmatpush1.msra.mxu0 0.0
    %2234 = vmatprep.subr.mxu0 0.0
    %2235 = vmatpush1.msra.mxu0 0.0
    %2236 = vmatprep.mubr.f32.mxu0 0.0
    %2237 = vmatmul.mubr.f32.gmra.mrb[0].mxu0 %v2170
    %v2238 = vpop.f32.mrb[0].mxu0
    %v2239 = vadd.f32 %v138, %v2238
    %v2240 = vpop.f32.mrb[0].mxu0
    %v2241 = vadd.f32 %v142, %v2240
    %2242 = vdwg.mxu0
    %s2243 = scalar_lea.vmem [#allocation6], 56
    %v2244 = vld [vmem:[%s2243] sm:$0xff]
    %v2245 = vunpack.c.l.bf16 %v2244
    %v2246 = vunpack.c.h.bf16 %v2244
    %2247 = vmatprep.subr.mxu0 %v86
    %2248 = vmatpush1.msra.mxu0 %v85
    %2249 = vmatprep.subr.mxu0 %v88
    %2250 = vmatpush1.msra.mxu0 %v87
    %2251 = vmatprep.subr.mxu0 %v90
    %2252 = vmatpush1.msra.mxu0 %v89
    %2253 = vmatprep.subr.mxu0 %v92
    %2254 = vmatpush1.msra.mxu0 %v91
    %2255 = vmatprep.subr.mxu0 %v94
    %2256 = vmatpush1.msra.mxu0 %v93
    %2257 = vmatprep.subr.mxu0 %v96
    %2258 = vmatpush1.msra.mxu0 %v95
    %2259 = vmatprep.subr.mxu0 %v98
    %2260 = vmatpush1.msra.mxu0 %v97
    %2261 = vmatprep.subr.mxu0 %v100
    %2262 = vmatpush1.msra.mxu0 %v99
    %2263 = vmatprep.subr.mxu0 0.0
    %2264 = vmatpush1.msra.mxu0 0.0
    %2265 = vmatprep.subr.mxu0 0.0
    %2266 = vmatpush1.msra.mxu0 0.0
    %2267 = vmatprep.subr.mxu0 0.0
    %2268 = vmatpush1.msra.mxu0 0.0
    %2269 = vmatprep.subr.mxu0 0.0
    %2270 = vmatpush1.msra.mxu0 0.0
    %2271 = vmatprep.subr.mxu0 0.0
    %2272 = vmatpush1.msra.mxu0 0.0
    %2273 = vmatprep.subr.mxu0 0.0
    %2274 = vmatpush1.msra.mxu0 0.0
    %2275 = vmatprep.subr.mxu0 0.0
    %2276 = vmatpush1.msra.mxu0 0.0
    %2277 = vmatprep.subr.mxu0 0.0
    %2278 = vmatpush1.msra.mxu0 0.0
    %2279 = vmatprep.subr.mxu0 0.0
    %2280 = vmatpush1.msra.mxu0 0.0
    %2281 = vmatprep.subr.mxu0 0.0
    %2282 = vmatpush1.msra.mxu0 0.0
    %2283 = vmatprep.subr.mxu0 0.0
    %2284 = vmatpush1.msra.mxu0 0.0
    %2285 = vmatprep.subr.mxu0 0.0
    %2286 = vmatpush1.msra.mxu0 0.0
    %2287 = vmatprep.subr.mxu0 0.0
    %2288 = vmatpush1.msra.mxu0 0.0
    %2289 = vmatprep.subr.mxu0 0.0
    %2290 = vmatpush1.msra.mxu0 0.0
    %2291 = vmatprep.subr.mxu0 0.0
    %2292 = vmatpush1.msra.mxu0 0.0
    %2293 = vmatprep.subr.mxu0 0.0
    %2294 = vmatpush1.msra.mxu0 0.0
    %2295 = vmatprep.subr.mxu0 0.0
    %2296 = vmatpush1.msra.mxu0 0.0
    %2297 = vmatprep.subr.mxu0 0.0
    %2298 = vmatpush1.msra.mxu0 0.0
    %2299 = vmatprep.subr.mxu0 0.0
    %2300 = vmatpush1.msra.mxu0 0.0
    %2301 = vmatprep.subr.mxu0 0.0
    %2302 = vmatpush1.msra.mxu0 0.0
    %2303 = vmatprep.subr.mxu0 0.0
    %2304 = vmatpush1.msra.mxu0 0.0
    %2305 = vmatprep.subr.mxu0 0.0
    %2306 = vmatpush1.msra.mxu0 0.0
    %2307 = vmatprep.subr.mxu0 0.0
    %2308 = vmatpush1.msra.mxu0 0.0
    %2309 = vmatprep.subr.mxu0 0.0
    %2310 = vmatpush1.msra.mxu0 0.0
    %2311 = vmatprep.mubr.f32.mxu0 0.0
    %2312 = vmatmul.mubr.f32.gmra.mrb[0].mxu0 %v2064
    %v2313 = vpop.f32.mrb[0].mxu0
    %v2314 = vadd.f32 0.0, %v2313
    %v2315 = vpop.f32.mrb[0].mxu0
    %v2316 = vadd.f32 0.0, %v2315
    %2317 = vdwg.mxu0
    %v2318 = vadd.f32 %v2245, %v2314
    %v2319 = vadd.f32 %v2246, %v2316
    %v2320 = vxor.u32 %v2318, 2147483648
    %v2321 = vxor.u32 %v2319, 2147483648
    %v2322 = vmul.f32 %v2320, 1.442695
    %v2323 = vpow.pop %v2322
    %v2324 = vmul.f32 %v2321, 1.442695
    %v2325 = vpow.pop %v2324
    %v2326 = vadd.f32 %v2323, 1.0
    %v2327 = vadd.f32 %v2325, 1.0
    %v2328 = vrcp.pop %v2326
    %v2329 = vmul.f32 1.0, %v2328
    %v2330 = vrcp.pop %v2327
    %v2331 = vmul.f32 1.0, %v2330
    %v2332 = vtanh.pop %v2319
    %v2333 = vmul.f32 %v2329, %v2056
    %2335 = vrot.lane.b32.xlu0 %v2332, 64
    %v2336 = vpop.permute.xlu0 %2335
    %v2338 = vmul.f32 %v2329, %v2336
    %2340 = vrot.lane.b32.xlu0 %v2338, 64
    %v2341 = vpop.permute.xlu0 %2340
    %v2343 = vadd.f32 %v2333, %v2341
    %v2344 = vtanh.pop %v2343
    %2346 = vrot.lane.b32.xlu0 %v2344, 64
    %v2347 = vpop.permute.xlu0 %2346
    %v2349 = vmul.f32 %v2331, %v2347
    %v2351 = vsel %vm149, %v2349, 0
    %2353 = vmatprep.subr.mxu0 %v102
    %2354 = vmatpush1.msra.mxu0 %v101
    %2355 = vmatprep.subr.mxu0 %v104
    %2356 = vmatpush1.msra.mxu0 %v103
    %2357 = vmatprep.subr.mxu0 %v106
    %2358 = vmatpush1.msra.mxu0 %v105
    %2359 = vmatprep.subr.mxu0 %v108
    %2360 = vmatpush1.msra.mxu0 %v107
    %2361 = vmatprep.subr.mxu0 %v110
    %2362 = vmatpush1.msra.mxu0 %v109
    %2363 = vmatprep.subr.mxu0 %v112
    %2364 = vmatpush1.msra.mxu0 %v111
    %2365 = vmatprep.subr.mxu0 %v114
    %2366 = vmatpush1.msra.mxu0 %v113
    %2367 = vmatprep.subr.mxu0 %v116
    %2368 = vmatpush1.msra.mxu0 %v115
    %2369 = vmatprep.subr.mxu0 0.0
    %2370 = vmatpush1.msra.mxu0 0.0
    %2371 = vmatprep.subr.mxu0 0.0
    %2372 = vmatpush1.msra.mxu0 0.0
    %2373 = vmatprep.subr.mxu0 0.0
    %2374 = vmatpush1.msra.mxu0 0.0
    %2375 = vmatprep.subr.mxu0 0.0
    %2376 = vmatpush1.msra.mxu0 0.0
    %2377 = vmatprep.subr.mxu0 0.0
    %2378 = vmatpush1.msra.mxu0 0.0
    %2379 = vmatprep.subr.mxu0 0.0
    %2380 = vmatpush1.msra.mxu0 0.0
    %2381 = vmatprep.subr.mxu0 0.0
    %2382 = vmatpush1.msra.mxu0 0.0
    %2383 = vmatprep.subr.mxu0 0.0
    %2384 = vmatpush1.msra.mxu0 0.0
    %2385 = vmatprep.subr.mxu0 0.0
    %2386 = vmatpush1.msra.mxu0 0.0
    %2387 = vmatprep.subr.mxu0 0.0
    %2388 = vmatpush1.msra.mxu0 0.0
    %2389 = vmatprep.subr.mxu0 0.0
    %2390 = vmatpush1.msra.mxu0 0.0
    %2391 = vmatprep.subr.mxu0 0.0
    %2392 = vmatpush1.msra.mxu0 0.0
    %2393 = vmatprep.subr.mxu0 0.0
    %2394 = vmatpush1.msra.mxu0 0.0
    %2395 = vmatprep.subr.mxu0 0.0
    %2396 = vmatpush1.msra.mxu0 0.0
    %2397 = vmatprep.subr.mxu0 0.0
    %2398 = vmatpush1.msra.mxu0 0.0
    %2399 = vmatprep.subr.mxu0 0.0
    %2400 = vmatpush1.msra.mxu0 0.0
    %2401 = vmatprep.subr.mxu0 0.0
    %2402 = vmatpush1.msra.mxu0 0.0
    %2403 = vmatprep.subr.mxu0 0.0
    %2404 = vmatpush1.msra.mxu0 0.0
    %2405 = vmatprep.subr.mxu0 0.0
    %2406 = vmatpush1.msra.mxu0 0.0
    %2407 = vmatprep.subr.mxu0 0.0
    %2408 = vmatpush1.msra.mxu0 0.0
    %2409 = vmatprep.subr.mxu0 0.0
    %2410 = vmatpush1.msra.mxu0 0.0
    %2411 = vmatprep.subr.mxu0 0.0
    %2412 = vmatpush1.msra.mxu0 0.0
    %2413 = vmatprep.subr.mxu0 0.0
    %2414 = vmatpush1.msra.mxu0 0.0
    %2415 = vmatprep.subr.mxu0 0.0
    %2416 = vmatpush1.msra.mxu0 0.0
    %2417 = vmatprep.mubr.f32.mxu0 0.0
    %2418 = vmatmul.mubr.f32.gmra.mrb[0].mxu0 %v2351
    %v2419 = vpop.f32.mrb[0].mxu0
    %v2420 = vadd.f32 0.0, %v2419
    %v2421 = vpop.f32.mrb[0].mxu0
    %v2422 = vadd.f32 0.0, %v2421
    %2423 = vdwg.mxu0
    %v2424 = vadd.f32 %v2239, %v2420
    %v2425 = vadd.f32 %v2241, %v2422
    %v2426 = vxor.u32 %v2424, 2147483648
    %v2427 = vxor.u32 %v2425, 2147483648
    %v2428 = vmul.f32 %v2426, 1.442695
    %v2429 = vpow.pop %v2428
    %v2430 = vmul.f32 %v2427, 1.442695
    %v2431 = vpow.pop %v2430
    %v2432 = vadd.f32 %v2429, 1.0
    %v2433 = vadd.f32 %v2431, 1.0
    %v2434 = vrcp.pop %v2432
    %v2435 = vmul.f32 1.0, %v2434
    %v2436 = vrcp.pop %v2433
    %v2437 = vmul.f32 1.0, %v2436
    %v2438 = vtanh.pop %v2425
    %v2439 = vmul.f32 %v2435, %v2162
    %2441 = vrot.lane.b32.xlu0 %v2438, 64
    %v2442 = vpop.permute.xlu0 %2441
    %v2444 = vmul.f32 %v2435, %v2442
    %2446 = vrot.lane.b32.xlu0 %v2444, 64
    %v2447 = vpop.permute.xlu0 %2446
    %v2449 = vadd.f32 %v2439, %v2447
    %v2450 = vtanh.pop %v2449
    %2452 = vrot.lane.b32.xlu0 %v2450, 64
    %v2453 = vpop.permute.xlu0 %2452
    %v2455 = vmul.f32 %v2437, %v2453
    %2456 = vst.msk [vmem:[#allocation2] sm:$0xff] %vm149, %v2349
    %2458 = vrot.lane.b32.xlu0 %v2343, 64
    %v2459 = vpop.permute.xlu0 %2458
    %2461 = vst.msk [vmem:[#allocation3] sm:$0xff] %vm149, %v2459
    %2462 = vst.msk [vmem:[#allocation4] sm:$0xff] %vm149, %v2455
    %2464 = vrot.lane.b32.xlu0 %v2449, 64
    %v2465 = vpop.permute.xlu0 %2464
    %2467 = vst.msk [vmem:[#allocation5] sm:$0xff] %vm149, %v2465
    // Predicated region
    $region42: #{tpu_custom_call.1} parent=1 // pred_check
      %p2468 = pneg %p76
    $region43: #{tpu_custom_call.1} parent=1 // pred_check_branch
      %2470 = sbr.rel (%p2468) target = $region45
    $region44: #{tpu_custom_call.1} parent=1 // pred_region
      %v2471 = vld [vmem:[#allocation4] sm:$0xff]
      %2472 = vst.msk [vmem:[#allocation14] sm:$0xff] %vm149, %v2471
    $region45: #{tpu_custom_call.1} parent=1 // pred_fallthru
      _
    // Predicated region
    $region46: #{tpu_custom_call.1} parent=1 // pred_check
      _
    $region47: #{tpu_custom_call.1} parent=1 // pred_check_branch
      %2474 = sbr.rel (0) target = $region49
    $region48: #{tpu_custom_call.1} parent=1 // pred_region
      %s2476 = ssub.s32 128, 128
      %2477 = vsyncadd [#allocation8], %s2476
      %s2479 = sshll.u32 [#allocation14], 4
      %s2480 = int_to_ptr.vmem [resolvable:$true] %s2479
      %2482 = dma.vmem_to_hbm [thread:$0]  %s2480, 128, %s5, [#allocation8]
    $region49: #{tpu_custom_call.1} parent=1 // pred_fallthru
      _
    // Predicated region
    $region50: #{tpu_custom_call.1} parent=1 // pred_check
      _
    $region51: #{tpu_custom_call.1} parent=1 // pred_check_branch
      %2484 = sbr.rel (0) target = $region53
    $region52: #{tpu_custom_call.1} parent=1 // pred_region
      %2485 = dma.done [#allocation8], 128
    $region53: #{tpu_custom_call.1} parent=1 // pred_fallthru
      _
    %2486 = vsyncpa [#allocation7], 1
    %2487 = vsyncpa [#allocation10], 1
    %2488 = vsyncpa [#allocation13], 1
    %2489 = vsyncpa [#allocation8], 1

</llo_original>
